<compile_context>
chip_gen: v7x
topology: tpu7x:2x2x1
jax: 0.10.0
libtpu: 0.0.40
codegen_flags: <defaults>
</compile_context>

<pallas_src>
import functools

import jax
import jax.numpy as jnp
from jax.experimental import pallas as pl
from jax.experimental.pallas import tpu as pltpu


# Row layout of the packed (11, H) f32 bias / LayerNorm slab.
_EMB_G, _EMB_B, _BQ, _BK, _BV, _BO, _LN1G, _LN1B, _BFF2, _LN2G, _LN2B = range(11)
_N_HB = 11


def _rep_spec(shape):
    """BlockSpec for a weight slab that is fully resident for every grid step."""
    nd = len(shape)
    return pl.BlockSpec(shape, lambda b, _nd=nd: (0,) * _nd)


# -----------------------------------------------------------------------------
# Fused kernel: one grid step == B_t batch elements.
#   embedding-LN -> self-attention -> FFN -> masked mean pool -> classifier.
# -----------------------------------------------------------------------------
def _seqcls_kernel(x_ref, mask_ref, wqkvo_ref, hb_ref,
                   wff1_ref, bff1_ref, wff2_ref, wcls_ref, bcls_ref,
                   o_ref):
    Bt, L, H = x_ref.shape
    rows = Bt * L
    bf16 = jnp.bfloat16

    def row(i):                      # one (1, H) f32 row of the packed bias slab
        return hb_ref[i:i + 1, :]

    def layernorm(v, g, b):          # f32 VPU math
        mu = jnp.mean(v, axis=-1, keepdims=True)
        var = jnp.mean((v - mu) ** 2, axis=-1, keepdims=True)
        # TODO(synk): eps=1e-12 (BERT convention); nn.LayerNorm default is 1e-5.
        return (v - mu) * jax.lax.rsqrt(var + 1e-12) * g + b

    m = mask_ref[...]                # (Bt, 1, L) f32: 1.0 = valid token, 0.0 = padding

    # embedding LayerNorm on the flattened (rows, H) slab (f32)
    x = layernorm(x_ref[...].astype(jnp.float32).reshape(rows, H),
                  row(_EMB_G), row(_EMB_B))
    xb = x.astype(bf16)

    # --- self-attention: fused QKV projection (one MXU weight push) ----------
    qkv = jnp.dot(xb, wqkvo_ref[:, :3 * H], preferred_element_type=jnp.float32)
    q3 = (qkv[:, 0 * H:1 * H] + row(_BQ)).reshape(Bt, L, H).astype(bf16)
    k3 = (qkv[:, 1 * H:2 * H] + row(_BK)).reshape(Bt, L, H).astype(bf16)
    v3 = (qkv[:, 2 * H:3 * H] + row(_BV)).reshape(Bt, L, H).astype(bf16)

    scale = float(H) ** -0.5
    scores = jnp.einsum('bqd,bkd->bqk', q3, k3,
                        preferred_element_type=jnp.float32) * scale
    scores = scores + (1.0 - m) * (-1e9)                 # mask padded keys
    scores = scores - jnp.max(scores, axis=-1, keepdims=True)
    p = jnp.exp(scores)
    p = p * pl.reciprocal(jnp.sum(p, axis=-1, keepdims=True), approx=True)
    ctx = jnp.einsum('bqk,bkd->bqd', p.astype(bf16), v3,
                     preferred_element_type=jnp.float32).reshape(rows, H)
    attn_out = jnp.dot(ctx.astype(bf16), wqkvo_ref[:, 3 * H:4 * H],
                       preferred_element_type=jnp.float32) + row(_BO)

    x1 = layernorm(x + attn_out, row(_LN1G), row(_LN1B))

    # --- feed-forward ---------------------------------------------------------
    # TODO(synk): PyTorch nn.GELU default is exact erf; tanh approximation used here.
    h = jax.nn.gelu(jnp.dot(x1.astype(bf16), wff1_ref[...],
                            preferred_element_type=jnp.float32) + bff1_ref[...],
                    approximate=True)
    ff = jnp.dot(h.astype(bf16), wff2_ref[...],
                 preferred_element_type=jnp.float32) + row(_BFF2)
    seq = layernorm(x1 + ff, row(_LN2G), row(_LN2B))      # (rows, H) sequence_output

    # --- mean_output=True: masked mean pool over valid tokens -----------------
    seq3 = seq.reshape(Bt, L, H).astype(bf16)
    pooled = jnp.einsum('bol,bld->bod', m.astype(bf16), seq3,
                        preferred_element_type=jnp.float32)          # (Bt, 1, H)
    denom = jnp.maximum(jnp.sum(m, axis=-1, keepdims=True), 1.0)     # guard empty rows
    pooled = (pooled * pl.reciprocal(denom, approx=True)).reshape(Bt, H)

    # --- dropout (identity, eval) + classifier (lane-padded to NLP columns) ---
    logits = jnp.dot(pooled.astype(bf16), wcls_ref[...],
                     preferred_element_type=jnp.float32) + bcls_ref[...]
    o_ref[...] = logits                                   # (Bt, NLP) lane-dense store


def sequence_classification_logits(params, emb, mask3, *, batch_tile=8):
    B, L, H = emb.shape
    Ff = params["w_ff1"].shape[1]
    NLP = params["w_cls"].shape[1]

    bt = min(batch_tile, B)
    nsteps = pl.cdiv(B, bt)
    Bp = nsteps * bt
    if Bp != B:                      # pad batch to a multiple of the tile (cropped later)
        emb = jnp.pad(emb, ((0, Bp - B), (0, 0), (0, 0)))
        mask3 = jnp.pad(mask3, ((0, Bp - B), (0, 0), (0, 0)))

    rows = Bp * L
    flops = int(2 * rows * H * (4 * H + 2 * Ff) + 4 * Bp * L * L * H
                + 2 * rows * H + 2 * Bp * H * NLP)
    transcendentals = int(Bp * L * L + rows * Ff + 3 * rows)
    bytes_accessed = int(emb.size * emb.dtype.itemsize + mask3.size * 4
                         + sum(int(params[k].size * params[k].dtype.itemsize)
                               for k in ("wqkvo", "hbias", "w_ff1", "b_ff1",
                                         "w_ff2", "w_cls", "b_cls"))
                         + Bp * NLP * 4)

    out = pl.pallas_call(
        _seqcls_kernel,
        out_shape=jax.ShapeDtypeStruct((Bp, NLP), jnp.float32),
        grid=(nsteps,),
        in_specs=[
            pl.BlockSpec((bt, L, H), lambda b: (b, 0, 0)),
            pl.BlockSpec((bt, 1, L), lambda b: (b, 0, 0)),
            _rep_spec((H, 4 * H)),        # packed QKVO weights (bf16)
            _rep_spec((_N_HB, H)),        # packed biases + LayerNorm params (f32)
            _rep_spec((H, Ff)), _rep_spec((1, Ff)),
            _rep_spec((Ff, H)),
            _rep_spec((H, NLP)), _rep_spec((1, NLP)),
        ],
        out_specs=pl.BlockSpec((bt, NLP), lambda b: (b, 0)),
        compiler_params=pltpu.CompilerParams(
            dimension_semantics=("parallel",),
            vmem_limit_bytes=64 * 1024 * 1024),
        cost_estimate=pl.CostEstimate(flops=flops,
                                      transcendentals=transcendentals,
                                      bytes_accessed=bytes_accessed),
    )(emb, mask3, params["wqkvo"], params["hbias"],
      params["w_ff1"], params["b_ff1"], params["w_ff2"],
      params["w_cls"], params["b_cls"])
    return out[:B]                        # (B, NLP)


# -----------------------------------------------------------------------------
# Parameters (deterministic synthetic init); matmul weights stored in bf16.
# -----------------------------------------------------------------------------
def init_params(key, vocab, max_len, H, Ff, num_labels, nl_pad=128):
    ks = jax.random.split(key, 9)

    def n(k, shape, dtype=jnp.float32):
        return (0.02 * jax.random.normal(k, shape)).astype(dtype)

    wq, wk, wv, wo = (n(ks[0], (H, H)), n(ks[1], (H, H)),
                      n(ks[2], (H, H)), n(ks[3], (H, H)))

    hbias = jnp.zeros((_N_HB, H), jnp.float32)
    hbias = hbias.at[jnp.array([_EMB_G, _LN1G, _LN2G])].set(1.0)   # LayerNorm gains = 1

    # classifier weight lane-padded to nl_pad columns (only first num_labels are real)
    w_cls = jnp.zeros((H, nl_pad), jnp.float32).at[:, :num_labels].set(
        n(ks[6], (H, num_labels)))

    return {
        "tok_emb": n(ks[4], (vocab, H)),
        "pos_emb": n(ks[5], (max_len, H)),
        "wqkvo": jnp.concatenate([wq, wk, wv, wo], axis=1).astype(jnp.bfloat16),
        "hbias": hbias,                                            # (11, H) f32
        "w_ff1": n(ks[7], (H, Ff), jnp.bfloat16),
        "b_ff1": jnp.zeros((1, Ff), jnp.float32),
        "w_ff2": n(ks[8], (Ff, H), jnp.bfloat16),
        "w_cls": w_cls.astype(jnp.bfloat16),                       # (H, nl_pad)
        "b_cls": jnp.zeros((1, nl_pad), jnp.float32),
    }


# -----------------------------------------------------------------------------
# Full forward (mirrors DeepLearningforSequenceClassification.forward)
# -----------------------------------------------------------------------------
def sequence_classification_forward(params, input_ids, attention_mask, labels=None,
                                    num_labels=2, batch_tile=8):
    B, L = input_ids.shape

    # token + position embedding gather (plain JAX glue); emitted in bf16 to halve the
    # HBM round-trip of the (B, L, H) activation slab. LayerNorm happens in-kernel.
    emb = (params["tok_emb"][input_ids]
           + params["pos_emb"][None, :L, :]).astype(jnp.bfloat16)
    mask3 = attention_mask.astype(jnp.float32).reshape(B, 1, L)

    logits_padded = sequence_classification_logits(params, emb, mask3,
                                                   batch_tile=batch_tile)
    logits = logits_padded[:, :num_labels]       # crop lane padding -> (B, num_labels)

    loss = None
    if labels is not None:
        # num_labels > 1 and integer labels -> 'single_label_classification'
        logp = jax.nn.log_softmax(logits, axis=-1)
        nll = -jnp.take_along_axis(logp, labels.reshape(-1, 1), axis=-1)[:, 0]
        loss = jnp.mean(nll)

    # mirrors SequenceClassifierOutput(loss, logits, hidden_states=None, attentions=None)
    return {"loss": loss, "logits": logits, "hidden_states": None, "attentions": None}


if __name__ == "__main__":
    B, L, H, Ff, VOCAB, NL = 16, 16, 128, 256, 30, 2
    B_TILE = 8                                     # 2 grid steps, 128-row MXU matmuls

    key = jax.random.PRNGKey(0)
    k_ids, k_lab, k_len = jax.random.split(key, 3)

    input_ids = jax.random.randint(k_ids, (B, L), 0, VOCAB)
    # random padding lengths to exercise the masked attention / mean pool
    valid_lens = jax.random.randint(k_len, (B,), L // 2, L + 1).astype(jnp.int32)
    attention_mask = (jnp.arange(L)[None, :] < valid_lens[:, None]).astype(jnp.int32)
    labels = jax.random.randint(k_lab, (B,), 0, NL)

    params = init_params(jax.random.PRNGKey(42), VOCAB, L, H, Ff, NL)

    fwd = jax.jit(functools.partial(sequence_classification_forward,
                                    num_labels=NL, batch_tile=B_TILE))
    out = fwd(params, input_ids, attention_mask, labels)

    jax.block_until_ready(out["logits"])
    jax.block_until_ready(out["loss"])

    assert out["logits"].shape == (B, NL)
    assert out["loss"].shape == ()
    assert bool(jnp.all(jnp.isfinite(out["logits"])))
    print("KERNEL_OK")
</pallas_src>

<mosaic_0001>
module attributes {stable_mosaic.version = 11 : i64} {
  func.func @_seqcls_kernel(%arg0: i32, %arg1: memref<8x16x128xbf16, #tpu.memory_space<vmem>>, %arg2: memref<8x1x16xf32, #tpu.memory_space<vmem>>, %arg3: memref<128x512xbf16, #tpu.memory_space<vmem>>, %arg4: memref<11x128xf32, #tpu.memory_space<vmem>>, %arg5: memref<128x256xbf16, #tpu.memory_space<vmem>>, %arg6: memref<1x256xf32, #tpu.memory_space<vmem>>, %arg7: memref<256x128xbf16, #tpu.memory_space<vmem>>, %arg8: memref<128x128xbf16, #tpu.memory_space<vmem>>, %arg9: memref<1x128xf32, #tpu.memory_space<vmem>>, %arg10: memref<8x128xf32, #tpu.memory_space<vmem>>) attributes {dimension_semantics = [#tpu.dimension_semantics<parallel>], iteration_bounds = array<i64: 2>, scalar_prefetch = 0 : i64, scratch_operands = 0 : i64, tpu.core_type = #tpu.core_type<tc>, window_params = [{transform_indices = @transform_0, window_bounds = array<i64: 8, 16, 128>}, {transform_indices = @transform_1, window_bounds = array<i64: 8, 1, 16>}, {pipeline_mode = #tpu.pipeline_mode<synchronous>, transform_indices = @transform_2, window_bounds = array<i64: 128, 512>}, {pipeline_mode = #tpu.pipeline_mode<synchronous>, transform_indices = @transform_3, window_bounds = array<i64: 11, 128>}, {pipeline_mode = #tpu.pipeline_mode<synchronous>, transform_indices = @transform_4, window_bounds = array<i64: 128, 256>}, {pipeline_mode = #tpu.pipeline_mode<synchronous>, transform_indices = @transform_5, window_bounds = array<i64: 1, 256>}, {pipeline_mode = #tpu.pipeline_mode<synchronous>, transform_indices = @transform_6, window_bounds = array<i64: 256, 128>}, {pipeline_mode = #tpu.pipeline_mode<synchronous>, transform_indices = @transform_7, window_bounds = array<i64: 128, 128>}, {pipeline_mode = #tpu.pipeline_mode<synchronous>, transform_indices = @transform_8, window_bounds = array<i64: 1, 128>}, {transform_indices = @transform_9, window_bounds = array<i64: 8, 128>}]} {
    %c0 = arith.constant 0 : index
    %c0_0 = arith.constant 0 : index
    %c0_1 = arith.constant 0 : index
    %0 = vector.load %arg2[%c0, %c0_0, %c0_1] : memref<8x1x16xf32, #tpu.memory_space<vmem>>, vector<8x1x16xf32>
    %c0_2 = arith.constant 0 : index
    %c0_3 = arith.constant 0 : index
    %c0_4 = arith.constant 0 : index
    %1 = vector.load %arg1[%c0_2, %c0_3, %c0_4] : memref<8x16x128xbf16, #tpu.memory_space<vmem>>, vector<8x16x128xbf16>
    %2 = arith.extf %1 : vector<8x16x128xbf16> to vector<8x16x128xf32>
    %3 = vector.shape_cast %2 : vector<8x16x128xf32> to vector<128x128xf32>
    %c0_5 = arith.constant 0 : index
    %c0_6 = arith.constant 0 : index
    %4 = vector.load %arg4[%c0_5, %c0_6] : memref<11x128xf32, #tpu.memory_space<vmem>>, vector<1x128xf32>
    %c1 = arith.constant 1 : index
    %c0_7 = arith.constant 0 : index
    %5 = vector.load %arg4[%c1, %c0_7] : memref<11x128xf32, #tpu.memory_space<vmem>>, vector<1x128xf32>
    %cst = arith.constant dense<0.000000e+00> : vector<128xf32>
    %6 = vector.multi_reduction <add>, %3, %cst [1] : vector<128x128xf32> to vector<128xf32>
    %7 = vector.shape_cast %6 : vector<128xf32> to vector<128x1xf32>
    %cst_8 = arith.constant 1.280000e+02 : f32
    %8 = vector.broadcast %cst_8 : f32 to vector<128x1xf32>
    %9 = arith.divf %7, %8 : vector<128x1xf32>
    %10 = vector.broadcast %9 : vector<128x1xf32> to vector<128x128xf32>
    %11 = arith.subf %3, %10 : vector<128x128xf32>
    %12 = arith.mulf %11, %11 : vector<128x128xf32>
    %cst_9 = arith.constant dense<0.000000e+00> : vector<128xf32>
    %13 = vector.multi_reduction <add>, %12, %cst_9 [1] : vector<128x128xf32> to vector<128xf32>
    %14 = vector.shape_cast %13 : vector<128xf32> to vector<128x1xf32>
    %cst_10 = arith.constant 1.280000e+02 : f32
    %15 = vector.broadcast %cst_10 : f32 to vector<128x1xf32>
    %16 = arith.divf %14, %15 : vector<128x1xf32>
    %17 = vector.broadcast %9 : vector<128x1xf32> to vector<128x128xf32>
    %18 = arith.subf %3, %17 : vector<128x128xf32>
    %cst_11 = arith.constant 9.99999996E-13 : f32
    %19 = vector.broadcast %cst_11 : f32 to vector<128x1xf32>
    %20 = arith.addf %16, %19 : vector<128x1xf32>
    %21 = math.rsqrt %20 : vector<128x1xf32>
    %22 = vector.broadcast %21 : vector<128x1xf32> to vector<128x128xf32>
    %23 = arith.mulf %18, %22 : vector<128x128xf32>
    %24 = vector.broadcast %4 : vector<1x128xf32> to vector<128x128xf32>
    %25 = arith.mulf %23, %24 : vector<128x128xf32>
    %26 = vector.broadcast %5 : vector<1x128xf32> to vector<128x128xf32>
    %27 = arith.addf %25, %26 : vector<128x128xf32>
    %28 = arith.truncf %27 : vector<128x128xf32> to vector<128x128xbf16>
    %c0_12 = arith.constant 0 : index
    %c0_13 = arith.constant 0 : index
    %29 = vector.load %arg3[%c0_12, %c0_13] : memref<128x512xbf16, #tpu.memory_space<vmem>>, vector<128x384xbf16>
    %cst_14 = arith.constant dense<0.000000e+00> : vector<128x384xf32>
    %30 = tpu.matmul %28, %29, %cst_14 {dimension_numbers = #tpu.dot_dimension_numbers<[1], [0], [0], [1], [0, 0, 1, 1], [], []>} : vector<128x128xbf16>, vector<128x384xbf16>, vector<128x384xf32> -> vector<128x384xf32>
    %31 = vector.extract_strided_slice %30 {offsets = [0, 0], sizes = [128, 128], strides = [1, 1]} : vector<128x384xf32> to vector<128x128xf32>
    %c2 = arith.constant 2 : index
    %c0_15 = arith.constant 0 : index
    %32 = vector.load %arg4[%c2, %c0_15] : memref<11x128xf32, #tpu.memory_space<vmem>>, vector<1x128xf32>
    %33 = vector.broadcast %32 : vector<1x128xf32> to vector<128x128xf32>
    %34 = arith.addf %31, %33 : vector<128x128xf32>
    %35 = vector.shape_cast %34 : vector<128x128xf32> to vector<8x16x128xf32>
    %36 = arith.truncf %35 : vector<8x16x128xf32> to vector<8x16x128xbf16>
    %37 = vector.extract_strided_slice %30 {offsets = [0, 128], sizes = [128, 128], strides = [1, 1]} : vector<128x384xf32> to vector<128x128xf32>
    %c3 = arith.constant 3 : index
    %c0_16 = arith.constant 0 : index
    %38 = vector.load %arg4[%c3, %c0_16] : memref<11x128xf32, #tpu.memory_space<vmem>>, vector<1x128xf32>
    %39 = vector.broadcast %38 : vector<1x128xf32> to vector<128x128xf32>
    %40 = arith.addf %37, %39 : vector<128x128xf32>
    %41 = vector.shape_cast %40 : vector<128x128xf32> to vector<8x16x128xf32>
    %42 = arith.truncf %41 : vector<8x16x128xf32> to vector<8x16x128xbf16>
    %43 = vector.extract_strided_slice %30 {offsets = [0, 256], sizes = [128, 128], strides = [1, 1]} : vector<128x384xf32> to vector<128x128xf32>
    %c4 = arith.constant 4 : index
    %c0_17 = arith.constant 0 : index
    %44 = vector.load %arg4[%c4, %c0_17] : memref<11x128xf32, #tpu.memory_space<vmem>>, vector<1x128xf32>
    %45 = vector.broadcast %44 : vector<1x128xf32> to vector<128x128xf32>
    %46 = arith.addf %43, %45 : vector<128x128xf32>
    %47 = vector.shape_cast %46 : vector<128x128xf32> to vector<8x16x128xf32>
    %48 = arith.truncf %47 : vector<8x16x128xf32> to vector<8x16x128xbf16>
    "tpu.trace_start"() <{level = 10 : i32, message = "bqd,bkd->bqk"}> : () -> ()
    %cst_18 = arith.constant dense<0.000000e+00> : vector<8x16x16xf32>
    %49 = tpu.matmul %36, %42, %cst_18 {dimension_numbers = #tpu.dot_dimension_numbers<[2], [2], [1], [1], [0, 0, 0, 1, 1, 1], [0], [0]>} : vector<8x16x128xbf16>, vector<8x16x128xbf16>, vector<8x16x16xf32> -> vector<8x16x16xf32>
    "tpu.trace_stop"() : () -> ()
    %cst_19 = arith.constant 0.0883883461 : f32
    %50 = vector.broadcast %cst_19 : f32 to vector<8x16x16xf32>
    %51 = arith.mulf %49, %50 : vector<8x16x16xf32>
    %cst_20 = arith.constant 1.000000e+00 : f32
    %52 = vector.broadcast %cst_20 : f32 to vector<8x1x16xf32>
    %53 = arith.subf %52, %0 : vector<8x1x16xf32>
    %cst_21 = arith.constant -1.000000e+09 : f32
    %54 = vector.broadcast %cst_21 : f32 to vector<8x1x16xf32>
    %55 = arith.mulf %53, %54 : vector<8x1x16xf32>
    %56 = vector.broadcast %55 : vector<8x1x16xf32> to vector<8x16x16xf32>
    %57 = arith.addf %51, %56 : vector<8x16x16xf32>
    %cst_22 = arith.constant dense<0xFF800000> : vector<8x16xf32>
    %58 = vector.multi_reduction <maximumf>, %57, %cst_22 [2] : vector<8x16x16xf32> to vector<8x16xf32>
    %59 = vector.shape_cast %58 : vector<8x16xf32> to vector<8x16x1xf32>
    %60 = vector.broadcast %59 : vector<8x16x1xf32> to vector<8x16x16xf32>
    %61 = arith.subf %57, %60 : vector<8x16x16xf32>
    %62 = math.exp %61 : vector<8x16x16xf32>
    %cst_23 = arith.constant dense<0.000000e+00> : vector<8x16xf32>
    %63 = vector.multi_reduction <add>, %62, %cst_23 [2] : vector<8x16x16xf32> to vector<8x16xf32>
    %64 = vector.shape_cast %63 : vector<8x16xf32> to vector<8x16x1xf32>
    %65 = tpu.reciprocal %64 {approx = true} : vector<8x16x1xf32> -> vector<8x16x1xf32>
    %66 = vector.broadcast %65 : vector<8x16x1xf32> to vector<8x16x16xf32>
    %67 = arith.mulf %62, %66 : vector<8x16x16xf32>
    %68 = arith.truncf %67 : vector<8x16x16xf32> to vector<8x16x16xbf16>
    "tpu.trace_start"() <{level = 10 : i32, message = "bqk,bkd->bqd"}> : () -> ()
    %cst_24 = arith.constant dense<0.000000e+00> : vector<8x16x128xf32>
    %69 = tpu.matmul %68, %48, %cst_24 {dimension_numbers = #tpu.dot_dimension_numbers<[2], [1], [1], [2], [0, 0, 0, 1, 1, 2], [0], [0]>} : vector<8x16x16xbf16>, vector<8x16x128xbf16>, vector<8x16x128xf32> -> vector<8x16x128xf32>
    "tpu.trace_stop"() : () -> ()
    %70 = vector.shape_cast %69 : vector<8x16x128xf32> to vector<128x128xf32>
    %71 = arith.truncf %70 : vector<128x128xf32> to vector<128x128xbf16>
    %c0_25 = arith.constant 0 : index
    %c384 = arith.constant 384 : index
    %72 = vector.load %arg3[%c0_25, %c384] : memref<128x512xbf16, #tpu.memory_space<vmem>>, vector<128x128xbf16>
    %cst_26 = arith.constant dense<0.000000e+00> : vector<128x128xf32>
    %73 = tpu.matmul %71, %72, %cst_26 {dimension_numbers = #tpu.dot_dimension_numbers<[1], [0], [0], [1], [0, 0, 1, 1], [], []>} : vector<128x128xbf16>, vector<128x128xbf16>, vector<128x128xf32> -> vector<128x128xf32>
    %c5 = arith.constant 5 : index
    %c0_27 = arith.constant 0 : index
    %74 = vector.load %arg4[%c5, %c0_27] : memref<11x128xf32, #tpu.memory_space<vmem>>, vector<1x128xf32>
    %75 = vector.broadcast %74 : vector<1x128xf32> to vector<128x128xf32>
    %76 = arith.addf %73, %75 : vector<128x128xf32>
    %77 = arith.addf %27, %76 : vector<128x128xf32>
    %c6 = arith.constant 6 : index
    %c0_28 = arith.constant 0 : index
    %78 = vector.load %arg4[%c6, %c0_28] : memref<11x128xf32, #tpu.memory_space<vmem>>, vector<1x128xf32>
    %c7 = arith.constant 7 : index
    %c0_29 = arith.constant 0 : index
    %79 = vector.load %arg4[%c7, %c0_29] : memref<11x128xf32, #tpu.memory_space<vmem>>, vector<1x128xf32>
    %cst_30 = arith.constant dense<0.000000e+00> : vector<128xf32>
    %80 = vector.multi_reduction <add>, %77, %cst_30 [1] : vector<128x128xf32> to vector<128xf32>
    %81 = vector.shape_cast %80 : vector<128xf32> to vector<128x1xf32>
    %cst_31 = arith.constant 1.280000e+02 : f32
    %82 = vector.broadcast %cst_31 : f32 to vector<128x1xf32>
    %83 = arith.divf %81, %82 : vector<128x1xf32>
    %84 = vector.broadcast %83 : vector<128x1xf32> to vector<128x128xf32>
    %85 = arith.subf %77, %84 : vector<128x128xf32>
    %86 = arith.mulf %85, %85 : vector<128x128xf32>
    %cst_32 = arith.constant dense<0.000000e+00> : vector<128xf32>
    %87 = vector.multi_reduction <add>, %86, %cst_32 [1] : vector<128x128xf32> to vector<128xf32>
    %88 = vector.shape_cast %87 : vector<128xf32> to vector<128x1xf32>
    %cst_33 = arith.constant 1.280000e+02 : f32
    %89 = vector.broadcast %cst_33 : f32 to vector<128x1xf32>
    %90 = arith.divf %88, %89 : vector<128x1xf32>
    %91 = vector.broadcast %83 : vector<128x1xf32> to vector<128x128xf32>
    %92 = arith.subf %77, %91 : vector<128x128xf32>
    %cst_34 = arith.constant 9.99999996E-13 : f32
    %93 = vector.broadcast %cst_34 : f32 to vector<128x1xf32>
    %94 = arith.addf %90, %93 : vector<128x1xf32>
    %95 = math.rsqrt %94 : vector<128x1xf32>
    %96 = vector.broadcast %95 : vector<128x1xf32> to vector<128x128xf32>
    %97 = arith.mulf %92, %96 : vector<128x128xf32>
    %98 = vector.broadcast %78 : vector<1x128xf32> to vector<128x128xf32>
    %99 = arith.mulf %97, %98 : vector<128x128xf32>
    %100 = vector.broadcast %79 : vector<1x128xf32> to vector<128x128xf32>
    %101 = arith.addf %99, %100 : vector<128x128xf32>
    %102 = arith.truncf %101 : vector<128x128xf32> to vector<128x128xbf16>
    %c0_35 = arith.constant 0 : index
    %c0_36 = arith.constant 0 : index
    %103 = vector.load %arg5[%c0_35, %c0_36] : memref<128x256xbf16, #tpu.memory_space<vmem>>, vector<128x256xbf16>
    %cst_37 = arith.constant dense<0.000000e+00> : vector<128x256xf32>
    %104 = tpu.matmul %102, %103, %cst_37 {dimension_numbers = #tpu.dot_dimension_numbers<[1], [0], [0], [1], [0, 0, 1, 1], [], []>} : vector<128x128xbf16>, vector<128x256xbf16>, vector<128x256xf32> -> vector<128x256xf32>
    %c0_38 = arith.constant 0 : index
    %c0_39 = arith.constant 0 : index
    %105 = vector.load %arg6[%c0_38, %c0_39] : memref<1x256xf32, #tpu.memory_space<vmem>>, vector<1x256xf32>
    %106 = vector.broadcast %105 : vector<1x256xf32> to vector<128x256xf32>
    %107 = arith.addf %104, %106 : vector<128x256xf32>
    %108 = arith.mulf %107, %107 : vector<128x256xf32>
    %109 = arith.mulf %107, %108 : vector<128x256xf32>
    %cst_40 = arith.constant 4.471500e-02 : f32
    %110 = vector.broadcast %cst_40 : f32 to vector<128x256xf32>
    %111 = arith.mulf %110, %109 : vector<128x256xf32>
    %112 = arith.addf %107, %111 : vector<128x256xf32>
    %cst_41 = arith.constant 0.797884583 : f32
    %113 = vector.broadcast %cst_41 : f32 to vector<128x256xf32>
    %114 = arith.mulf %113, %112 : vector<128x256xf32>
    %115 = math.tanh %114 : vector<128x256xf32>
    %cst_42 = arith.constant 1.000000e+00 : f32
    %116 = vector.broadcast %cst_42 : f32 to vector<128x256xf32>
    %117 = arith.addf %116, %115 : vector<128x256xf32>
    %cst_43 = arith.constant 5.000000e-01 : f32
    %118 = vector.broadcast %cst_43 : f32 to vector<128x256xf32>
    %119 = arith.mulf %118, %117 : vector<128x256xf32>
    %120 = arith.mulf %107, %119 : vector<128x256xf32>
    %121 = arith.truncf %120 : vector<128x256xf32> to vector<128x256xbf16>
    %c0_44 = arith.constant 0 : index
    %c0_45 = arith.constant 0 : index
    %122 = vector.load %arg7[%c0_44, %c0_45] : memref<256x128xbf16, #tpu.memory_space<vmem>>, vector<256x128xbf16>
    %cst_46 = arith.constant dense<0.000000e+00> : vector<128x128xf32>
    %123 = tpu.matmul %121, %122, %cst_46 {dimension_numbers = #tpu.dot_dimension_numbers<[1], [0], [0], [1], [0, 0, 1, 1], [], []>} : vector<128x256xbf16>, vector<256x128xbf16>, vector<128x128xf32> -> vector<128x128xf32>
    %c8 = arith.constant 8 : index
    %c0_47 = arith.constant 0 : index
    %124 = vector.load %arg4[%c8, %c0_47] : memref<11x128xf32, #tpu.memory_space<vmem>>, vector<1x128xf32>
    %125 = vector.broadcast %124 : vector<1x128xf32> to vector<128x128xf32>
    %126 = arith.addf %123, %125 : vector<128x128xf32>
    %127 = arith.addf %101, %126 : vector<128x128xf32>
    %c9 = arith.constant 9 : index
    %c0_48 = arith.constant 0 : index
    %128 = vector.load %arg4[%c9, %c0_48] : memref<11x128xf32, #tpu.memory_space<vmem>>, vector<1x128xf32>
    %c10 = arith.constant 10 : index
    %c0_49 = arith.constant 0 : index
    %129 = vector.load %arg4[%c10, %c0_49] : memref<11x128xf32, #tpu.memory_space<vmem>>, vector<1x128xf32>
    %cst_50 = arith.constant dense<0.000000e+00> : vector<128xf32>
    %130 = vector.multi_reduction <add>, %127, %cst_50 [1] : vector<128x128xf32> to vector<128xf32>
    %131 = vector.shape_cast %130 : vector<128xf32> to vector<128x1xf32>
    %cst_51 = arith.constant 1.280000e+02 : f32
    %132 = vector.broadcast %cst_51 : f32 to vector<128x1xf32>
    %133 = arith.divf %131, %132 : vector<128x1xf32>
    %134 = vector.broadcast %133 : vector<128x1xf32> to vector<128x128xf32>
    %135 = arith.subf %127, %134 : vector<128x128xf32>
    %136 = arith.mulf %135, %135 : vector<128x128xf32>
    %cst_52 = arith.constant dense<0.000000e+00> : vector<128xf32>
    %137 = vector.multi_reduction <add>, %136, %cst_52 [1] : vector<128x128xf32> to vector<128xf32>
    %138 = vector.shape_cast %137 : vector<128xf32> to vector<128x1xf32>
    %cst_53 = arith.constant 1.280000e+02 : f32
    %139 = vector.broadcast %cst_53 : f32 to vector<128x1xf32>
    %140 = arith.divf %138, %139 : vector<128x1xf32>
    %141 = vector.broadcast %133 : vector<128x1xf32> to vector<128x128xf32>
    %142 = arith.subf %127, %141 : vector<128x128xf32>
    %cst_54 = arith.constant 9.99999996E-13 : f32
    %143 = vector.broadcast %cst_54 : f32 to vector<128x1xf32>
    %144 = arith.addf %140, %143 : vector<128x1xf32>
    %145 = math.rsqrt %144 : vector<128x1xf32>
    %146 = vector.broadcast %145 : vector<128x1xf32> to vector<128x128xf32>
    %147 = arith.mulf %142, %146 : vector<128x128xf32>
    %148 = vector.broadcast %128 : vector<1x128xf32> to vector<128x128xf32>
    %149 = arith.mulf %147, %148 : vector<128x128xf32>
    %150 = vector.broadcast %129 : vector<1x128xf32> to vector<128x128xf32>
    %151 = arith.addf %149, %150 : vector<128x128xf32>
    %152 = vector.shape_cast %151 : vector<128x128xf32> to vector<8x16x128xf32>
    %153 = arith.truncf %152 : vector<8x16x128xf32> to vector<8x16x128xbf16>
    %154 = arith.truncf %0 : vector<8x1x16xf32> to vector<8x1x16xbf16>
    "tpu.trace_start"() <{level = 10 : i32, message = "bol,bld->bod"}> : () -> ()
    %cst_55 = arith.constant dense<0.000000e+00> : vector<8x1x128xf32>
    %155 = tpu.matmul %154, %153, %cst_55 {dimension_numbers = #tpu.dot_dimension_numbers<[2], [1], [1], [2], [0, 0, 0, 1, 1, 2], [0], [0]>} : vector<8x1x16xbf16>, vector<8x16x128xbf16>, vector<8x1x128xf32> -> vector<8x1x128xf32>
    "tpu.trace_stop"() : () -> ()
    %cst_56 = arith.constant dense<0.000000e+00> : vector<8x1xf32>
    %156 = vector.multi_reduction <add>, %0, %cst_56 [2] : vector<8x1x16xf32> to vector<8x1xf32>
    %157 = vector.shape_cast %156 : vector<8x1xf32> to vector<8x1x1xf32>
    %cst_57 = arith.constant 1.000000e+00 : f32
    %158 = vector.broadcast %cst_57 : f32 to vector<8x1x1xf32>
    %159 = arith.maximumf %157, %158 : vector<8x1x1xf32>
    %160 = tpu.reciprocal %159 {approx = true} : vector<8x1x1xf32> -> vector<8x1x1xf32>
    %161 = vector.broadcast %160 : vector<8x1x1xf32> to vector<8x1x128xf32>
    %162 = arith.mulf %155, %161 : vector<8x1x128xf32>
    %163 = vector.shape_cast %162 : vector<8x1x128xf32> to vector<8x128xf32>
    %164 = arith.truncf %163 : vector<8x128xf32> to vector<8x128xbf16>
    %c0_58 = arith.constant 0 : index
    %c0_59 = arith.constant 0 : index
    %165 = vector.load %arg8[%c0_58, %c0_59] : memref<128x128xbf16, #tpu.memory_space<vmem>>, vector<128x128xbf16>
    %cst_60 = arith.constant dense<0.000000e+00> : vector<8x128xf32>
    %166 = tpu.matmul %164, %165, %cst_60 {dimension_numbers = #tpu.dot_dimension_numbers<[1], [0], [0], [1], [0, 0, 1, 1], [], []>} : vector<8x128xbf16>, vector<128x128xbf16>, vector<8x128xf32> -> vector<8x128xf32>
    %c0_61 = arith.constant 0 : index
    %c0_62 = arith.constant 0 : index
    %167 = vector.load %arg9[%c0_61, %c0_62] : memref<1x128xf32, #tpu.memory_space<vmem>>, vector<1x128xf32>
    %168 = vector.broadcast %167 : vector<1x128xf32> to vector<8x128xf32>
    %169 = arith.addf %166, %168 : vector<8x128xf32>
    %c0_63 = arith.constant 0 : index
    %c0_64 = arith.constant 0 : index
    %170 = vector.load %arg10[%c0_63, %c0_64] : memref<8x128xf32, #tpu.memory_space<vmem>>, vector<8x128xf32>
    tpu.vector_store %arg10[%c0_63, %c0_64], %169 {strides = array<i32>} : memref<8x128xf32, #tpu.memory_space<vmem>>, vector<8x128xf32>,
    return
  }
  func.func @transform_0(%arg0: i32) -> (i32, i32, i32) {
    %c0_i32 = arith.constant 0 : i32
    %c0_i32_0 = arith.constant 0 : i32
    %c0_i32_1 = arith.constant 0 : i32
    return %arg0, %c0_i32, %c0_i32_0 : i32, i32, i32
  }
  func.func @transform_1(%arg0: i32) -> (i32, i32, i32) {
    %c0_i32 = arith.constant 0 : i32
    %c0_i32_0 = arith.constant 0 : i32
    %c0_i32_1 = arith.constant 0 : i32
    return %arg0, %c0_i32, %c0_i32_0 : i32, i32, i32
  }
  func.func @transform_2(%arg0: i32) -> (i32, i32) {
    %c0_i32 = arith.constant 0 : i32
    %c0_i32_0 = arith.constant 0 : i32
    %c0_i32_1 = arith.constant 0 : i32
    return %c0_i32, %c0_i32_0 : i32, i32
  }
  func.func @transform_3(%arg0: i32) -> (i32, i32) {
    %c0_i32 = arith.constant 0 : i32
    %c0_i32_0 = arith.constant 0 : i32
    %c0_i32_1 = arith.constant 0 : i32
    return %c0_i32, %c0_i32_0 : i32, i32
  }
  func.func @transform_4(%arg0: i32) -> (i32, i32) {
    %c0_i32 = arith.constant 0 : i32
    %c0_i32_0 = arith.constant 0 : i32
    %c0_i32_1 = arith.constant 0 : i32
    return %c0_i32, %c0_i32_0 : i32, i32
  }
  func.func @transform_5(%arg0: i32) -> (i32, i32) {
    %c0_i32 = arith.constant 0 : i32
    %c0_i32_0 = arith.constant 0 : i32
    %c0_i32_1 = arith.constant 0 : i32
    return %c0_i32, %c0_i32_0 : i32, i32
  }
  func.func @transform_6(%arg0: i32) -> (i32, i32) {
    %c0_i32 = arith.constant 0 : i32
    %c0_i32_0 = arith.constant 0 : i32
    %c0_i32_1 = arith.constant 0 : i32
    return %c0_i32, %c0_i32_0 : i32, i32
  }
  func.func @transform_7(%arg0: i32) -> (i32, i32) {
    %c0_i32 = arith.constant 0 : i32
    %c0_i32_0 = arith.constant 0 : i32
    %c0_i32_1 = arith.constant 0 : i32
    return %c0_i32, %c0_i32_0 : i32, i32
  }
  func.func @transform_8(%arg0: i32) -> (i32, i32) {
    %c0_i32 = arith.constant 0 : i32
    %c0_i32_0 = arith.constant 0 : i32
    %c0_i32_1 = arith.constant 0 : i32
    return %c0_i32, %c0_i32_0 : i32, i32
  }
  func.func @transform_9(%arg0: i32) -> (i32, i32) {
    %c0_i32 = arith.constant 0 : i32
    %c0_i32_0 = arith.constant 0 : i32
    return %arg0, %c0_i32 : i32, i32
  }
}

</mosaic_0001>

<llo_original>
// kernel: sequence_classification_forward.1
$region0: #{sequence_classification_forward.1}
  #allocation0 [shape = 'u32[]', space=smem, size = 0x4, offset = 0x4, fixed_abs, tag = 'smem constant byte address 0x4 - core index']
  #allocation1 [shape = 'u32[144,128]{1,0:T(1,128)}', space=vmem, size = 0x12000, scoped, tag = 'internal scratch']
  %s0 = inlined_call_operand.hbm [shape: bf16[16,16,128], index: 0, kind: input, shape index: {}]
  %s1 = inlined_call_operand.hbm [shape: f32[16,1,16], index: 1, kind: input, shape index: {}]
  %s2 = inlined_call_operand.hbm [shape: bf16[128,512], index: 2, kind: input, shape index: {}]
  %s3 = inlined_call_operand.hbm [shape: f32[11,128], index: 3, kind: input, shape index: {}]
  %s4 = inlined_call_operand.hbm [shape: bf16[128,256], index: 4, kind: input, shape index: {}]
  %s5 = inlined_call_operand.hbm [shape: f32[1,256], index: 5, kind: input, shape index: {}]
  %s6 = inlined_call_operand.hbm [shape: bf16[256,128], index: 6, kind: input, shape index: {}]
  %s7 = inlined_call_operand.hbm [shape: bf16[128,128], index: 7, kind: input, shape index: {}]
  %s8 = inlined_call_operand.hbm [shape: f32[1,128], index: 8, kind: input, shape index: {}]
  %s9 = inlined_call_operand.hbm [shape: f32[16,128], index: 9, kind: output, shape index: {}]
  %s10 = sld [smem:[#allocation0]]
  $region105: #{sequence_classification_forward.1} parent=0
    _
  %s12 = ssub.s32 1, %s10
  %s13 = scalar_select 0, %s12, %s10
  $region1: #{sequence_classification_forward.1} parent=0
    #allocation2 [shape = 'u8[65536]{0}', space=vmem, size = 0x10000, scoped, tag = 'input window, operand 0']
    #allocation3 [shape = 's32[2]{0}', space=sflag, size = 0x8, scoped, tag = 'scoped memory for sequence_classification_forward.1']
    #allocation4 [shape = 's32[2]{0}', space=sflag, size = 0x8, scoped, tag = 'scoped memory for sequence_classification_forward.1']
    #allocation5 [shape = 'u8[8192]{0}', space=vmem, size = 0x2000, scoped, tag = 'input window, operand 1']
    #allocation6 [shape = 's32[2]{0}', space=sflag, size = 0x8, scoped, tag = 'scoped memory for sequence_classification_forward.1']
    #allocation7 [shape = 'u8[131072]{0}', space=vmem, size = 0x20000, scoped, tag = 'input window, operand 2, single buffered']
    #allocation8 [shape = 'u8[8192]{0}', space=vmem, size = 0x2000, scoped, tag = 'input window, operand 3, single buffered']
    #allocation9 [shape = 's32[1]{0}', space=sflag, size = 0x4, scoped, tag = 'scoped memory for sequence_classification_forward.1']
    #allocation10 [shape = 'u8[65536]{0}', space=vmem, size = 0x10000, scoped, tag = 'input window, operand 4, single buffered']
    #allocation11 [shape = 'u8[1024]{0}', space=vmem, size = 0x400, scoped, tag = 'input window, operand 5, single buffered']
    #allocation12 [shape = 's32[1]{0}', space=sflag, size = 0x4, scoped, tag = 'scoped memory for sequence_classification_forward.1']
    #allocation13 [shape = 'u8[65536]{0}', space=vmem, size = 0x10000, scoped, tag = 'input window, operand 6, single buffered']
    #allocation14 [shape = 'u8[32768]{0}', space=vmem, size = 0x8000, scoped, tag = 'input window, operand 7, single buffered']
    #allocation15 [shape = 's32[1]{0}', space=sflag, size = 0x4, scoped, tag = 'scoped memory for sequence_classification_forward.1']
    #allocation16 [shape = 'u8[512]{0}', space=vmem, size = 0x400, scoped, tag = 'input window, operand 8, single buffered']
    #allocation17 [shape = 'u8[8192]{0}', space=vmem, size = 0x2000, scoped, tag = 'output window, operand 0']
    %14 = vsyncpa [#allocation3], 0
    %s15 = scalar_lea.sflag [#allocation3], 1
    %16 = vsyncpa %s15, 0
    %17 = vsyncpa [#allocation6], 0
    %s18 = scalar_lea.sflag [#allocation6], 1
    %19 = vsyncpa %s18, 0
    %20 = vsyncpa [#allocation9], 0
    %21 = vsyncpa [#allocation12], 0
    %22 = vsyncpa [#allocation15], 0
    %23 = vsyncpa [#allocation4], 0
    %s24 = scalar_lea.sflag [#allocation4], 1
    %25 = vsyncpa %s24, 0
    loop: start=0, step=1, limit=4
    $region2: #{sequence_classification_forward.1} parent=1 // loop_pre_header
      _
    $region3: #{sequence_classification_forward.1} parent=1 // loop_header
      %s27 = sphi 0, %s31
      %p28 = scmp.ge.s32.totalorder %s27, 4
      %s37 = sphi 0, %s39
      %s40 = sphi 0, %s37
      %s41 = sphi 0, %s40
      %s57 = sphi 0, %s41
      %s63 = sphi 0, %s65
      %s66 = sphi 0, %s63
      %s67 = sphi 0, %s66
      %s83 = sphi 0, %s67
      %s87 = sphi 0, %s87
      %s89 = sphi 0, %s87
      %s90 = sphi 0, %s89
      %s104 = sphi 0, %s90
      %s108 = sphi 0, %s108
      %s110 = sphi 0, %s108
      %s111 = sphi 0, %s110
      %s125 = sphi 0, %s111
      %s129 = sphi 0, %s129
      %s131 = sphi 0, %s129
      %s132 = sphi 0, %s131
      %s146 = sphi 0, %s132
      %s150 = sphi 0, %s150
      %s152 = sphi 0, %s150
      %s153 = sphi 0, %s152
      %s167 = sphi 0, %s153
      %s171 = sphi 0, %s171
      %s173 = sphi 0, %s171
      %s174 = sphi 0, %s173
      %s188 = sphi 0, %s174
      %s192 = sphi 0, %s192
      %s194 = sphi 0, %s192
      %s195 = sphi 0, %s194
      %s209 = sphi 0, %s195
      %s213 = sphi 0, %s213
      %s215 = sphi 0, %s213
      %s216 = sphi 0, %s215
      %s230 = sphi 0, %s216
      %s236 = sphi 0, %s238
      %s239 = sphi 0, %s236
      %s240 = sphi 0, %s239
      %s256 = sphi 0, %s240
    $region4: #{sequence_classification_forward.1} parent=1 // loop_header_branch
      %30 = sbr.rel (%p28) target = $region8
    $region5: #{sequence_classification_forward.1} parent=1 // loop_body
      %s32 = ssub.s32 %s27, 1
      %s33 = ssub.s32 %s27, 2
      %s34 = sadd.s32 %s27, 1
      %s35 = ssub.s32 %s27, %s34
      %p36 = scmp.eq.s32.totalorder %s35, 0
      %s38 = sadd.s32 %s37, 1
      %s39 = scalar_select %p36, %s37, %s38
      %p42 = pneg %p36
      %p43 = scmp.eq.s32.totalorder %s27, 1
      %p44 = por %p42, %p43
      %p45 = scmp.ne.s32.totalorder %s37, %s40
      %p46 = scmp.eq.s32.totalorder %s27, 0
      %p47 = por %p45, %p46
      %p48 = scmp.ne.s32.totalorder %s37, %s40
      %p49 = scmp.eq.s32.totalorder %s32, 1
      %p50 = por %p48, %p49
      %p51 = scmp.ne.s32.totalorder %s40, %s41
      %p52 = scmp.eq.s32.totalorder %s32, 0
      %p53 = por %p51, %p52
      %p54 = scmp.ne.s32.totalorder %s40, %s41
      %p55 = scmp.eq.s32.totalorder %s33, 1
      %p56 = por %p54, %p55
      %p58 = scmp.ne.s32.totalorder %s41, %s57
      %p59 = scmp.eq.s32.totalorder %s33, 0
      %p60 = por %p58, %p59
      %s61 = ssub.s32 %s27, %s34
      %p62 = scmp.eq.s32.totalorder %s61, 0
      %s64 = sadd.s32 %s63, 1
      %s65 = scalar_select %p62, %s63, %s64
      %p68 = pneg %p62
      %p69 = scmp.eq.s32.totalorder %s27, 1
      %p70 = por %p68, %p69
      %p71 = scmp.ne.s32.totalorder %s63, %s66
      %p72 = scmp.eq.s32.totalorder %s27, 0
      %p73 = por %p71, %p72
      %p74 = scmp.ne.s32.totalorder %s63, %s66
      %p75 = scmp.eq.s32.totalorder %s32, 1
      %p76 = por %p74, %p75
      %p77 = scmp.ne.s32.totalorder %s66, %s67
      %p78 = scmp.eq.s32.totalorder %s32, 0
      %p79 = por %p77, %p78
      %p80 = scmp.ne.s32.totalorder %s66, %s67
      %p81 = scmp.eq.s32.totalorder %s33, 1
      %p82 = por %p80, %p81
      %p84 = scmp.ne.s32.totalorder %s67, %s83
      %p85 = scmp.eq.s32.totalorder %s33, 0
      %p86 = por %p84, %p85
      %s88 = sadd.s32 %s87, 1
      %p91 = scmp.eq.s32.totalorder %s27, 1
      %p92 = scmp.ne.s32.totalorder %s87, %s89
      %p93 = scmp.eq.s32.totalorder %s27, 0
      %p94 = por %p92, %p93
      %p95 = scmp.ne.s32.totalorder %s87, %s89
      %p96 = scmp.eq.s32.totalorder %s32, 1
      %p97 = por %p95, %p96
      %p98 = scmp.ne.s32.totalorder %s89, %s90
      %p99 = scmp.eq.s32.totalorder %s32, 0
      %p100 = por %p98, %p99
      %p101 = scmp.ne.s32.totalorder %s89, %s90
      %p102 = scmp.eq.s32.totalorder %s33, 1
      %p103 = por %p101, %p102
      %p105 = scmp.ne.s32.totalorder %s90, %s104
      %p106 = scmp.eq.s32.totalorder %s33, 0
      %p107 = por %p105, %p106
      %s109 = sadd.s32 %s108, 1
      %p112 = scmp.eq.s32.totalorder %s27, 1
      %p113 = scmp.ne.s32.totalorder %s108, %s110
      %p114 = scmp.eq.s32.totalorder %s27, 0
      %p115 = por %p113, %p114
      %p116 = scmp.ne.s32.totalorder %s108, %s110
      %p117 = scmp.eq.s32.totalorder %s32, 1
      %p118 = por %p116, %p117
      %p119 = scmp.ne.s32.totalorder %s110, %s111
      %p120 = scmp.eq.s32.totalorder %s32, 0
      %p121 = por %p119, %p120
      %p122 = scmp.ne.s32.totalorder %s110, %s111
      %p123 = scmp.eq.s32.totalorder %s33, 1
      %p124 = por %p122, %p123
      %p126 = scmp.ne.s32.totalorder %s111, %s125
      %p127 = scmp.eq.s32.totalorder %s33, 0
      %p128 = por %p126, %p127
      %s130 = sadd.s32 %s129, 1
      %p133 = scmp.eq.s32.totalorder %s27, 1
      %p134 = scmp.ne.s32.totalorder %s129, %s131
      %p135 = scmp.eq.s32.totalorder %s27, 0
      %p136 = por %p134, %p135
      %p137 = scmp.ne.s32.totalorder %s129, %s131
      %p138 = scmp.eq.s32.totalorder %s32, 1
      %p139 = por %p137, %p138
      %p140 = scmp.ne.s32.totalorder %s131, %s132
      %p141 = scmp.eq.s32.totalorder %s32, 0
      %p142 = por %p140, %p141
      %p143 = scmp.ne.s32.totalorder %s131, %s132
      %p144 = scmp.eq.s32.totalorder %s33, 1
      %p145 = por %p143, %p144
      %p147 = scmp.ne.s32.totalorder %s132, %s146
      %p148 = scmp.eq.s32.totalorder %s33, 0
      %p149 = por %p147, %p148
      %s151 = sadd.s32 %s150, 1
      %p154 = scmp.eq.s32.totalorder %s27, 1
      %p155 = scmp.ne.s32.totalorder %s150, %s152
      %p156 = scmp.eq.s32.totalorder %s27, 0
      %p157 = por %p155, %p156
      %p158 = scmp.ne.s32.totalorder %s150, %s152
      %p159 = scmp.eq.s32.totalorder %s32, 1
      %p160 = por %p158, %p159
      %p161 = scmp.ne.s32.totalorder %s152, %s153
      %p162 = scmp.eq.s32.totalorder %s32, 0
      %p163 = por %p161, %p162
      %p164 = scmp.ne.s32.totalorder %s152, %s153
      %p165 = scmp.eq.s32.totalorder %s33, 1
      %p166 = por %p164, %p165
      %p168 = scmp.ne.s32.totalorder %s153, %s167
      %p169 = scmp.eq.s32.totalorder %s33, 0
      %p170 = por %p168, %p169
      %s172 = sadd.s32 %s171, 1
      %p175 = scmp.eq.s32.totalorder %s27, 1
      %p176 = scmp.ne.s32.totalorder %s171, %s173
      %p177 = scmp.eq.s32.totalorder %s27, 0
      %p178 = por %p176, %p177
      %p179 = scmp.ne.s32.totalorder %s171, %s173
      %p180 = scmp.eq.s32.totalorder %s32, 1
      %p181 = por %p179, %p180
      %p182 = scmp.ne.s32.totalorder %s173, %s174
      %p183 = scmp.eq.s32.totalorder %s32, 0
      %p184 = por %p182, %p183
      %p185 = scmp.ne.s32.totalorder %s173, %s174
      %p186 = scmp.eq.s32.totalorder %s33, 1
      %p187 = por %p185, %p186
      %p189 = scmp.ne.s32.totalorder %s174, %s188
      %p190 = scmp.eq.s32.totalorder %s33, 0
      %p191 = por %p189, %p190
      %s193 = sadd.s32 %s192, 1
      %p196 = scmp.eq.s32.totalorder %s27, 1
      %p197 = scmp.ne.s32.totalorder %s192, %s194
      %p198 = scmp.eq.s32.totalorder %s27, 0
      %p199 = por %p197, %p198
      %p200 = scmp.ne.s32.totalorder %s192, %s194
      %p201 = scmp.eq.s32.totalorder %s32, 1
      %p202 = por %p200, %p201
      %p203 = scmp.ne.s32.totalorder %s194, %s195
      %p204 = scmp.eq.s32.totalorder %s32, 0
      %p205 = por %p203, %p204
      %p206 = scmp.ne.s32.totalorder %s194, %s195
      %p207 = scmp.eq.s32.totalorder %s33, 1
      %p208 = por %p206, %p207
      %p210 = scmp.ne.s32.totalorder %s195, %s209
      %p211 = scmp.eq.s32.totalorder %s33, 0
      %p212 = por %p210, %p211
      %s214 = sadd.s32 %s213, 1
      %p217 = scmp.eq.s32.totalorder %s27, 1
      %p218 = scmp.ne.s32.totalorder %s213, %s215
      %p219 = scmp.eq.s32.totalorder %s27, 0
      %p220 = por %p218, %p219
      %p221 = scmp.ne.s32.totalorder %s213, %s215
      %p222 = scmp.eq.s32.totalorder %s32, 1
      %p223 = por %p221, %p222
      %p224 = scmp.ne.s32.totalorder %s215, %s216
      %p225 = scmp.eq.s32.totalorder %s32, 0
      %p226 = por %p224, %p225
      %p227 = scmp.ne.s32.totalorder %s215, %s216
      %p228 = scmp.eq.s32.totalorder %s33, 1
      %p229 = por %p227, %p228
      %p231 = scmp.ne.s32.totalorder %s216, %s230
      %p232 = scmp.eq.s32.totalorder %s33, 0
      %p233 = por %p231, %p232
      %s234 = ssub.s32 %s27, %s34
      %p235 = scmp.eq.s32.totalorder %s234, 0
      %s237 = sadd.s32 %s236, 1
      %s238 = scalar_select %p235, %s236, %s237
      %p241 = pneg %p235
      %p242 = scmp.eq.s32.totalorder %s27, 1
      %p243 = por %p241, %p242
      %p244 = scmp.ne.s32.totalorder %s236, %s239
      %p245 = scmp.eq.s32.totalorder %s27, 0
      %p246 = por %p244, %p245
      %p247 = scmp.ne.s32.totalorder %s236, %s239
      %p248 = scmp.eq.s32.totalorder %s32, 1
      %p249 = por %p247, %p248
      %p250 = scmp.ne.s32.totalorder %s239, %s240
      %p251 = scmp.eq.s32.totalorder %s32, 0
      %p252 = por %p250, %p251
      %p253 = scmp.ne.s32.totalorder %s239, %s240
      %p254 = scmp.eq.s32.totalorder %s33, 1
      %p255 = por %p253, %p254
      %p257 = scmp.ne.s32.totalorder %s240, %s256
      %p258 = scmp.eq.s32.totalorder %s33, 0
      %p259 = por %p257, %p258
      %p260 = scmp.le.s32.totalorder 1, %s27
      %p261 = scmp.lt.s32.totalorder %s27, 3
      %p262 = pnand %p260, %p261
      %p263 = pneg %p262
      // Predicated region
      $region9: #{sequence_classification_forward.1} parent=5 // pred_check
        _
      $region10: #{sequence_classification_forward.1} parent=5 // pred_check_branch
        %265 = sbr.rel (%p262) target = $region12
      $region11: #{sequence_classification_forward.1} parent=5 // pred_region
        %s266 = ssub.s32 %s27, 1
        // Predicated region
        $region13: #{sequence_classification_forward.1} parent=11 // pred_check
          %p267 = pneg %p100
        $region14: #{sequence_classification_forward.1} parent=11 // pred_check_branch
          %269 = sbr.rel (%p267) target = $region16
        $region15: #{sequence_classification_forward.1} parent=11 // pred_region
          %s271 = ssub.s32 4096, 4096
          %272 = vsyncadd [#allocation6], %s271
          %s273 = sshll.u32 [#allocation7], 4
          %s274 = int_to_ptr.vmem [resolvable:$true] %s273
          %279 = dma.hbm_to_vmem [thread:$0]  %s2, 4096, %s274, [#allocation6], 256, 256, 16
        $region16: #{sequence_classification_forward.1} parent=11 // pred_fallthru
          _
        // Predicated region
        $region17: #{sequence_classification_forward.1} parent=11 // pred_check
          %p280 = pneg %p121
        $region18: #{sequence_classification_forward.1} parent=11 // pred_check_branch
          %282 = sbr.rel (%p280) target = $region20
        $region19: #{sequence_classification_forward.1} parent=11 // pred_region
          %s284 = ssub.s32 256, 256
          %285 = vsyncadd [#allocation9], %s284
          %s286 = sshll.u32 [#allocation8], 4
          %s287 = int_to_ptr.vmem [resolvable:$true] %s286
          %292 = dma.hbm_to_vmem [thread:$0]  %s3, 256, %s287, [#allocation9], 128, 128, 8
        $region20: #{sequence_classification_forward.1} parent=11 // pred_fallthru
          _
        // Predicated region
        $region21: #{sequence_classification_forward.1} parent=11 // pred_check
          %p293 = pneg %p142
        $region22: #{sequence_classification_forward.1} parent=11 // pred_check_branch
          %295 = sbr.rel (%p293) target = $region24
        $region23: #{sequence_classification_forward.1} parent=11 // pred_region
          %s297 = ssub.s32 2048, 2048
          %298 = vsyncadd [#allocation9], %s297
          %s299 = sshll.u32 [#allocation10], 4
          %s300 = int_to_ptr.vmem [resolvable:$true] %s299
          %305 = dma.hbm_to_vmem [thread:$0]  %s4, 2048, %s300, [#allocation9], 128, 128, 8
        $region24: #{sequence_classification_forward.1} parent=11 // pred_fallthru
          _
        // Predicated region
        $region25: #{sequence_classification_forward.1} parent=11 // pred_check
          %p306 = pneg %p163
        $region26: #{sequence_classification_forward.1} parent=11 // pred_check_branch
          %308 = sbr.rel (%p306) target = $region28
        $region27: #{sequence_classification_forward.1} parent=11 // pred_region
          %s310 = ssub.s32 32, 32
          %311 = vsyncadd [#allocation12], %s310
          %s313 = sshll.u32 [#allocation11], 4
          %s314 = int_to_ptr.vmem [resolvable:$true] %s313
          %316 = dma.hbm_to_vmem [thread:$0]  %s5, 32, %s314, [#allocation12]
        $region28: #{sequence_classification_forward.1} parent=11 // pred_fallthru
          _
        // Predicated region
        $region29: #{sequence_classification_forward.1} parent=11 // pred_check
          %p317 = pneg %p184
        $region30: #{sequence_classification_forward.1} parent=11 // pred_check_branch
          %319 = sbr.rel (%p317) target = $region32
        $region31: #{sequence_classification_forward.1} parent=11 // pred_region
          %s321 = ssub.s32 2048, 2048
          %322 = vsyncadd [#allocation12], %s321
          %s323 = sshll.u32 [#allocation13], 4
          %s324 = int_to_ptr.vmem [resolvable:$true] %s323
          %329 = dma.hbm_to_vmem [thread:$0]  %s6, 2048, %s324, [#allocation12], 64, 64, 4
        $region32: #{sequence_classification_forward.1} parent=11 // pred_fallthru
          _
        // Predicated region
        $region33: #{sequence_classification_forward.1} parent=11 // pred_check
          %p330 = pneg %p205
        $region34: #{sequence_classification_forward.1} parent=11 // pred_check_branch
          %332 = sbr.rel (%p330) target = $region36
        $region35: #{sequence_classification_forward.1} parent=11 // pred_region
          %s334 = ssub.s32 1024, 1024
          %335 = vsyncadd [#allocation15], %s334
          %s336 = sshll.u32 [#allocation14], 4
          %s337 = int_to_ptr.vmem [resolvable:$true] %s336
          %342 = dma.hbm_to_vmem [thread:$0]  %s7, 1024, %s337, [#allocation15], 64, 64, 4
        $region36: #{sequence_classification_forward.1} parent=11 // pred_fallthru
          _
        // Predicated region
        $region37: #{sequence_classification_forward.1} parent=11 // pred_check
          %p343 = pneg %p226
        $region38: #{sequence_classification_forward.1} parent=11 // pred_check_branch
          %345 = sbr.rel (%p343) target = $region40
        $region39: #{sequence_classification_forward.1} parent=11 // pred_region
          %s347 = ssub.s32 16, 16
          %348 = vsyncadd [#allocation15], %s347
          %s350 = sshll.u32 [#allocation16], 4
          %s351 = int_to_ptr.vmem [resolvable:$true] %s350
          %353 = dma.hbm_to_vmem [thread:$0]  %s8, 16, %s351, [#allocation15]
        $region40: #{sequence_classification_forward.1} parent=11 // pred_fallthru
          _
      $region12: #{sequence_classification_forward.1} parent=5 // pred_fallthru
        _
      %p354 = scmp.lt.s32.totalorder %s27, 2
      // Predicated region
      $region41: #{sequence_classification_forward.1} parent=5 // pred_check
        %p355 = pneg %p354
      $region42: #{sequence_classification_forward.1} parent=5 // pred_check_branch
        %357 = sbr.rel (%p355) target = $region44
      $region43: #{sequence_classification_forward.1} parent=5 // pred_region
        // Predicated region
        $region45: #{sequence_classification_forward.1} parent=43 // pred_check
          %p358 = pneg %p47
        $region46: #{sequence_classification_forward.1} parent=43 // pred_check_branch
          %360 = sbr.rel (%p358) target = $region48
        $region47: #{sequence_classification_forward.1} parent=43 // pred_region
          %s361 = sand.u32 %s37, 1
          %s362 = scalar_lea.sflag [#allocation3], %s361
          %s363 = sand.u32 %s37, 1
          %s364 = smul.addr %s363, 64
          %s365 = scalar_lea.vmem [#allocation2], %s364
          %s366 = smul.u32 8, %s27
          %s368 = ssub.s32 1024, 1024
          %369 = vsyncadd %s362, %s368
          %s370 = smul.addr %s366, 2
          %s371 = smul.addr %s370, 64
          %s372 = scalar_lea.hbm %s0, %s371
          %s373 = sshll.u32 %s365, 4
          %s374 = int_to_ptr.vmem [resolvable:$true] %s373
          %379 = dma.hbm_to_vmem [thread:$0]  %s372, 1024, %s374, %s362, 64, 64, 4
        $region48: #{sequence_classification_forward.1} parent=43 // pred_fallthru
          _
        // Predicated region
        $region49: #{sequence_classification_forward.1} parent=43 // pred_check
          %p380 = pneg %p73
        $region50: #{sequence_classification_forward.1} parent=43 // pred_check_branch
          %382 = sbr.rel (%p380) target = $region52
        $region51: #{sequence_classification_forward.1} parent=43 // pred_region
          %s383 = sand.u32 %s27, 1
          %s384 = scalar_lea.sflag [#allocation6], %s383
          %s385 = sand.u32 %s63, 1
          %s386 = smul.addr %s385, 8
          %s387 = scalar_lea.vmem [#allocation5], %s386
          %s388 = smul.u32 8, %s27
          %s390 = ssub.s32 128, 128
          %391 = vsyncadd %s384, %s390
          %s392 = smul.addr %s388, 16
          %s393 = scalar_lea.hbm %s1, %s392
          %s394 = sshll.u32 %s387, 4
          %s395 = int_to_ptr.vmem [resolvable:$true] %s394
          %400 = dma.hbm_to_vmem [thread:$0]  %s393, 128, %s395, %s384, 16, 16, 1
        $region52: #{sequence_classification_forward.1} parent=43 // pred_fallthru
          _
      $region44: #{sequence_classification_forward.1} parent=5 // pred_fallthru
        _
      %p401 = scmp.le.s32.totalorder 1, %s27
      %p402 = scmp.lt.s32.totalorder %s27, 3
      %p403 = pnand %p401, %p402
      %p404 = pneg %p403
      // Predicated region
      $region53: #{sequence_classification_forward.1} parent=5 // pred_check
        _
      $region54: #{sequence_classification_forward.1} parent=5 // pred_check_branch
        %406 = sbr.rel (%p403) target = $region56
      $region55: #{sequence_classification_forward.1} parent=5 // pred_region
        %s407 = ssub.s32 %s27, 1
        %s408 = sand.u32 %s40, 1
        %s409 = scalar_lea.sflag [#allocation3], %s408
        %s410 = sand.u32 %s40, 1
        %s411 = smul.addr %s410, 64
        %s412 = scalar_lea.vmem [#allocation2], %s411
        // Predicated region
        $region57: #{sequence_classification_forward.1} parent=55 // pred_check
          %p413 = pneg %p53
        $region58: #{sequence_classification_forward.1} parent=55 // pred_check_branch
          %415 = sbr.rel (%p413) target = $region60
        $region59: #{sequence_classification_forward.1} parent=55 // pred_region
          %416 = dma.done %s409, 1024
        $region60: #{sequence_classification_forward.1} parent=55 // pred_fallthru
          _
        %s417 = sand.u32 %s32, 1
        %s418 = scalar_lea.sflag [#allocation6], %s417
        %s419 = sand.u32 %s66, 1
        %s420 = smul.addr %s419, 8
        %s421 = scalar_lea.vmem [#allocation5], %s420
        // Predicated region
        $region61: #{sequence_classification_forward.1} parent=55 // pred_check
          %p422 = pneg %p79
        $region62: #{sequence_classification_forward.1} parent=55 // pred_check_branch
          %424 = sbr.rel (%p422) target = $region64
        $region63: #{sequence_classification_forward.1} parent=55 // pred_region
          %425 = dma.done %s418, 128
        $region64: #{sequence_classification_forward.1} parent=55 // pred_fallthru
          _
        // Predicated region
        $region65: #{sequence_classification_forward.1} parent=55 // pred_check
          %p426 = pneg %p100
        $region66: #{sequence_classification_forward.1} parent=55 // pred_check_branch
          %428 = sbr.rel (%p426) target = $region68
        $region67: #{sequence_classification_forward.1} parent=55 // pred_region
          %429 = dma.done [#allocation6], 4096
        $region68: #{sequence_classification_forward.1} parent=55 // pred_fallthru
          _
        // Predicated region
        $region69: #{sequence_classification_forward.1} parent=55 // pred_check
          %p430 = pneg %p121
        $region70: #{sequence_classification_forward.1} parent=55 // pred_check_branch
          %432 = sbr.rel (%p430) target = $region72
        $region71: #{sequence_classification_forward.1} parent=55 // pred_region
          %433 = dma.done [#allocation9], 256
        $region72: #{sequence_classification_forward.1} parent=55 // pred_fallthru
          _
        // Predicated region
        $region73: #{sequence_classification_forward.1} parent=55 // pred_check
          %p434 = pneg %p142
        $region74: #{sequence_classification_forward.1} parent=55 // pred_check_branch
          %436 = sbr.rel (%p434) target = $region76
        $region75: #{sequence_classification_forward.1} parent=55 // pred_region
          %437 = dma.done [#allocation9], 2048
        $region76: #{sequence_classification_forward.1} parent=55 // pred_fallthru
          _
        // Predicated region
        $region77: #{sequence_classification_forward.1} parent=55 // pred_check
          %p438 = pneg %p163
        $region78: #{sequence_classification_forward.1} parent=55 // pred_check_branch
          %440 = sbr.rel (%p438) target = $region80
        $region79: #{sequence_classification_forward.1} parent=55 // pred_region
          %441 = dma.done [#allocation12], 32
        $region80: #{sequence_classification_forward.1} parent=55 // pred_fallthru
          _
        // Predicated region
        $region81: #{sequence_classification_forward.1} parent=55 // pred_check
          %p442 = pneg %p184
        $region82: #{sequence_classification_forward.1} parent=55 // pred_check_branch
          %444 = sbr.rel (%p442) target = $region84
        $region83: #{sequence_classification_forward.1} parent=55 // pred_region
          %445 = dma.done [#allocation12], 2048
        $region84: #{sequence_classification_forward.1} parent=55 // pred_fallthru
          _
        // Predicated region
        $region85: #{sequence_classification_forward.1} parent=55 // pred_check
          %p446 = pneg %p205
        $region86: #{sequence_classification_forward.1} parent=55 // pred_check_branch
          %448 = sbr.rel (%p446) target = $region88
        $region87: #{sequence_classification_forward.1} parent=55 // pred_region
          %449 = dma.done [#allocation15], 1024
        $region88: #{sequence_classification_forward.1} parent=55 // pred_fallthru
          _
        // Predicated region
        $region89: #{sequence_classification_forward.1} parent=55 // pred_check
          %p450 = pneg %p226
        $region90: #{sequence_classification_forward.1} parent=55 // pred_check_branch
          %452 = sbr.rel (%p450) target = $region92
        $region91: #{sequence_classification_forward.1} parent=55 // pred_region
          %453 = dma.done [#allocation15], 16
        $region92: #{sequence_classification_forward.1} parent=55 // pred_fallthru
          _
        %s454 = sand.u32 %s40, 1
        %s455 = scalar_lea.sflag [#allocation3], %s454
        %s456 = sand.u32 %s40, 1
        %s457 = smul.addr %s456, 64
        %s458 = scalar_lea.vmem [#allocation2], %s457
        %p459 = pneg %p53
        %p460 = pneg %p50
        %s461 = sand.u32 %s32, 1
        %s462 = scalar_lea.sflag [#allocation6], %s461
        %s463 = sand.u32 %s66, 1
        %s464 = smul.addr %s463, 8
        %s465 = scalar_lea.vmem [#allocation5], %s464
        %p466 = pneg %p79
        %p467 = pneg %p76
        %p468 = pneg %p100
        %p469 = pneg %p97
        %p470 = pneg %p121
        %p471 = pneg %p118
        %p472 = pneg %p142
        %p473 = pneg %p139
        %p474 = pneg %p163
        %p475 = pneg %p160
        %p476 = pneg %p184
        %p477 = pneg %p181
        %p478 = pneg %p205
        %p479 = pneg %p202
        %p480 = pneg %p226
        %p481 = pneg %p223
        %p482 = pneg %p252
        %p483 = pneg %p249
        %s484 = sand.u32 %s239, 1
        %s485 = scalar_lea.sflag [#allocation4], %s484
        %s486 = sand.u32 %s239, 1
        %s487 = smul.addr %s486, 8
        %s488 = scalar_lea.vmem [#allocation17], %s487
        %s489 = smul.u32 8, %s32
        %s490 = smul.u32 8, %s32
        %v492 = vld [vmem:[%s421] sm:$0x1]
        %v493 = vld [vmem:[%s421 + $0x1] sm:$0x1]
        %v494 = vld [vmem:[%s421 + $0x2] sm:$0x1]
        %v495 = vld [vmem:[%s421 + $0x3] sm:$0x1]
        %v496 = vld [vmem:[%s421 + $0x4] sm:$0x1]
        %v497 = vld [vmem:[%s421 + $0x5] sm:$0x1]
        %v498 = vld [vmem:[%s421 + $0x6] sm:$0x1]
        %v499 = vld [vmem:[%s421 + $0x7] sm:$0x1]
        %v500 = vld [vmem:[%s412] sm:$0xf]
        %v501 = vld [vmem:[%s412 + $0x4] sm:$0xf]
        %v502 = vld [vmem:[%s412 + $0x8] sm:$0xf]
        %v503 = vld [vmem:[%s412 + $0xc] sm:$0xf]
        %v504 = vld [vmem:[%s412 + $0x10] sm:$0xf]
        %v505 = vld [vmem:[%s412 + $0x14] sm:$0xf]
        %v506 = vld [vmem:[%s412 + $0x18] sm:$0xf]
        %v507 = vld [vmem:[%s412 + $0x1c] sm:$0xf]
        %v508 = vld [vmem:[%s412 + $0x20] sm:$0xf]
        %v509 = vld [vmem:[%s412 + $0x24] sm:$0xf]
        %v510 = vld [vmem:[%s412 + $0x28] sm:$0xf]
        %v511 = vld [vmem:[%s412 + $0x2c] sm:$0xf]
        %v512 = vld [vmem:[%s412 + $0x30] sm:$0xf]
        %v513 = vld [vmem:[%s412 + $0x34] sm:$0xf]
        %v514 = vld [vmem:[%s412 + $0x38] sm:$0xf]
        %v515 = vld [vmem:[%s412 + $0x3c] sm:$0xf]
        %v516 = vunpack.c.l.bf16 %v500
        %v517 = vunpack.c.l.bf16 %v501
        %v518 = vunpack.c.l.bf16 %v502
        %v519 = vunpack.c.l.bf16 %v503
        %v520 = vunpack.c.l.bf16 %v504
        %v521 = vunpack.c.l.bf16 %v505
        %v522 = vunpack.c.l.bf16 %v506
        %v523 = vunpack.c.l.bf16 %v507
        %v524 = vunpack.c.l.bf16 %v508
        %v525 = vunpack.c.l.bf16 %v509
        %v526 = vunpack.c.l.bf16 %v510
        %v527 = vunpack.c.l.bf16 %v511
        %v528 = vunpack.c.l.bf16 %v512
        %v529 = vunpack.c.l.bf16 %v513
        %v530 = vunpack.c.l.bf16 %v514
        %v531 = vunpack.c.l.bf16 %v515
        %v532 = vld [vmem:[#allocation8] sm:$0x1]
        %v533 = vld [vmem:[#allocation8 + $0x1] sm:$0x1]
        %534 = vadd.xlane.f32.xlu0 %v516
        %v535 = vpop.xlane.xlu0 %534
        %536 = vadd.xlane.f32.xlu0 %v517
        %v537 = vpop.xlane.xlu0 %536
        %538 = vadd.xlane.f32.xlu0 %v518
        %v539 = vpop.xlane.xlu0 %538
        %540 = vadd.xlane.f32.xlu0 %v519
        %v541 = vpop.xlane.xlu0 %540
        %542 = vadd.xlane.f32.xlu0 %v520
        %v543 = vpop.xlane.xlu0 %542
        %544 = vadd.xlane.f32.xlu0 %v521
        %v545 = vpop.xlane.xlu0 %544
        %546 = vadd.xlane.f32.xlu0 %v522
        %v547 = vpop.xlane.xlu0 %546
        %548 = vadd.xlane.f32.xlu0 %v523
        %v549 = vpop.xlane.xlu0 %548
        %550 = vadd.xlane.f32.xlu0 %v524
        %v551 = vpop.xlane.xlu0 %550
        %552 = vadd.xlane.f32.xlu0 %v525
        %v553 = vpop.xlane.xlu0 %552
        %554 = vadd.xlane.f32.xlu0 %v526
        %v555 = vpop.xlane.xlu0 %554
        %556 = vadd.xlane.f32.xlu0 %v527
        %v557 = vpop.xlane.xlu0 %556
        %558 = vadd.xlane.f32.xlu0 %v528
        %v559 = vpop.xlane.xlu0 %558
        %560 = vadd.xlane.f32.xlu0 %v529
        %v561 = vpop.xlane.xlu0 %560
        %562 = vadd.xlane.f32.xlu0 %v530
        %v563 = vpop.xlane.xlu0 %562
        %564 = vadd.xlane.f32.xlu0 %v531
        %v565 = vpop.xlane.xlu0 %564
        %v566 = vrcp.pop 128.0
        %v567 = vmul.f32 %v535, %v566
        %v568 = vmul.f32 %v537, %v566
        %v569 = vmul.f32 %v539, %v566
        %v570 = vmul.f32 %v541, %v566
        %v571 = vmul.f32 %v543, %v566
        %v572 = vmul.f32 %v545, %v566
        %v573 = vmul.f32 %v547, %v566
        %v574 = vmul.f32 %v549, %v566
        %v575 = vmul.f32 %v551, %v566
        %v576 = vmul.f32 %v553, %v566
        %v577 = vmul.f32 %v555, %v566
        %v578 = vmul.f32 %v557, %v566
        %v579 = vmul.f32 %v559, %v566
        %v580 = vmul.f32 %v561, %v566
        %v581 = vmul.f32 %v563, %v566
        %v582 = vmul.f32 %v565, %v566
        %v583 = vsub.f32 %v516, %v567
        %v584 = vsub.f32 %v517, %v568
        %v585 = vsub.f32 %v518, %v569
        %v586 = vsub.f32 %v519, %v570
        %v587 = vsub.f32 %v520, %v571
        %v588 = vsub.f32 %v521, %v572
        %v589 = vsub.f32 %v522, %v573
        %v590 = vsub.f32 %v523, %v574
        %v591 = vsub.f32 %v524, %v575
        %v592 = vsub.f32 %v525, %v576
        %v593 = vsub.f32 %v526, %v577
        %v594 = vsub.f32 %v527, %v578
        %v595 = vsub.f32 %v528, %v579
        %v596 = vsub.f32 %v529, %v580
        %v597 = vsub.f32 %v530, %v581
        %v598 = vsub.f32 %v531, %v582
        %v599 = vmul.f32 %v583, %v583
        %v600 = vmul.f32 %v584, %v584
        %v601 = vmul.f32 %v585, %v585
        %v602 = vmul.f32 %v586, %v586
        %v603 = vmul.f32 %v587, %v587
        %v604 = vmul.f32 %v588, %v588
        %v605 = vmul.f32 %v589, %v589
        %v606 = vmul.f32 %v590, %v590
        %v607 = vmul.f32 %v591, %v591
        %v608 = vmul.f32 %v592, %v592
        %v609 = vmul.f32 %v593, %v593
        %v610 = vmul.f32 %v594, %v594
        %v611 = vmul.f32 %v595, %v595
        %v612 = vmul.f32 %v596, %v596
        %v613 = vmul.f32 %v597, %v597
        %v614 = vmul.f32 %v598, %v598
        %615 = vadd.xlane.f32.xlu0 %v599
        %v616 = vpop.xlane.xlu0 %615
        %617 = vadd.xlane.f32.xlu0 %v600
        %v618 = vpop.xlane.xlu0 %617
        %619 = vadd.xlane.f32.xlu0 %v601
        %v620 = vpop.xlane.xlu0 %619
        %621 = vadd.xlane.f32.xlu0 %v602
        %v622 = vpop.xlane.xlu0 %621
        %623 = vadd.xlane.f32.xlu0 %v603
        %v624 = vpop.xlane.xlu0 %623
        %625 = vadd.xlane.f32.xlu0 %v604
        %v626 = vpop.xlane.xlu0 %625
        %627 = vadd.xlane.f32.xlu0 %v605
        %v628 = vpop.xlane.xlu0 %627
        %629 = vadd.xlane.f32.xlu0 %v606
        %v630 = vpop.xlane.xlu0 %629
        %631 = vadd.xlane.f32.xlu0 %v607
        %v632 = vpop.xlane.xlu0 %631
        %633 = vadd.xlane.f32.xlu0 %v608
        %v634 = vpop.xlane.xlu0 %633
        %635 = vadd.xlane.f32.xlu0 %v609
        %v636 = vpop.xlane.xlu0 %635
        %637 = vadd.xlane.f32.xlu0 %v610
        %v638 = vpop.xlane.xlu0 %637
        %639 = vadd.xlane.f32.xlu0 %v611
        %v640 = vpop.xlane.xlu0 %639
        %641 = vadd.xlane.f32.xlu0 %v612
        %v642 = vpop.xlane.xlu0 %641
        %643 = vadd.xlane.f32.xlu0 %v613
        %v644 = vpop.xlane.xlu0 %643
        %645 = vadd.xlane.f32.xlu0 %v614
        %v646 = vpop.xlane.xlu0 %645
        %v647 = vmul.f32 %v616, %v566
        %v648 = vmul.f32 %v618, %v566
        %v649 = vmul.f32 %v620, %v566
        %v650 = vmul.f32 %v622, %v566
        %v651 = vmul.f32 %v624, %v566
        %v652 = vmul.f32 %v626, %v566
        %v653 = vmul.f32 %v628, %v566
        %v654 = vmul.f32 %v630, %v566
        %v655 = vmul.f32 %v632, %v566
        %v656 = vmul.f32 %v634, %v566
        %v657 = vmul.f32 %v636, %v566
        %v658 = vmul.f32 %v638, %v566
        %v659 = vmul.f32 %v640, %v566
        %v660 = vmul.f32 %v642, %v566
        %v661 = vmul.f32 %v644, %v566
        %v662 = vmul.f32 %v646, %v566
        %v663 = vadd.f32 %v647, 1e-12
        %v664 = vadd.f32 %v648, 1e-12
        %v665 = vadd.f32 %v649, 1e-12
        %v666 = vadd.f32 %v650, 1e-12
        %v667 = vadd.f32 %v651, 1e-12
        %v668 = vadd.f32 %v652, 1e-12
        %v669 = vadd.f32 %v653, 1e-12
        %v670 = vadd.f32 %v654, 1e-12
        %v671 = vadd.f32 %v655, 1e-12
        %v672 = vadd.f32 %v656, 1e-12
        %v673 = vadd.f32 %v657, 1e-12
        %v674 = vadd.f32 %v658, 1e-12
        %v675 = vadd.f32 %v659, 1e-12
        %v676 = vadd.f32 %v660, 1e-12
        %v677 = vadd.f32 %v661, 1e-12
        %v678 = vadd.f32 %v662, 1e-12
        %v679 = vrsqrt.pop %v663
        %v680 = vrsqrt.pop %v664
        %v681 = vrsqrt.pop %v665
        %v682 = vrsqrt.pop %v666
        %v683 = vrsqrt.pop %v667
        %v684 = vrsqrt.pop %v668
        %v685 = vrsqrt.pop %v669
        %v686 = vrsqrt.pop %v670
        %v687 = vrsqrt.pop %v671
        %v688 = vrsqrt.pop %v672
        %v689 = vrsqrt.pop %v673
        %v690 = vrsqrt.pop %v674
        %v691 = vrsqrt.pop %v675
        %v692 = vrsqrt.pop %v676
        %v693 = vrsqrt.pop %v677
        %v694 = vrsqrt.pop %v678
        %v695 = vmul.f32 %v583, %v679
        %v696 = vmul.f32 %v584, %v680
        %v697 = vmul.f32 %v585, %v681
        %v698 = vmul.f32 %v586, %v682
        %v699 = vmul.f32 %v587, %v683
        %v700 = vmul.f32 %v588, %v684
        %v701 = vmul.f32 %v589, %v685
        %v702 = vmul.f32 %v590, %v686
        %v703 = vmul.f32 %v591, %v687
        %v704 = vmul.f32 %v592, %v688
        %v705 = vmul.f32 %v593, %v689
        %v706 = vmul.f32 %v594, %v690
        %v707 = vmul.f32 %v595, %v691
        %v708 = vmul.f32 %v596, %v692
        %v709 = vmul.f32 %v597, %v693
        %v710 = vmul.f32 %v598, %v694
        %v711 = vlaneseq
        %v712 = vshrl.u32 %v711, 7
        %v713 = vsub.s32 0, %v712
        %v714 = vrot.slane %v532, %v713
        %v715 = vmul.f32 %v695, %v714
        %v716 = vmul.f32 %v696, %v714
        %v717 = vmul.f32 %v697, %v714
        %v718 = vmul.f32 %v698, %v714
        %v719 = vmul.f32 %v699, %v714
        %v720 = vmul.f32 %v700, %v714
        %v721 = vmul.f32 %v701, %v714
        %v722 = vmul.f32 %v702, %v714
        %v723 = vmul.f32 %v703, %v714
        %v724 = vmul.f32 %v704, %v714
        %v725 = vmul.f32 %v705, %v714
        %v726 = vmul.f32 %v706, %v714
        %v727 = vmul.f32 %v707, %v714
        %v728 = vmul.f32 %v708, %v714
        %v729 = vmul.f32 %v709, %v714
        %v730 = vmul.f32 %v710, %v714
        %v731 = vlaneseq
        %v732 = vshrl.u32 %v731, 7
        %v733 = vsub.s32 0, %v732
        %v734 = vrot.slane %v533, %v733
        %v735 = vadd.f32 %v715, %v734
        %v736 = vadd.f32 %v716, %v734
        %v737 = vadd.f32 %v717, %v734
        %v738 = vadd.f32 %v718, %v734
        %v739 = vadd.f32 %v719, %v734
        %v740 = vadd.f32 %v720, %v734
        %v741 = vadd.f32 %v721, %v734
        %v742 = vadd.f32 %v722, %v734
        %v743 = vadd.f32 %v723, %v734
        %v744 = vadd.f32 %v724, %v734
        %v745 = vadd.f32 %v725, %v734
        %v746 = vadd.f32 %v726, %v734
        %v747 = vadd.f32 %v727, %v734
        %v748 = vadd.f32 %v728, %v734
        %v749 = vadd.f32 %v729, %v734
        %v750 = vadd.f32 %v730, %v734
        %v751 = vpack.c.bf16 %v736, %v735
        %v752 = vpack.c.bf16 %v738, %v737
        %v753 = vpack.c.bf16 %v740, %v739
        %v754 = vpack.c.bf16 %v742, %v741
        %v755 = vpack.c.bf16 %v744, %v743
        %v756 = vpack.c.bf16 %v746, %v745
        %v757 = vpack.c.bf16 %v748, %v747
        %v758 = vpack.c.bf16 %v750, %v749
        %v759 = vld [vmem:[#allocation7] sm:$0xff]
        %v760 = vld [vmem:[#allocation7 + $0x8] sm:$0xf]
        %v761 = vld [vmem:[#allocation7 + $0x10] sm:$0xff]
        %v762 = vld [vmem:[#allocation7 + $0x18] sm:$0xf]
        %v763 = vld [vmem:[#allocation7 + $0x20] sm:$0xff]
        %v764 = vld [vmem:[#allocation7 + $0x28] sm:$0xf]
        %v765 = vld [vmem:[#allocation7 + $0x30] sm:$0xff]
        %v766 = vld [vmem:[#allocation7 + $0x38] sm:$0xf]
        %v767 = vld [vmem:[#allocation7 + $0x40] sm:$0xff]
        %v768 = vld [vmem:[#allocation7 + $0x48] sm:$0xf]
        %v769 = vld [vmem:[#allocation7 + $0x50] sm:$0xff]
        %v770 = vld [vmem:[#allocation7 + $0x58] sm:$0xf]
        %v771 = vld [vmem:[#allocation7 + $0x60] sm:$0xff]
        %v772 = vld [vmem:[#allocation7 + $0x68] sm:$0xf]
        %v773 = vld [vmem:[#allocation7 + $0x70] sm:$0xff]
        %v774 = vld [vmem:[#allocation7 + $0x78] sm:$0xf]
        %v775 = vld [vmem:[#allocation7 + $0x80] sm:$0xff]
        %v776 = vld [vmem:[#allocation7 + $0x88] sm:$0xf]
        %v777 = vld [vmem:[#allocation7 + $0x90] sm:$0xff]
        %v778 = vld [vmem:[#allocation7 + $0x98] sm:$0xf]
        %v779 = vld [vmem:[#allocation7 + $0xa0] sm:$0xff]
        %v780 = vld [vmem:[#allocation7 + $0xa8] sm:$0xf]
        %v781 = vld [vmem:[#allocation7 + $0xb0] sm:$0xff]
        %v782 = vld [vmem:[#allocation7 + $0xb8] sm:$0xf]
        %v783 = vld [vmem:[#allocation7 + $0xc0] sm:$0xff]
        %v784 = vld [vmem:[#allocation7 + $0xc8] sm:$0xf]
        %v785 = vld [vmem:[#allocation7 + $0xd0] sm:$0xff]
        %v786 = vld [vmem:[#allocation7 + $0xd8] sm:$0xf]
        %v787 = vld [vmem:[#allocation7 + $0xe0] sm:$0xff]
        %v788 = vld [vmem:[#allocation7 + $0xe8] sm:$0xf]
        %v789 = vld [vmem:[#allocation7 + $0xf0] sm:$0xff]
        %v790 = vld [vmem:[#allocation7 + $0xf8] sm:$0xf]
        %v823 = vunpack.c.l.b16 %v759
        %v824 = vunpack.c.h.b16 %v759
        %v825 = vunpack.c.l.b16 %v760
        %v826 = vunpack.c.l.b16 %v761
        %v827 = vunpack.c.h.b16 %v761
        %v828 = vunpack.c.l.b16 %v762
        %v829 = vunpack.c.l.b16 %v763
        %v830 = vunpack.c.h.b16 %v763
        %v831 = vunpack.c.l.b16 %v764
        %v832 = vunpack.c.l.b16 %v765
        %v833 = vunpack.c.h.b16 %v765
        %v834 = vunpack.c.l.b16 %v766
        %v835 = vunpack.c.l.b16 %v767
        %v836 = vunpack.c.h.b16 %v767
        %v837 = vunpack.c.l.b16 %v768
        %v838 = vunpack.c.l.b16 %v769
        %v839 = vunpack.c.h.b16 %v769
        %v840 = vunpack.c.l.b16 %v770
        %v841 = vunpack.c.l.b16 %v771
        %v842 = vunpack.c.h.b16 %v771
        %v843 = vunpack.c.l.b16 %v772
        %v844 = vunpack.c.l.b16 %v773
        %v845 = vunpack.c.h.b16 %v773
        %v846 = vunpack.c.l.b16 %v774
        %v847 = vunpack.c.l.b16 %v775
        %v848 = vunpack.c.h.b16 %v775
        %v849 = vunpack.c.l.b16 %v776
        %v850 = vunpack.c.l.b16 %v777
        %v851 = vunpack.c.h.b16 %v777
        %v852 = vunpack.c.l.b16 %v778
        %v853 = vunpack.c.l.b16 %v779
        %v854 = vunpack.c.h.b16 %v779
        %v855 = vunpack.c.l.b16 %v780
        %v856 = vunpack.c.l.b16 %v781
        %v857 = vunpack.c.h.b16 %v781
        %v858 = vunpack.c.l.b16 %v782
        %v859 = vunpack.c.l.b16 %v783
        %v860 = vunpack.c.h.b16 %v783
        %v861 = vunpack.c.l.b16 %v784
        %v862 = vunpack.c.l.b16 %v785
        %v863 = vunpack.c.h.b16 %v785
        %v864 = vunpack.c.l.b16 %v786
        %v865 = vunpack.c.l.b16 %v787
        %v866 = vunpack.c.h.b16 %v787
        %v867 = vunpack.c.l.b16 %v788
        %v868 = vunpack.c.l.b16 %v789
        %v869 = vunpack.c.h.b16 %v789
        %v870 = vunpack.c.l.b16 %v790
        %v871 = vpack.c.b16 %v826, %v823
        %v872 = vpack.c.b16 %v827, %v824
        %v873 = vpack.c.b16 %v828, %v825
        %v874 = vpack.c.b16 %v832, %v829
        %v875 = vpack.c.b16 %v833, %v830
        %v876 = vpack.c.b16 %v834, %v831
        %v877 = vpack.c.b16 %v838, %v835
        %v878 = vpack.c.b16 %v839, %v836
        %v879 = vpack.c.b16 %v840, %v837
        %v880 = vpack.c.b16 %v844, %v841
        %v881 = vpack.c.b16 %v845, %v842
        %v882 = vpack.c.b16 %v846, %v843
        %v883 = vpack.c.b16 %v850, %v847
        %v884 = vpack.c.b16 %v851, %v848
        %v885 = vpack.c.b16 %v852, %v849
        %v886 = vpack.c.b16 %v856, %v853
        %v887 = vpack.c.b16 %v857, %v854
        %v888 = vpack.c.b16 %v858, %v855
        %v889 = vpack.c.b16 %v862, %v859
        %v890 = vpack.c.b16 %v863, %v860
        %v891 = vpack.c.b16 %v864, %v861
        %v892 = vpack.c.b16 %v868, %v865
        %v893 = vpack.c.b16 %v869, %v866
        %v894 = vpack.c.b16 %v870, %v867
        %919 = vmatprep.subr.bf16.mxu0 %v872
        %920 = vmatpush1.bf16.msra.mxu0 %v871
        %921 = vmatprep.subr.bf16.mxu0 %v875
        %922 = vmatpush1.bf16.msra.mxu0 %v874
        %923 = vmatprep.subr.bf16.mxu0 %v878
        %924 = vmatpush1.bf16.msra.mxu0 %v877
        %925 = vmatprep.subr.bf16.mxu0 %v881
        %926 = vmatpush1.bf16.msra.mxu0 %v880
        %927 = vmatprep.subr.bf16.mxu0 %v884
        %928 = vmatpush1.bf16.msra.mxu0 %v883
        %929 = vmatprep.subr.bf16.mxu0 %v887
        %930 = vmatpush1.bf16.msra.mxu0 %v886
        %931 = vmatprep.subr.bf16.mxu0 %v890
        %932 = vmatpush1.bf16.msra.mxu0 %v889
        %933 = vmatprep.subr.bf16.mxu0 %v893
        %934 = vmatpush1.bf16.msra.mxu0 %v892
        %935 = vmatprep.subr.bf16.mxu0 0
        %936 = vmatpush1.bf16.msra.mxu0 0
        %937 = vmatprep.subr.bf16.mxu0 0
        %938 = vmatpush1.bf16.msra.mxu0 0
        %939 = vmatprep.subr.bf16.mxu0 0
        %940 = vmatpush1.bf16.msra.mxu0 0
        %941 = vmatprep.subr.bf16.mxu0 0
        %942 = vmatpush1.bf16.msra.mxu0 0
        %943 = vmatprep.subr.bf16.mxu0 0
        %944 = vmatpush1.bf16.msra.mxu0 0
        %945 = vmatprep.subr.bf16.mxu0 0
        %946 = vmatpush1.bf16.msra.mxu0 0
        %947 = vmatprep.subr.bf16.mxu0 0
        %948 = vmatpush1.bf16.msra.mxu0 0
        %949 = vmatprep.subr.bf16.mxu0 0
        %950 = vmatpush1.bf16.msra.mxu0 0
        %951 = vmatprep.mubr.bf16.mxu0 0
        %952 = vmatmul.mubr.bf16.gmra.mrb[0].mxu0 %v751
        %v953 = vpop.f32.mrb[0].mxu0
        %v954 = vadd.f32 0.0, %v953
        %v955 = vpop.f32.mrb[0].mxu0
        %v956 = vadd.f32 0.0, %v955
        %v957 = vpop.f32.mrb[0].mxu0
        %v958 = vadd.f32 0.0, %v957
        %v959 = vpop.f32.mrb[0].mxu0
        %v960 = vadd.f32 0.0, %v959
        %961 = vmatprep.mubr.bf16.mxu0 0
        %962 = vmatmul.mubr.bf16.gmra.mrb[0].mxu0 %v752
        %v963 = vpop.f32.mrb[0].mxu0
        %v964 = vadd.f32 0.0, %v963
        %v965 = vpop.f32.mrb[0].mxu0
        %v966 = vadd.f32 0.0, %v965
        %v967 = vpop.f32.mrb[0].mxu0
        %v968 = vadd.f32 0.0, %v967
        %v969 = vpop.f32.mrb[0].mxu0
        %v970 = vadd.f32 0.0, %v969
        %971 = vmatprep.mubr.bf16.mxu0 0
        %972 = vmatmul.mubr.bf16.gmra.mrb[0].mxu0 %v753
        %v973 = vpop.f32.mrb[0].mxu0
        %v974 = vadd.f32 0.0, %v973
        %v975 = vpop.f32.mrb[0].mxu0
        %v976 = vadd.f32 0.0, %v975
        %v977 = vpop.f32.mrb[0].mxu0
        %v978 = vadd.f32 0.0, %v977
        %v979 = vpop.f32.mrb[0].mxu0
        %v980 = vadd.f32 0.0, %v979
        %981 = vmatprep.mubr.bf16.mxu0 0
        %982 = vmatmul.mubr.bf16.gmra.mrb[0].mxu0 %v754
        %v983 = vpop.f32.mrb[0].mxu0
        %v984 = vadd.f32 0.0, %v983
        %v985 = vpop.f32.mrb[0].mxu0
        %v986 = vadd.f32 0.0, %v985
        %v987 = vpop.f32.mrb[0].mxu0
        %v988 = vadd.f32 0.0, %v987
        %v989 = vpop.f32.mrb[0].mxu0
        %v990 = vadd.f32 0.0, %v989
        %991 = vmatprep.mubr.bf16.mxu0 0
        %992 = vmatmul.mubr.bf16.gmra.mrb[0].mxu0 %v755
        %v993 = vpop.f32.mrb[0].mxu0
        %v994 = vadd.f32 0.0, %v993
        %v995 = vpop.f32.mrb[0].mxu0
        %v996 = vadd.f32 0.0, %v995
        %v997 = vpop.f32.mrb[0].mxu0
        %v998 = vadd.f32 0.0, %v997
        %v999 = vpop.f32.mrb[0].mxu0
        %v1000 = vadd.f32 0.0, %v999
        %1001 = vmatprep.mubr.bf16.mxu0 0
        %1002 = vmatmul.mubr.bf16.gmra.mrb[0].mxu0 %v756
        %v1003 = vpop.f32.mrb[0].mxu0
        %v1004 = vadd.f32 0.0, %v1003
        %v1005 = vpop.f32.mrb[0].mxu0
        %v1006 = vadd.f32 0.0, %v1005
        %v1007 = vpop.f32.mrb[0].mxu0
        %v1008 = vadd.f32 0.0, %v1007
        %v1009 = vpop.f32.mrb[0].mxu0
        %v1010 = vadd.f32 0.0, %v1009
        %1011 = vmatprep.mubr.bf16.mxu0 0
        %1012 = vmatmul.mubr.bf16.gmra.mrb[0].mxu0 %v757
        %v1013 = vpop.f32.mrb[0].mxu0
        %v1014 = vadd.f32 0.0, %v1013
        %v1015 = vpop.f32.mrb[0].mxu0
        %v1016 = vadd.f32 0.0, %v1015
        %v1017 = vpop.f32.mrb[0].mxu0
        %v1018 = vadd.f32 0.0, %v1017
        %v1019 = vpop.f32.mrb[0].mxu0
        %v1020 = vadd.f32 0.0, %v1019
        %1021 = vmatprep.mubr.bf16.mxu0 0
        %1022 = vmatmul.mubr.bf16.gmra.mrb[0].mxu0 %v758
        %v1023 = vpop.f32.mrb[0].mxu0
        %v1024 = vadd.f32 0.0, %v1023
        %v1025 = vpop.f32.mrb[0].mxu0
        %v1026 = vadd.f32 0.0, %v1025
        %v1027 = vpop.f32.mrb[0].mxu0
        %v1028 = vadd.f32 0.0, %v1027
        %v1029 = vpop.f32.mrb[0].mxu0
        %v1030 = vadd.f32 0.0, %v1029
        %1031 = vdwg.mxu0
        %1032 = vmatprep.subr.bf16.mxu0 0
        %1033 = vmatpush1.bf16.msra.mxu0 %v873
        %1034 = vmatprep.subr.bf16.mxu0 0
        %1035 = vmatpush1.bf16.msra.mxu0 %v876
        %1036 = vmatprep.subr.bf16.mxu0 0
        %1037 = vmatpush1.bf16.msra.mxu0 %v879
        %1038 = vmatprep.subr.bf16.mxu0 0
        %1039 = vmatpush1.bf16.msra.mxu0 %v882
        %1040 = vmatprep.subr.bf16.mxu0 0
        %1041 = vmatpush1.bf16.msra.mxu0 %v885
        %1042 = vmatprep.subr.bf16.mxu0 0
        %1043 = vmatpush1.bf16.msra.mxu0 %v888
        %1044 = vmatprep.subr.bf16.mxu0 0
        %1045 = vmatpush1.bf16.msra.mxu0 %v891
        %1046 = vmatprep.subr.bf16.mxu0 0
        %1047 = vmatpush1.bf16.msra.mxu0 %v894
        %1048 = vmatprep.subr.bf16.mxu0 0
        %1049 = vmatpush1.bf16.msra.mxu0 0
        %1050 = vmatprep.subr.bf16.mxu0 0
        %1051 = vmatpush1.bf16.msra.mxu0 0
        %1052 = vmatprep.subr.bf16.mxu0 0
        %1053 = vmatpush1.bf16.msra.mxu0 0
        %1054 = vmatprep.subr.bf16.mxu0 0
        %1055 = vmatpush1.bf16.msra.mxu0 0
        %1056 = vmatprep.subr.bf16.mxu0 0
        %1057 = vmatpush1.bf16.msra.mxu0 0
        %1058 = vmatprep.subr.bf16.mxu0 0
        %1059 = vmatpush1.bf16.msra.mxu0 0
        %1060 = vmatprep.subr.bf16.mxu0 0
        %1061 = vmatpush1.bf16.msra.mxu0 0
        %1062 = vmatprep.subr.bf16.mxu0 0
        %1063 = vmatpush1.bf16.msra.mxu0 0
        %1064 = vmatprep.mubr.bf16.mxu0 0
        %1065 = vmatmul.mubr.bf16.gmra.mrb[0].mxu0 %v751
        %v1066 = vpop.f32.mrb[0].mxu0
        %v1067 = vadd.f32 0.0, %v1066
        %v1068 = vpop.f32.mrb[0].mxu0
        %v1069 = vpop.f32.mrb[0].mxu0
        %v1070 = vadd.f32 0.0, %v1069
        %v1071 = vpop.f32.mrb[0].mxu0
        %1072 = vmatprep.mubr.bf16.mxu0 0
        %1073 = vmatmul.mubr.bf16.gmra.mrb[0].mxu0 %v752
        %v1074 = vpop.f32.mrb[0].mxu0
        %v1075 = vadd.f32 0.0, %v1074
        %v1076 = vpop.f32.mrb[0].mxu0
        %v1077 = vpop.f32.mrb[0].mxu0
        %v1078 = vadd.f32 0.0, %v1077
        %v1079 = vpop.f32.mrb[0].mxu0
        %1080 = vmatprep.mubr.bf16.mxu0 0
        %1081 = vmatmul.mubr.bf16.gmra.mrb[0].mxu0 %v753
        %v1082 = vpop.f32.mrb[0].mxu0
        %v1083 = vadd.f32 0.0, %v1082
        %v1084 = vpop.f32.mrb[0].mxu0
        %v1085 = vpop.f32.mrb[0].mxu0
        %v1086 = vadd.f32 0.0, %v1085
        %v1087 = vpop.f32.mrb[0].mxu0
        %1088 = vmatprep.mubr.bf16.mxu0 0
        %1089 = vmatmul.mubr.bf16.gmra.mrb[0].mxu0 %v754
        %v1090 = vpop.f32.mrb[0].mxu0
        %v1091 = vadd.f32 0.0, %v1090
        %v1092 = vpop.f32.mrb[0].mxu0
        %v1093 = vpop.f32.mrb[0].mxu0
        %v1094 = vadd.f32 0.0, %v1093
        %v1095 = vpop.f32.mrb[0].mxu0
        %1096 = vmatprep.mubr.bf16.mxu0 0
        %1097 = vmatmul.mubr.bf16.gmra.mrb[0].mxu0 %v755
        %v1098 = vpop.f32.mrb[0].mxu0
        %v1099 = vadd.f32 0.0, %v1098
        %v1100 = vpop.f32.mrb[0].mxu0
        %v1101 = vpop.f32.mrb[0].mxu0
        %v1102 = vadd.f32 0.0, %v1101
        %v1103 = vpop.f32.mrb[0].mxu0
        %1104 = vmatprep.mubr.bf16.mxu0 0
        %1105 = vmatmul.mubr.bf16.gmra.mrb[0].mxu0 %v756
        %v1106 = vpop.f32.mrb[0].mxu0
        %v1107 = vadd.f32 0.0, %v1106
        %v1108 = vpop.f32.mrb[0].mxu0
        %v1109 = vpop.f32.mrb[0].mxu0
        %v1110 = vadd.f32 0.0, %v1109
        %v1111 = vpop.f32.mrb[0].mxu0
        %1112 = vmatprep.mubr.bf16.mxu0 0
        %1113 = vmatmul.mubr.bf16.gmra.mrb[0].mxu0 %v757
        %v1114 = vpop.f32.mrb[0].mxu0
        %v1115 = vadd.f32 0.0, %v1114
        %v1116 = vpop.f32.mrb[0].mxu0
        %v1117 = vpop.f32.mrb[0].mxu0
        %v1118 = vadd.f32 0.0, %v1117
        %v1119 = vpop.f32.mrb[0].mxu0
        %1120 = vmatprep.mubr.bf16.mxu0 0
        %1121 = vmatmul.mubr.bf16.gmra.mrb[0].mxu0 %v758
        %v1122 = vpop.f32.mrb[0].mxu0
        %v1123 = vadd.f32 0.0, %v1122
        %v1124 = vpop.f32.mrb[0].mxu0
        %v1125 = vpop.f32.mrb[0].mxu0
        %v1126 = vadd.f32 0.0, %v1125
        %v1127 = vpop.f32.mrb[0].mxu0
        %1128 = vdwg.mxu0
        %v1129 = vld [vmem:[#allocation8 + $0x2] sm:$0x1]
        %v1130 = vlaneseq
        %v1131 = vshrl.u32 %v1130, 7
        %v1132 = vsub.s32 0, %v1131
        %v1133 = vrot.slane %v1129, %v1132
        %v1134 = vadd.f32 %v954, %v1133
        %v1135 = vadd.f32 %v958, %v1133
        %v1136 = vadd.f32 %v964, %v1133
        %v1137 = vadd.f32 %v968, %v1133
        %v1138 = vadd.f32 %v974, %v1133
        %v1139 = vadd.f32 %v978, %v1133
        %v1140 = vadd.f32 %v984, %v1133
        %v1141 = vadd.f32 %v988, %v1133
        %v1142 = vadd.f32 %v994, %v1133
        %v1143 = vadd.f32 %v998, %v1133
        %v1144 = vadd.f32 %v1004, %v1133
        %v1145 = vadd.f32 %v1008, %v1133
        %v1146 = vadd.f32 %v1014, %v1133
        %v1147 = vadd.f32 %v1018, %v1133
        %v1148 = vadd.f32 %v1024, %v1133
        %v1149 = vadd.f32 %v1028, %v1133
        %v1150 = vpack.c.bf16 %v1135, %v1134
        %v1151 = vpack.c.bf16 %v1137, %v1136
        %v1152 = vpack.c.bf16 %v1139, %v1138
        %v1153 = vpack.c.bf16 %v1141, %v1140
        %v1154 = vpack.c.bf16 %v1143, %v1142
        %v1155 = vpack.c.bf16 %v1145, %v1144
        %v1156 = vpack.c.bf16 %v1147, %v1146
        %v1157 = vpack.c.bf16 %v1149, %v1148
        %v1158 = vld [vmem:[#allocation8 + $0x3] sm:$0x1]
        %v1159 = vlaneseq
        %v1160 = vshrl.u32 %v1159, 7
        %v1161 = vsub.s32 0, %v1160
        %v1162 = vrot.slane %v1158, %v1161
        %v1163 = vadd.f32 %v956, %v1162
        %v1164 = vadd.f32 %v960, %v1162
        %v1165 = vadd.f32 %v966, %v1162
        %v1166 = vadd.f32 %v970, %v1162
        %v1167 = vadd.f32 %v976, %v1162
        %v1168 = vadd.f32 %v980, %v1162
        %v1169 = vadd.f32 %v986, %v1162
        %v1170 = vadd.f32 %v990, %v1162
        %v1171 = vadd.f32 %v996, %v1162
        %v1172 = vadd.f32 %v1000, %v1162
        %v1173 = vadd.f32 %v1006, %v1162
        %v1174 = vadd.f32 %v1010, %v1162
        %v1175 = vadd.f32 %v1016, %v1162
        %v1176 = vadd.f32 %v1020, %v1162
        %v1177 = vadd.f32 %v1026, %v1162
        %v1178 = vadd.f32 %v1030, %v1162
        %v1179 = vpack.c.bf16 %v1164, %v1163
        %v1180 = vpack.c.bf16 %v1166, %v1165
        %v1181 = vpack.c.bf16 %v1168, %v1167
        %v1182 = vpack.c.bf16 %v1170, %v1169
        %v1183 = vpack.c.bf16 %v1172, %v1171
        %v1184 = vpack.c.bf16 %v1174, %v1173
        %v1185 = vpack.c.bf16 %v1176, %v1175
        %v1186 = vpack.c.bf16 %v1178, %v1177
        %v1187 = vld [vmem:[#allocation8 + $0x4] sm:$0x1]
        %v1188 = vlaneseq
        %v1189 = vshrl.u32 %v1188, 7
        %v1190 = vsub.s32 0, %v1189
        %v1191 = vrot.slane %v1187, %v1190
        %v1192 = vadd.f32 %v1067, %v1191
        %v1193 = vadd.f32 %v1070, %v1191
        %v1194 = vadd.f32 %v1075, %v1191
        %v1195 = vadd.f32 %v1078, %v1191
        %v1196 = vadd.f32 %v1083, %v1191
        %v1197 = vadd.f32 %v1086, %v1191
        %v1198 = vadd.f32 %v1091, %v1191
        %v1199 = vadd.f32 %v1094, %v1191
        %v1200 = vadd.f32 %v1099, %v1191
        %v1201 = vadd.f32 %v1102, %v1191
        %v1202 = vadd.f32 %v1107, %v1191
        %v1203 = vadd.f32 %v1110, %v1191
        %v1204 = vadd.f32 %v1115, %v1191
        %v1205 = vadd.f32 %v1118, %v1191
        %v1206 = vadd.f32 %v1123, %v1191
        %v1207 = vadd.f32 %v1126, %v1191
        %v1208 = vpack.c.bf16 %v1193, %v1192
        %v1209 = vpack.c.bf16 %v1195, %v1194
        %v1210 = vpack.c.bf16 %v1197, %v1196
        %v1211 = vpack.c.bf16 %v1199, %v1198
        %v1212 = vpack.c.bf16 %v1201, %v1200
        %v1213 = vpack.c.bf16 %v1203, %v1202
        %v1214 = vpack.c.bf16 %v1205, %v1204
        %v1215 = vpack.c.bf16 %v1207, %v1206
        %1216 = vmatprep.subr.bf16.mxu0 0
        %1217 = vmatpush1.bf16.xpose.msra.mxu0 %v1179
        %1218 = vmatprep.subr.bf16.mxu0 0
        %1219 = vmatpush1.bf16.xpose.msra.mxu0 0
        %1220 = vmatprep.subr.bf16.mxu0 0
        %1221 = vmatpush1.bf16.xpose.msra.mxu0 0
        %1222 = vmatprep.subr.bf16.mxu0 0
        %1223 = vmatpush1.bf16.xpose.msra.mxu0 0
        %1224 = vmatprep.subr.bf16.mxu0 0
        %1225 = vmatpush1.bf16.xpose.msra.mxu0 0
        %1226 = vmatprep.subr.bf16.mxu0 0
        %1227 = vmatpush1.bf16.xpose.msra.mxu0 0
        %1228 = vmatprep.subr.bf16.mxu0 0
        %1229 = vmatpush1.bf16.xpose.msra.mxu0 0
        %1230 = vmatprep.subr.bf16.mxu0 0
        %1231 = vmatpush1.bf16.xpose.msra.mxu0 0
        %1232 = vmatprep.subr.bf16.mxu0 0
        %1233 = vmatpush1.bf16.xpose.msra.mxu0 0
        %1234 = vmatprep.subr.bf16.mxu0 0
        %1235 = vmatpush1.bf16.xpose.msra.mxu0 0
        %1236 = vmatprep.subr.bf16.mxu0 0
        %1237 = vmatpush1.bf16.xpose.msra.mxu0 0
        %1238 = vmatprep.subr.bf16.mxu0 0
        %1239 = vmatpush1.bf16.xpose.msra.mxu0 0
        %1240 = vmatprep.subr.bf16.mxu0 0
        %1241 = vmatpush1.bf16.xpose.msra.mxu0 0
        %1242 = vmatprep.subr.bf16.mxu0 0
        %1243 = vmatpush1.bf16.xpose.msra.mxu0 0
        %1244 = vmatprep.subr.bf16.mxu0 0
        %1245 = vmatpush1.bf16.xpose.msra.mxu0 0
        %1246 = vmatprep.subr.bf16.mxu0 0
        %1247 = vmatpush1.bf16.xpose.msra.mxu0 0
        %1248 = vmatprep.mubr.bf16.mxu0 0
        %1249 = vmatmul.mubr.bf16.gmra.mrb[0].mxu0 %v1150
        %v1250 = vpop.f32.mrb[0].mxu0
        %v1251 = vadd.f32 0.0, %v1250
        %v1252 = vpop.f32.mrb[0].mxu0
        %v1253 = vpop.f32.mrb[0].mxu0
        %v1254 = vadd.f32 0.0, %v1253
        %v1255 = vpop.f32.mrb[0].mxu0
        %1256 = vdwg.mxu0
        %1257 = vmatprep.subr.bf16.mxu0 0
        %1258 = vmatpush1.bf16.xpose.msra.mxu0 %v1180
        %1259 = vmatprep.subr.bf16.mxu0 0
        %1260 = vmatpush1.bf16.xpose.msra.mxu0 0
        %1261 = vmatprep.subr.bf16.mxu0 0
        %1262 = vmatpush1.bf16.xpose.msra.mxu0 0
        %1263 = vmatprep.subr.bf16.mxu0 0
        %1264 = vmatpush1.bf16.xpose.msra.mxu0 0
        %1265 = vmatprep.subr.bf16.mxu0 0
        %1266 = vmatpush1.bf16.xpose.msra.mxu0 0
        %1267 = vmatprep.subr.bf16.mxu0 0
        %1268 = vmatpush1.bf16.xpose.msra.mxu0 0
        %1269 = vmatprep.subr.bf16.mxu0 0
        %1270 = vmatpush1.bf16.xpose.msra.mxu0 0
        %1271 = vmatprep.subr.bf16.mxu0 0
        %1272 = vmatpush1.bf16.xpose.msra.mxu0 0
        %1273 = vmatprep.subr.bf16.mxu0 0
        %1274 = vmatpush1.bf16.xpose.msra.mxu0 0
        %1275 = vmatprep.subr.bf16.mxu0 0
        %1276 = vmatpush1.bf16.xpose.msra.mxu0 0
        %1277 = vmatprep.subr.bf16.mxu0 0
        %1278 = vmatpush1.bf16.xpose.msra.mxu0 0
        %1279 = vmatprep.subr.bf16.mxu0 0
        %1280 = vmatpush1.bf16.xpose.msra.mxu0 0
        %1281 = vmatprep.subr.bf16.mxu0 0
        %1282 = vmatpush1.bf16.xpose.msra.mxu0 0
        %1283 = vmatprep.subr.bf16.mxu0 0
        %1284 = vmatpush1.bf16.xpose.msra.mxu0 0
        %1285 = vmatprep.subr.bf16.mxu0 0
        %1286 = vmatpush1.bf16.xpose.msra.mxu0 0
        %1287 = vmatprep.subr.bf16.mxu0 0
        %1288 = vmatpush1.bf16.xpose.msra.mxu0 0
        %1289 = vmatprep.mubr.bf16.mxu0 0
        %1290 = vmatmul.mubr.bf16.gmra.mrb[0].mxu0 %v1151
        %v1291 = vpop.f32.mrb[0].mxu0
        %v1292 = vadd.f32 0.0, %v1291
        %v1293 = vpop.f32.mrb[0].mxu0
        %v1294 = vpop.f32.mrb[0].mxu0
        %v1295 = vadd.f32 0.0, %v1294
        %v1296 = vpop.f32.mrb[0].mxu0
        %1297 = vdwg.mxu0
        %1298 = vmatprep.subr.bf16.mxu0 0
        %1299 = vmatpush1.bf16.xpose.msra.mxu0 %v1181
        %1300 = vmatprep.subr.bf16.mxu0 0
        %1301 = vmatpush1.bf16.xpose.msra.mxu0 0
        %1302 = vmatprep.subr.bf16.mxu0 0
        %1303 = vmatpush1.bf16.xpose.msra.mxu0 0
        %1304 = vmatprep.subr.bf16.mxu0 0
        %1305 = vmatpush1.bf16.xpose.msra.mxu0 0
        %1306 = vmatprep.subr.bf16.mxu0 0
        %1307 = vmatpush1.bf16.xpose.msra.mxu0 0
        %1308 = vmatprep.subr.bf16.mxu0 0
        %1309 = vmatpush1.bf16.xpose.msra.mxu0 0
        %1310 = vmatprep.subr.bf16.mxu0 0
        %1311 = vmatpush1.bf16.xpose.msra.mxu0 0
        %1312 = vmatprep.subr.bf16.mxu0 0
        %1313 = vmatpush1.bf16.xpose.msra.mxu0 0
        %1314 = vmatprep.subr.bf16.mxu0 0
        %1315 = vmatpush1.bf16.xpose.msra.mxu0 0
        %1316 = vmatprep.subr.bf16.mxu0 0
        %1317 = vmatpush1.bf16.xpose.msra.mxu0 0
        %1318 = vmatprep.subr.bf16.mxu0 0
        %1319 = vmatpush1.bf16.xpose.msra.mxu0 0
        %1320 = vmatprep.subr.bf16.mxu0 0
        %1321 = vmatpush1.bf16.xpose.msra.mxu0 0
        %1322 = vmatprep.subr.bf16.mxu0 0
        %1323 = vmatpush1.bf16.xpose.msra.mxu0 0
        %1324 = vmatprep.subr.bf16.mxu0 0
        %1325 = vmatpush1.bf16.xpose.msra.mxu0 0
        %1326 = vmatprep.subr.bf16.mxu0 0
        %1327 = vmatpush1.bf16.xpose.msra.mxu0 0
        %1328 = vmatprep.subr.bf16.mxu0 0
        %1329 = vmatpush1.bf16.xpose.msra.mxu0 0
        %1330 = vmatprep.mubr.bf16.mxu0 0
        %1331 = vmatmul.mubr.bf16.gmra.mrb[0].mxu0 %v1152
        %v1332 = vpop.f32.mrb[0].mxu0
        %v1333 = vadd.f32 0.0, %v1332
        %v1334 = vpop.f32.mrb[0].mxu0
        %v1335 = vpop.f32.mrb[0].mxu0
        %v1336 = vadd.f32 0.0, %v1335
        %v1337 = vpop.f32.mrb[0].mxu0
        %1338 = vdwg.mxu0
        %1339 = vmatprep.subr.bf16.mxu0 0
        %1340 = vmatpush1.bf16.xpose.msra.mxu0 %v1182
        %1341 = vmatprep.subr.bf16.mxu0 0
        %1342 = vmatpush1.bf16.xpose.msra.mxu0 0
        %1343 = vmatprep.subr.bf16.mxu0 0
        %1344 = vmatpush1.bf16.xpose.msra.mxu0 0
        %1345 = vmatprep.subr.bf16.mxu0 0
        %1346 = vmatpush1.bf16.xpose.msra.mxu0 0
        %1347 = vmatprep.subr.bf16.mxu0 0
        %1348 = vmatpush1.bf16.xpose.msra.mxu0 0
        %1349 = vmatprep.subr.bf16.mxu0 0
        %1350 = vmatpush1.bf16.xpose.msra.mxu0 0
        %1351 = vmatprep.subr.bf16.mxu0 0
        %1352 = vmatpush1.bf16.xpose.msra.mxu0 0
        %1353 = vmatprep.subr.bf16.mxu0 0
        %1354 = vmatpush1.bf16.xpose.msra.mxu0 0
        %1355 = vmatprep.subr.bf16.mxu0 0
        %1356 = vmatpush1.bf16.xpose.msra.mxu0 0
        %1357 = vmatprep.subr.bf16.mxu0 0
        %1358 = vmatpush1.bf16.xpose.msra.mxu0 0
        %1359 = vmatprep.subr.bf16.mxu0 0
        %1360 = vmatpush1.bf16.xpose.msra.mxu0 0
        %1361 = vmatprep.subr.bf16.mxu0 0
        %1362 = vmatpush1.bf16.xpose.msra.mxu0 0
        %1363 = vmatprep.subr.bf16.mxu0 0
        %1364 = vmatpush1.bf16.xpose.msra.mxu0 0
        %1365 = vmatprep.subr.bf16.mxu0 0
        %1366 = vmatpush1.bf16.xpose.msra.mxu0 0
        %1367 = vmatprep.subr.bf16.mxu0 0
        %1368 = vmatpush1.bf16.xpose.msra.mxu0 0
        %1369 = vmatprep.subr.bf16.mxu0 0
        %1370 = vmatpush1.bf16.xpose.msra.mxu0 0
        %1371 = vmatprep.mubr.bf16.mxu0 0
        %1372 = vmatmul.mubr.bf16.gmra.mrb[0].mxu0 %v1153
        %v1373 = vpop.f32.mrb[0].mxu0
        %v1374 = vadd.f32 0.0, %v1373
        %v1375 = vpop.f32.mrb[0].mxu0
        %v1376 = vpop.f32.mrb[0].mxu0
        %v1377 = vadd.f32 0.0, %v1376
        %v1378 = vpop.f32.mrb[0].mxu0
        %1379 = vdwg.mxu0
        %1380 = vmatprep.subr.bf16.mxu0 0
        %1381 = vmatpush1.bf16.xpose.msra.mxu0 %v1183
        %1382 = vmatprep.subr.bf16.mxu0 0
        %1383 = vmatpush1.bf16.xpose.msra.mxu0 0
        %1384 = vmatprep.subr.bf16.mxu0 0
        %1385 = vmatpush1.bf16.xpose.msra.mxu0 0
        %1386 = vmatprep.subr.bf16.mxu0 0
        %1387 = vmatpush1.bf16.xpose.msra.mxu0 0
        %1388 = vmatprep.subr.bf16.mxu0 0
        %1389 = vmatpush1.bf16.xpose.msra.mxu0 0
        %1390 = vmatprep.subr.bf16.mxu0 0
        %1391 = vmatpush1.bf16.xpose.msra.mxu0 0
        %1392 = vmatprep.subr.bf16.mxu0 0
        %1393 = vmatpush1.bf16.xpose.msra.mxu0 0
        %1394 = vmatprep.subr.bf16.mxu0 0
        %1395 = vmatpush1.bf16.xpose.msra.mxu0 0
        %1396 = vmatprep.subr.bf16.mxu0 0
        %1397 = vmatpush1.bf16.xpose.msra.mxu0 0
        %1398 = vmatprep.subr.bf16.mxu0 0
        %1399 = vmatpush1.bf16.xpose.msra.mxu0 0
        %1400 = vmatprep.subr.bf16.mxu0 0
        %1401 = vmatpush1.bf16.xpose.msra.mxu0 0
        %1402 = vmatprep.subr.bf16.mxu0 0
        %1403 = vmatpush1.bf16.xpose.msra.mxu0 0
        %1404 = vmatprep.subr.bf16.mxu0 0
        %1405 = vmatpush1.bf16.xpose.msra.mxu0 0
        %1406 = vmatprep.subr.bf16.mxu0 0
        %1407 = vmatpush1.bf16.xpose.msra.mxu0 0
        %1408 = vmatprep.subr.bf16.mxu0 0
        %1409 = vmatpush1.bf16.xpose.msra.mxu0 0
        %1410 = vmatprep.subr.bf16.mxu0 0
        %1411 = vmatpush1.bf16.xpose.msra.mxu0 0
        %1412 = vmatprep.mubr.bf16.mxu0 0
        %1413 = vmatmul.mubr.bf16.gmra.mrb[0].mxu0 %v1154
        %v1414 = vpop.f32.mrb[0].mxu0
        %v1415 = vadd.f32 0.0, %v1414
        %v1416 = vpop.f32.mrb[0].mxu0
        %v1417 = vpop.f32.mrb[0].mxu0
        %v1418 = vadd.f32 0.0, %v1417
        %v1419 = vpop.f32.mrb[0].mxu0
        %1420 = vdwg.mxu0
        %1421 = vmatprep.subr.bf16.mxu0 0
        %1422 = vmatpush1.bf16.xpose.msra.mxu0 %v1184
        %1423 = vmatprep.subr.bf16.mxu0 0
        %1424 = vmatpush1.bf16.xpose.msra.mxu0 0
        %1425 = vmatprep.subr.bf16.mxu0 0
        %1426 = vmatpush1.bf16.xpose.msra.mxu0 0
        %1427 = vmatprep.subr.bf16.mxu0 0
        %1428 = vmatpush1.bf16.xpose.msra.mxu0 0
        %1429 = vmatprep.subr.bf16.mxu0 0
        %1430 = vmatpush1.bf16.xpose.msra.mxu0 0
        %1431 = vmatprep.subr.bf16.mxu0 0
        %1432 = vmatpush1.bf16.xpose.msra.mxu0 0
        %1433 = vmatprep.subr.bf16.mxu0 0
        %1434 = vmatpush1.bf16.xpose.msra.mxu0 0
        %1435 = vmatprep.subr.bf16.mxu0 0
        %1436 = vmatpush1.bf16.xpose.msra.mxu0 0
        %1437 = vmatprep.subr.bf16.mxu0 0
        %1438 = vmatpush1.bf16.xpose.msra.mxu0 0
        %1439 = vmatprep.subr.bf16.mxu0 0
        %1440 = vmatpush1.bf16.xpose.msra.mxu0 0
        %1441 = vmatprep.subr.bf16.mxu0 0
        %1442 = vmatpush1.bf16.xpose.msra.mxu0 0
        %1443 = vmatprep.subr.bf16.mxu0 0
        %1444 = vmatpush1.bf16.xpose.msra.mxu0 0
        %1445 = vmatprep.subr.bf16.mxu0 0
        %1446 = vmatpush1.bf16.xpose.msra.mxu0 0
        %1447 = vmatprep.subr.bf16.mxu0 0
        %1448 = vmatpush1.bf16.xpose.msra.mxu0 0
        %1449 = vmatprep.subr.bf16.mxu0 0
        %1450 = vmatpush1.bf16.xpose.msra.mxu0 0
        %1451 = vmatprep.subr.bf16.mxu0 0
        %1452 = vmatpush1.bf16.xpose.msra.mxu0 0
        %1453 = vmatprep.mubr.bf16.mxu0 0
        %1454 = vmatmul.mubr.bf16.gmra.mrb[0].mxu0 %v1155
        %v1455 = vpop.f32.mrb[0].mxu0
        %v1456 = vadd.f32 0.0, %v1455
        %v1457 = vpop.f32.mrb[0].mxu0
        %v1458 = vpop.f32.mrb[0].mxu0
        %v1459 = vadd.f32 0.0, %v1458
        %v1460 = vpop.f32.mrb[0].mxu0
        %1461 = vdwg.mxu0
        %1462 = vmatprep.subr.bf16.mxu0 0
        %1463 = vmatpush1.bf16.xpose.msra.mxu0 %v1185
        %1464 = vmatprep.subr.bf16.mxu0 0
        %1465 = vmatpush1.bf16.xpose.msra.mxu0 0
        %1466 = vmatprep.subr.bf16.mxu0 0
        %1467 = vmatpush1.bf16.xpose.msra.mxu0 0
        %1468 = vmatprep.subr.bf16.mxu0 0
        %1469 = vmatpush1.bf16.xpose.msra.mxu0 0
        %1470 = vmatprep.subr.bf16.mxu0 0
        %1471 = vmatpush1.bf16.xpose.msra.mxu0 0
        %1472 = vmatprep.subr.bf16.mxu0 0
        %1473 = vmatpush1.bf16.xpose.msra.mxu0 0
        %1474 = vmatprep.subr.bf16.mxu0 0
        %1475 = vmatpush1.bf16.xpose.msra.mxu0 0
        %1476 = vmatprep.subr.bf16.mxu0 0
        %1477 = vmatpush1.bf16.xpose.msra.mxu0 0
        %1478 = vmatprep.subr.bf16.mxu0 0
        %1479 = vmatpush1.bf16.xpose.msra.mxu0 0
        %1480 = vmatprep.subr.bf16.mxu0 0
        %1481 = vmatpush1.bf16.xpose.msra.mxu0 0
        %1482 = vmatprep.subr.bf16.mxu0 0
        %1483 = vmatpush1.bf16.xpose.msra.mxu0 0
        %1484 = vmatprep.subr.bf16.mxu0 0
        %1485 = vmatpush1.bf16.xpose.msra.mxu0 0
        %1486 = vmatprep.subr.bf16.mxu0 0
        %1487 = vmatpush1.bf16.xpose.msra.mxu0 0
        %1488 = vmatprep.subr.bf16.mxu0 0
        %1489 = vmatpush1.bf16.xpose.msra.mxu0 0
        %1490 = vmatprep.subr.bf16.mxu0 0
        %1491 = vmatpush1.bf16.xpose.msra.mxu0 0
        %1492 = vmatprep.subr.bf16.mxu0 0
        %1493 = vmatpush1.bf16.xpose.msra.mxu0 0
        %1494 = vmatprep.mubr.bf16.mxu0 0
        %1495 = vmatmul.mubr.bf16.gmra.mrb[0].mxu0 %v1156
        %v1496 = vpop.f32.mrb[0].mxu0
        %v1497 = vadd.f32 0.0, %v1496
        %v1498 = vpop.f32.mrb[0].mxu0
        %v1499 = vpop.f32.mrb[0].mxu0
        %v1500 = vadd.f32 0.0, %v1499
        %v1501 = vpop.f32.mrb[0].mxu0
        %1502 = vdwg.mxu0
        %1503 = vmatprep.subr.bf16.mxu0 0
        %1504 = vmatpush1.bf16.xpose.msra.mxu0 %v1186
        %1505 = vmatprep.subr.bf16.mxu0 0
        %1506 = vmatpush1.bf16.xpose.msra.mxu0 0
        %1507 = vmatprep.subr.bf16.mxu0 0
        %1508 = vmatpush1.bf16.xpose.msra.mxu0 0
        %1509 = vmatprep.subr.bf16.mxu0 0
        %1510 = vmatpush1.bf16.xpose.msra.mxu0 0
        %1511 = vmatprep.subr.bf16.mxu0 0
        %1512 = vmatpush1.bf16.xpose.msra.mxu0 0
        %1513 = vmatprep.subr.bf16.mxu0 0
        %1514 = vmatpush1.bf16.xpose.msra.mxu0 0
        %1515 = vmatprep.subr.bf16.mxu0 0
        %1516 = vmatpush1.bf16.xpose.msra.mxu0 0
        %1517 = vmatprep.subr.bf16.mxu0 0
        %1518 = vmatpush1.bf16.xpose.msra.mxu0 0
        %1519 = vmatprep.subr.bf16.mxu0 0
        %1520 = vmatpush1.bf16.xpose.msra.mxu0 0
        %1521 = vmatprep.subr.bf16.mxu0 0
        %1522 = vmatpush1.bf16.xpose.msra.mxu0 0
        %1523 = vmatprep.subr.bf16.mxu0 0
        %1524 = vmatpush1.bf16.xpose.msra.mxu0 0
        %1525 = vmatprep.subr.bf16.mxu0 0
        %1526 = vmatpush1.bf16.xpose.msra.mxu0 0
        %1527 = vmatprep.subr.bf16.mxu0 0
        %1528 = vmatpush1.bf16.xpose.msra.mxu0 0
        %1529 = vmatprep.subr.bf16.mxu0 0
        %1530 = vmatpush1.bf16.xpose.msra.mxu0 0
        %1531 = vmatprep.subr.bf16.mxu0 0
        %1532 = vmatpush1.bf16.xpose.msra.mxu0 0
        %1533 = vmatprep.subr.bf16.mxu0 0
        %1534 = vmatpush1.bf16.xpose.msra.mxu0 0
        %1535 = vmatprep.mubr.bf16.mxu0 0
        %1536 = vmatmul.mubr.bf16.gmra.mrb[0].mxu0 %v1157
        %v1537 = vpop.f32.mrb[0].mxu0
        %v1538 = vadd.f32 0.0, %v1537
        %v1539 = vpop.f32.mrb[0].mxu0
        %v1540 = vpop.f32.mrb[0].mxu0
        %v1541 = vadd.f32 0.0, %v1540
        %v1542 = vpop.f32.mrb[0].mxu0
        %1543 = vdwg.mxu0
        %v1544 = vmul.f32 %v1251, 0.088388346
        %v1545 = vmul.f32 %v1254, 0.088388346
        %v1546 = vmul.f32 %v1292, 0.088388346
        %v1547 = vmul.f32 %v1295, 0.088388346
        %v1548 = vmul.f32 %v1333, 0.088388346
        %v1549 = vmul.f32 %v1336, 0.088388346
        %v1550 = vmul.f32 %v1374, 0.088388346
        %v1551 = vmul.f32 %v1377, 0.088388346
        %v1552 = vmul.f32 %v1415, 0.088388346
        %v1553 = vmul.f32 %v1418, 0.088388346
        %v1554 = vmul.f32 %v1456, 0.088388346
        %v1555 = vmul.f32 %v1459, 0.088388346
        %v1556 = vmul.f32 %v1497, 0.088388346
        %v1557 = vmul.f32 %v1500, 0.088388346
        %v1558 = vmul.f32 %v1538, 0.088388346
        %v1559 = vmul.f32 %v1541, 0.088388346
        %v1560 = vsub.f32 1.0, %v492
        %v1561 = vsub.f32 1.0, %v493
        %v1562 = vsub.f32 1.0, %v494
        %v1563 = vsub.f32 1.0, %v495
        %v1564 = vsub.f32 1.0, %v496
        %v1565 = vsub.f32 1.0, %v497
        %v1566 = vsub.f32 1.0, %v498
        %v1567 = vsub.f32 1.0, %v499
        %v1568 = vmul.f32 %v1560, -1e+09
        %v1569 = vmul.f32 %v1561, -1e+09
        %v1570 = vmul.f32 %v1562, -1e+09
        %v1571 = vmul.f32 %v1563, -1e+09
        %v1572 = vmul.f32 %v1564, -1e+09
        %v1573 = vmul.f32 %v1565, -1e+09
        %v1574 = vmul.f32 %v1566, -1e+09
        %v1575 = vmul.f32 %v1567, -1e+09
        %v1584 = vlaneseq
        %v1585 = vshrl.u32 %v1584, 7
        %v1586 = vsub.s32 0, %v1585
        %v1587 = vrot.slane %v1568, %v1586
        %v1588 = vlaneseq
        %v1589 = vshrl.u32 %v1588, 7
        %v1590 = vsub.s32 0, %v1589
        %v1591 = vrot.slane %v1569, %v1590
        %v1592 = vlaneseq
        %v1593 = vshrl.u32 %v1592, 7
        %v1594 = vsub.s32 0, %v1593
        %v1595 = vrot.slane %v1570, %v1594
        %v1596 = vlaneseq
        %v1597 = vshrl.u32 %v1596, 7
        %v1598 = vsub.s32 0, %v1597
        %v1599 = vrot.slane %v1571, %v1598
        %v1600 = vlaneseq
        %v1601 = vshrl.u32 %v1600, 7
        %v1602 = vsub.s32 0, %v1601
        %v1603 = vrot.slane %v1572, %v1602
        %v1604 = vlaneseq
        %v1605 = vshrl.u32 %v1604, 7
        %v1606 = vsub.s32 0, %v1605
        %v1607 = vrot.slane %v1573, %v1606
        %v1608 = vlaneseq
        %v1609 = vshrl.u32 %v1608, 7
        %v1610 = vsub.s32 0, %v1609
        %v1611 = vrot.slane %v1574, %v1610
        %v1612 = vlaneseq
        %v1613 = vshrl.u32 %v1612, 7
        %v1614 = vsub.s32 0, %v1613
        %v1615 = vrot.slane %v1575, %v1614
        %v1624 = vadd.f32 %v1544, %v1587
        %v1625 = vadd.f32 %v1545, %v1587
        %v1626 = vadd.f32 %v1546, %v1591
        %v1627 = vadd.f32 %v1547, %v1591
        %v1628 = vadd.f32 %v1548, %v1595
        %v1629 = vadd.f32 %v1549, %v1595
        %v1630 = vadd.f32 %v1550, %v1599
        %v1631 = vadd.f32 %v1551, %v1599
        %v1632 = vadd.f32 %v1552, %v1603
        %v1633 = vadd.f32 %v1553, %v1603
        %v1634 = vadd.f32 %v1554, %v1607
        %v1635 = vadd.f32 %v1555, %v1607
        %v1636 = vadd.f32 %v1556, %v1611
        %v1637 = vadd.f32 %v1557, %v1611
        %v1638 = vadd.f32 %v1558, %v1615
        %v1639 = vadd.f32 %v1559, %v1615
        %vm1640 = vcmask 130048
        %v1641 = vsel %vm1640, %v1624, -inf
        %1642 = vmax.xlane.f32.xlu0 %v1641
        %v1643 = vpop.xlane.xlu0 %1642
        %v1644 = vsel %vm1640, %v1625, -inf
        %1645 = vmax.xlane.f32.xlu0 %v1644
        %v1646 = vpop.xlane.xlu0 %1645
        %v1647 = vsel %vm1640, %v1626, -inf
        %1648 = vmax.xlane.f32.xlu0 %v1647
        %v1649 = vpop.xlane.xlu0 %1648
        %v1650 = vsel %vm1640, %v1627, -inf
        %1651 = vmax.xlane.f32.xlu0 %v1650
        %v1652 = vpop.xlane.xlu0 %1651
        %v1653 = vsel %vm1640, %v1628, -inf
        %1654 = vmax.xlane.f32.xlu0 %v1653
        %v1655 = vpop.xlane.xlu0 %1654
        %v1656 = vsel %vm1640, %v1629, -inf
        %1657 = vmax.xlane.f32.xlu0 %v1656
        %v1658 = vpop.xlane.xlu0 %1657
        %v1659 = vsel %vm1640, %v1630, -inf
        %1660 = vmax.xlane.f32.xlu0 %v1659
        %v1661 = vpop.xlane.xlu0 %1660
        %v1662 = vsel %vm1640, %v1631, -inf
        %1663 = vmax.xlane.f32.xlu0 %v1662
        %v1664 = vpop.xlane.xlu0 %1663
        %v1665 = vsel %vm1640, %v1632, -inf
        %1666 = vmax.xlane.f32.xlu0 %v1665
        %v1667 = vpop.xlane.xlu0 %1666
        %v1668 = vsel %vm1640, %v1633, -inf
        %1669 = vmax.xlane.f32.xlu0 %v1668
        %v1670 = vpop.xlane.xlu0 %1669
        %v1671 = vsel %vm1640, %v1634, -inf
        %1672 = vmax.xlane.f32.xlu0 %v1671
        %v1673 = vpop.xlane.xlu0 %1672
        %v1674 = vsel %vm1640, %v1635, -inf
        %1675 = vmax.xlane.f32.xlu0 %v1674
        %v1676 = vpop.xlane.xlu0 %1675
        %v1677 = vsel %vm1640, %v1636, -inf
        %1678 = vmax.xlane.f32.xlu0 %v1677
        %v1679 = vpop.xlane.xlu0 %1678
        %v1680 = vsel %vm1640, %v1637, -inf
        %1681 = vmax.xlane.f32.xlu0 %v1680
        %v1682 = vpop.xlane.xlu0 %1681
        %v1683 = vsel %vm1640, %v1638, -inf
        %1684 = vmax.xlane.f32.xlu0 %v1683
        %v1685 = vpop.xlane.xlu0 %1684
        %v1686 = vsel %vm1640, %v1639, -inf
        %1687 = vmax.xlane.f32.xlu0 %v1686
        %v1688 = vpop.xlane.xlu0 %1687
        %v1689 = vsub.f32 %v1624, %v1643
        %v1690 = vsub.f32 %v1625, %v1646
        %v1691 = vsub.f32 %v1626, %v1649
        %v1692 = vsub.f32 %v1627, %v1652
        %v1693 = vsub.f32 %v1628, %v1655
        %v1694 = vsub.f32 %v1629, %v1658
        %v1695 = vsub.f32 %v1630, %v1661
        %v1696 = vsub.f32 %v1631, %v1664
        %v1697 = vsub.f32 %v1632, %v1667
        %v1698 = vsub.f32 %v1633, %v1670
        %v1699 = vsub.f32 %v1634, %v1673
        %v1700 = vsub.f32 %v1635, %v1676
        %v1701 = vsub.f32 %v1636, %v1679
        %v1702 = vsub.f32 %v1637, %v1682
        %v1703 = vsub.f32 %v1638, %v1685
        %v1704 = vsub.f32 %v1639, %v1688
        %v1705 = vmul.f32 %v1689, 1.442695
        %v1706 = vpow.pop %v1705
        %v1707 = vmul.f32 %v1690, 1.442695
        %v1708 = vpow.pop %v1707
        %v1709 = vmul.f32 %v1691, 1.442695
        %v1710 = vpow.pop %v1709
        %v1711 = vmul.f32 %v1692, 1.442695
        %v1712 = vpow.pop %v1711
        %v1713 = vmul.f32 %v1693, 1.442695
        %v1714 = vpow.pop %v1713
        %v1715 = vmul.f32 %v1694, 1.442695
        %v1716 = vpow.pop %v1715
        %v1717 = vmul.f32 %v1695, 1.442695
        %v1718 = vpow.pop %v1717
        %v1719 = vmul.f32 %v1696, 1.442695
        %v1720 = vpow.pop %v1719
        %v1721 = vmul.f32 %v1697, 1.442695
        %v1722 = vpow.pop %v1721
        %v1723 = vmul.f32 %v1698, 1.442695
        %v1724 = vpow.pop %v1723
        %v1725 = vmul.f32 %v1699, 1.442695
        %v1726 = vpow.pop %v1725
        %v1727 = vmul.f32 %v1700, 1.442695
        %v1728 = vpow.pop %v1727
        %v1729 = vmul.f32 %v1701, 1.442695
        %v1730 = vpow.pop %v1729
        %v1731 = vmul.f32 %v1702, 1.442695
        %v1732 = vpow.pop %v1731
        %v1733 = vmul.f32 %v1703, 1.442695
        %v1734 = vpow.pop %v1733
        %v1735 = vmul.f32 %v1704, 1.442695
        %v1736 = vpow.pop %v1735
        %v1737 = vsel %vm1640, %v1706, 0.0
        %1738 = vadd.xlane.f32.xlu0 %v1737
        %v1739 = vpop.xlane.xlu0 %1738
        %v1740 = vsel %vm1640, %v1708, 0.0
        %1741 = vadd.xlane.f32.xlu0 %v1740
        %v1742 = vpop.xlane.xlu0 %1741
        %v1743 = vsel %vm1640, %v1710, 0.0
        %1744 = vadd.xlane.f32.xlu0 %v1743
        %v1745 = vpop.xlane.xlu0 %1744
        %v1746 = vsel %vm1640, %v1712, 0.0
        %1747 = vadd.xlane.f32.xlu0 %v1746
        %v1748 = vpop.xlane.xlu0 %1747
        %v1749 = vsel %vm1640, %v1714, 0.0
        %1750 = vadd.xlane.f32.xlu0 %v1749
        %v1751 = vpop.xlane.xlu0 %1750
        %v1752 = vsel %vm1640, %v1716, 0.0
        %1753 = vadd.xlane.f32.xlu0 %v1752
        %v1754 = vpop.xlane.xlu0 %1753
        %v1755 = vsel %vm1640, %v1718, 0.0
        %1756 = vadd.xlane.f32.xlu0 %v1755
        %v1757 = vpop.xlane.xlu0 %1756
        %v1758 = vsel %vm1640, %v1720, 0.0
        %1759 = vadd.xlane.f32.xlu0 %v1758
        %v1760 = vpop.xlane.xlu0 %1759
        %v1761 = vsel %vm1640, %v1722, 0.0
        %1762 = vadd.xlane.f32.xlu0 %v1761
        %v1763 = vpop.xlane.xlu0 %1762
        %v1764 = vsel %vm1640, %v1724, 0.0
        %1765 = vadd.xlane.f32.xlu0 %v1764
        %v1766 = vpop.xlane.xlu0 %1765
        %v1767 = vsel %vm1640, %v1726, 0.0
        %1768 = vadd.xlane.f32.xlu0 %v1767
        %v1769 = vpop.xlane.xlu0 %1768
        %v1770 = vsel %vm1640, %v1728, 0.0
        %1771 = vadd.xlane.f32.xlu0 %v1770
        %v1772 = vpop.xlane.xlu0 %1771
        %v1773 = vsel %vm1640, %v1730, 0.0
        %1774 = vadd.xlane.f32.xlu0 %v1773
        %v1775 = vpop.xlane.xlu0 %1774
        %v1776 = vsel %vm1640, %v1732, 0.0
        %1777 = vadd.xlane.f32.xlu0 %v1776
        %v1778 = vpop.xlane.xlu0 %1777
        %v1779 = vsel %vm1640, %v1734, 0.0
        %1780 = vadd.xlane.f32.xlu0 %v1779
        %v1781 = vpop.xlane.xlu0 %1780
        %v1782 = vsel %vm1640, %v1736, 0.0
        %1783 = vadd.xlane.f32.xlu0 %v1782
        %v1784 = vpop.xlane.xlu0 %1783
        %v1785 = vrcp.pop %v1739
        %v1786 = vrcp.pop %v1742
        %v1787 = vrcp.pop %v1745
        %v1788 = vrcp.pop %v1748
        %v1789 = vrcp.pop %v1751
        %v1790 = vrcp.pop %v1754
        %v1791 = vrcp.pop %v1757
        %v1792 = vrcp.pop %v1760
        %v1793 = vrcp.pop %v1763
        %v1794 = vrcp.pop %v1766
        %v1795 = vrcp.pop %v1769
        %v1796 = vrcp.pop %v1772
        %v1797 = vrcp.pop %v1775
        %v1798 = vrcp.pop %v1778
        %v1799 = vrcp.pop %v1781
        %v1800 = vrcp.pop %v1784
        %v1801 = vmul.f32 %v1706, %v1785
        %v1802 = vmul.f32 %v1708, %v1786
        %v1803 = vmul.f32 %v1710, %v1787
        %v1804 = vmul.f32 %v1712, %v1788
        %v1805 = vmul.f32 %v1714, %v1789
        %v1806 = vmul.f32 %v1716, %v1790
        %v1807 = vmul.f32 %v1718, %v1791
        %v1808 = vmul.f32 %v1720, %v1792
        %v1809 = vmul.f32 %v1722, %v1793
        %v1810 = vmul.f32 %v1724, %v1794
        %v1811 = vmul.f32 %v1726, %v1795
        %v1812 = vmul.f32 %v1728, %v1796
        %v1813 = vmul.f32 %v1730, %v1797
        %v1814 = vmul.f32 %v1732, %v1798
        %v1815 = vmul.f32 %v1734, %v1799
        %v1816 = vmul.f32 %v1736, %v1800
        %v1817 = vpack.c.bf16 %v1802, %v1801
        %v1818 = vpack.c.bf16 %v1804, %v1803
        %v1819 = vpack.c.bf16 %v1806, %v1805
        %v1820 = vpack.c.bf16 %v1808, %v1807
        %v1821 = vpack.c.bf16 %v1810, %v1809
        %v1822 = vpack.c.bf16 %v1812, %v1811
        %v1823 = vpack.c.bf16 %v1814, %v1813
        %v1824 = vpack.c.bf16 %v1816, %v1815
        %v1826 = vsel %vm1640, %v1817, 0
        %1828 = vmatprep.subr.bf16.mxu0 0
        %1829 = vmatpush1.bf16.msra.mxu0 %v1208
        %1830 = vmatprep.subr.bf16.mxu0 0
        %1831 = vmatpush1.bf16.msra.mxu0 0
        %1832 = vmatprep.subr.bf16.mxu0 0
        %1833 = vmatpush1.bf16.msra.mxu0 0
        %1834 = vmatprep.subr.bf16.mxu0 0
        %1835 = vmatpush1.bf16.msra.mxu0 0
        %1836 = vmatprep.subr.bf16.mxu0 0
        %1837 = vmatpush1.bf16.msra.mxu0 0
        %1838 = vmatprep.subr.bf16.mxu0 0
        %1839 = vmatpush1.bf16.msra.mxu0 0
        %1840 = vmatprep.subr.bf16.mxu0 0
        %1841 = vmatpush1.bf16.msra.mxu0 0
        %1842 = vmatprep.subr.bf16.mxu0 0
        %1843 = vmatpush1.bf16.msra.mxu0 0
        %1844 = vmatprep.subr.bf16.mxu0 0
        %1845 = vmatpush1.bf16.msra.mxu0 0
        %1846 = vmatprep.subr.bf16.mxu0 0
        %1847 = vmatpush1.bf16.msra.mxu0 0
        %1848 = vmatprep.subr.bf16.mxu0 0
        %1849 = vmatpush1.bf16.msra.mxu0 0
        %1850 = vmatprep.subr.bf16.mxu0 0
        %1851 = vmatpush1.bf16.msra.mxu0 0
        %1852 = vmatprep.subr.bf16.mxu0 0
        %1853 = vmatpush1.bf16.msra.mxu0 0
        %1854 = vmatprep.subr.bf16.mxu0 0
        %1855 = vmatpush1.bf16.msra.mxu0 0
        %1856 = vmatprep.subr.bf16.mxu0 0
        %1857 = vmatpush1.bf16.msra.mxu0 0
        %1858 = vmatprep.subr.bf16.mxu0 0
        %1859 = vmatpush1.bf16.msra.mxu0 0
        %1860 = vmatprep.mubr.bf16.mxu0 0
        %1861 = vmatmul.mubr.bf16.gmra.mrb[0].mxu0 %v1826
        %v1862 = vpop.f32.mrb[0].mxu0
        %v1863 = vadd.f32 0.0, %v1862
        %v1864 = vpop.f32.mrb[0].mxu0
        %v1865 = vpop.f32.mrb[0].mxu0
        %v1866 = vadd.f32 0.0, %v1865
        %v1867 = vpop.f32.mrb[0].mxu0
        %1868 = vdwg.mxu0
        %v1870 = vsel %vm1640, %v1818, 0
        %1872 = vmatprep.subr.bf16.mxu0 0
        %1873 = vmatpush1.bf16.msra.mxu0 %v1209
        %1874 = vmatprep.subr.bf16.mxu0 0
        %1875 = vmatpush1.bf16.msra.mxu0 0
        %1876 = vmatprep.subr.bf16.mxu0 0
        %1877 = vmatpush1.bf16.msra.mxu0 0
        %1878 = vmatprep.subr.bf16.mxu0 0
        %1879 = vmatpush1.bf16.msra.mxu0 0
        %1880 = vmatprep.subr.bf16.mxu0 0
        %1881 = vmatpush1.bf16.msra.mxu0 0
        %1882 = vmatprep.subr.bf16.mxu0 0
        %1883 = vmatpush1.bf16.msra.mxu0 0
        %1884 = vmatprep.subr.bf16.mxu0 0
        %1885 = vmatpush1.bf16.msra.mxu0 0
        %1886 = vmatprep.subr.bf16.mxu0 0
        %1887 = vmatpush1.bf16.msra.mxu0 0
        %1888 = vmatprep.subr.bf16.mxu0 0
        %1889 = vmatpush1.bf16.msra.mxu0 0
        %1890 = vmatprep.subr.bf16.mxu0 0
        %1891 = vmatpush1.bf16.msra.mxu0 0
        %1892 = vmatprep.subr.bf16.mxu0 0
        %1893 = vmatpush1.bf16.msra.mxu0 0
        %1894 = vmatprep.subr.bf16.mxu0 0
        %1895 = vmatpush1.bf16.msra.mxu0 0
        %1896 = vmatprep.subr.bf16.mxu0 0
        %1897 = vmatpush1.bf16.msra.mxu0 0
        %1898 = vmatprep.subr.bf16.mxu0 0
        %1899 = vmatpush1.bf16.msra.mxu0 0
        %1900 = vmatprep.subr.bf16.mxu0 0
        %1901 = vmatpush1.bf16.msra.mxu0 0
        %1902 = vmatprep.subr.bf16.mxu0 0
        %1903 = vmatpush1.bf16.msra.mxu0 0
        %1904 = vmatprep.mubr.bf16.mxu0 0
        %1905 = vmatmul.mubr.bf16.gmra.mrb[0].mxu0 %v1870
        %v1906 = vpop.f32.mrb[0].mxu0
        %v1907 = vadd.f32 0.0, %v1906
        %v1908 = vpop.f32.mrb[0].mxu0
        %v1909 = vpop.f32.mrb[0].mxu0
        %v1910 = vadd.f32 0.0, %v1909
        %v1911 = vpop.f32.mrb[0].mxu0
        %1912 = vdwg.mxu0
        %v1914 = vsel %vm1640, %v1819, 0
        %1916 = vmatprep.subr.bf16.mxu0 0
        %1917 = vmatpush1.bf16.msra.mxu0 %v1210
        %1918 = vmatprep.subr.bf16.mxu0 0
        %1919 = vmatpush1.bf16.msra.mxu0 0
        %1920 = vmatprep.subr.bf16.mxu0 0
        %1921 = vmatpush1.bf16.msra.mxu0 0
        %1922 = vmatprep.subr.bf16.mxu0 0
        %1923 = vmatpush1.bf16.msra.mxu0 0
        %1924 = vmatprep.subr.bf16.mxu0 0
        %1925 = vmatpush1.bf16.msra.mxu0 0
        %1926 = vmatprep.subr.bf16.mxu0 0
        %1927 = vmatpush1.bf16.msra.mxu0 0
        %1928 = vmatprep.subr.bf16.mxu0 0
        %1929 = vmatpush1.bf16.msra.mxu0 0
        %1930 = vmatprep.subr.bf16.mxu0 0
        %1931 = vmatpush1.bf16.msra.mxu0 0
        %1932 = vmatprep.subr.bf16.mxu0 0
        %1933 = vmatpush1.bf16.msra.mxu0 0
        %1934 = vmatprep.subr.bf16.mxu0 0
        %1935 = vmatpush1.bf16.msra.mxu0 0
        %1936 = vmatprep.subr.bf16.mxu0 0
        %1937 = vmatpush1.bf16.msra.mxu0 0
        %1938 = vmatprep.subr.bf16.mxu0 0
        %1939 = vmatpush1.bf16.msra.mxu0 0
        %1940 = vmatprep.subr.bf16.mxu0 0
        %1941 = vmatpush1.bf16.msra.mxu0 0
        %1942 = vmatprep.subr.bf16.mxu0 0
        %1943 = vmatpush1.bf16.msra.mxu0 0
        %1944 = vmatprep.subr.bf16.mxu0 0
        %1945 = vmatpush1.bf16.msra.mxu0 0
        %1946 = vmatprep.subr.bf16.mxu0 0
        %1947 = vmatpush1.bf16.msra.mxu0 0
        %1948 = vmatprep.mubr.bf16.mxu0 0
        %1949 = vmatmul.mubr.bf16.gmra.mrb[0].mxu0 %v1914
        %v1950 = vpop.f32.mrb[0].mxu0
        %v1951 = vadd.f32 0.0, %v1950
        %v1952 = vpop.f32.mrb[0].mxu0
        %v1953 = vpop.f32.mrb[0].mxu0
        %v1954 = vadd.f32 0.0, %v1953
        %v1955 = vpop.f32.mrb[0].mxu0
        %1956 = vdwg.mxu0
        %v1958 = vsel %vm1640, %v1820, 0
        %1960 = vmatprep.subr.bf16.mxu0 0
        %1961 = vmatpush1.bf16.msra.mxu0 %v1211
        %1962 = vmatprep.subr.bf16.mxu0 0
        %1963 = vmatpush1.bf16.msra.mxu0 0
        %1964 = vmatprep.subr.bf16.mxu0 0
        %1965 = vmatpush1.bf16.msra.mxu0 0
        %1966 = vmatprep.subr.bf16.mxu0 0
        %1967 = vmatpush1.bf16.msra.mxu0 0
        %1968 = vmatprep.subr.bf16.mxu0 0
        %1969 = vmatpush1.bf16.msra.mxu0 0
        %1970 = vmatprep.subr.bf16.mxu0 0
        %1971 = vmatpush1.bf16.msra.mxu0 0
        %1972 = vmatprep.subr.bf16.mxu0 0
        %1973 = vmatpush1.bf16.msra.mxu0 0
        %1974 = vmatprep.subr.bf16.mxu0 0
        %1975 = vmatpush1.bf16.msra.mxu0 0
        %1976 = vmatprep.subr.bf16.mxu0 0
        %1977 = vmatpush1.bf16.msra.mxu0 0
        %1978 = vmatprep.subr.bf16.mxu0 0
        %1979 = vmatpush1.bf16.msra.mxu0 0
        %1980 = vmatprep.subr.bf16.mxu0 0
        %1981 = vmatpush1.bf16.msra.mxu0 0
        %1982 = vmatprep.subr.bf16.mxu0 0
        %1983 = vmatpush1.bf16.msra.mxu0 0
        %1984 = vmatprep.subr.bf16.mxu0 0
        %1985 = vmatpush1.bf16.msra.mxu0 0
        %1986 = vmatprep.subr.bf16.mxu0 0
        %1987 = vmatpush1.bf16.msra.mxu0 0
        %1988 = vmatprep.subr.bf16.mxu0 0
        %1989 = vmatpush1.bf16.msra.mxu0 0
        %1990 = vmatprep.subr.bf16.mxu0 0
        %1991 = vmatpush1.bf16.msra.mxu0 0
        %1992 = vmatprep.mubr.bf16.mxu0 0
        %1993 = vmatmul.mubr.bf16.gmra.mrb[0].mxu0 %v1958
        %v1994 = vpop.f32.mrb[0].mxu0
        %v1995 = vadd.f32 0.0, %v1994
        %v1996 = vpop.f32.mrb[0].mxu0
        %v1997 = vpop.f32.mrb[0].mxu0
        %v1998 = vadd.f32 0.0, %v1997
        %v1999 = vpop.f32.mrb[0].mxu0
        %2000 = vdwg.mxu0
        %v2002 = vsel %vm1640, %v1821, 0
        %2004 = vmatprep.subr.bf16.mxu0 0
        %2005 = vmatpush1.bf16.msra.mxu0 %v1212
        %2006 = vmatprep.subr.bf16.mxu0 0
        %2007 = vmatpush1.bf16.msra.mxu0 0
        %2008 = vmatprep.subr.bf16.mxu0 0
        %2009 = vmatpush1.bf16.msra.mxu0 0
        %2010 = vmatprep.subr.bf16.mxu0 0
        %2011 = vmatpush1.bf16.msra.mxu0 0
        %2012 = vmatprep.subr.bf16.mxu0 0
        %2013 = vmatpush1.bf16.msra.mxu0 0
        %2014 = vmatprep.subr.bf16.mxu0 0
        %2015 = vmatpush1.bf16.msra.mxu0 0
        %2016 = vmatprep.subr.bf16.mxu0 0
        %2017 = vmatpush1.bf16.msra.mxu0 0
        %2018 = vmatprep.subr.bf16.mxu0 0
        %2019 = vmatpush1.bf16.msra.mxu0 0
        %2020 = vmatprep.subr.bf16.mxu0 0
        %2021 = vmatpush1.bf16.msra.mxu0 0
        %2022 = vmatprep.subr.bf16.mxu0 0
        %2023 = vmatpush1.bf16.msra.mxu0 0
        %2024 = vmatprep.subr.bf16.mxu0 0
        %2025 = vmatpush1.bf16.msra.mxu0 0
        %2026 = vmatprep.subr.bf16.mxu0 0
        %2027 = vmatpush1.bf16.msra.mxu0 0
        %2028 = vmatprep.subr.bf16.mxu0 0
        %2029 = vmatpush1.bf16.msra.mxu0 0
        %2030 = vmatprep.subr.bf16.mxu0 0
        %2031 = vmatpush1.bf16.msra.mxu0 0
        %2032 = vmatprep.subr.bf16.mxu0 0
        %2033 = vmatpush1.bf16.msra.mxu0 0
        %2034 = vmatprep.subr.bf16.mxu0 0
        %2035 = vmatpush1.bf16.msra.mxu0 0
        %2036 = vmatprep.mubr.bf16.mxu0 0
        %2037 = vmatmul.mubr.bf16.gmra.mrb[0].mxu0 %v2002
        %v2038 = vpop.f32.mrb[0].mxu0
        %v2039 = vadd.f32 0.0, %v2038
        %v2040 = vpop.f32.mrb[0].mxu0
        %v2041 = vpop.f32.mrb[0].mxu0
        %v2042 = vadd.f32 0.0, %v2041
        %v2043 = vpop.f32.mrb[0].mxu0
        %2044 = vdwg.mxu0
        %v2046 = vsel %vm1640, %v1822, 0
        %2048 = vmatprep.subr.bf16.mxu0 0
        %2049 = vmatpush1.bf16.msra.mxu0 %v1213
        %2050 = vmatprep.subr.bf16.mxu0 0
        %2051 = vmatpush1.bf16.msra.mxu0 0
        %2052 = vmatprep.subr.bf16.mxu0 0
        %2053 = vmatpush1.bf16.msra.mxu0 0
        %2054 = vmatprep.subr.bf16.mxu0 0
        %2055 = vmatpush1.bf16.msra.mxu0 0
        %2056 = vmatprep.subr.bf16.mxu0 0
        %2057 = vmatpush1.bf16.msra.mxu0 0
        %2058 = vmatprep.subr.bf16.mxu0 0
        %2059 = vmatpush1.bf16.msra.mxu0 0
        %2060 = vmatprep.subr.bf16.mxu0 0
        %2061 = vmatpush1.bf16.msra.mxu0 0
        %2062 = vmatprep.subr.bf16.mxu0 0
        %2063 = vmatpush1.bf16.msra.mxu0 0
        %2064 = vmatprep.subr.bf16.mxu0 0
        %2065 = vmatpush1.bf16.msra.mxu0 0
        %2066 = vmatprep.subr.bf16.mxu0 0
        %2067 = vmatpush1.bf16.msra.mxu0 0
        %2068 = vmatprep.subr.bf16.mxu0 0
        %2069 = vmatpush1.bf16.msra.mxu0 0
        %2070 = vmatprep.subr.bf16.mxu0 0
        %2071 = vmatpush1.bf16.msra.mxu0 0
        %2072 = vmatprep.subr.bf16.mxu0 0
        %2073 = vmatpush1.bf16.msra.mxu0 0
        %2074 = vmatprep.subr.bf16.mxu0 0
        %2075 = vmatpush1.bf16.msra.mxu0 0
        %2076 = vmatprep.subr.bf16.mxu0 0
        %2077 = vmatpush1.bf16.msra.mxu0 0
        %2078 = vmatprep.subr.bf16.mxu0 0
        %2079 = vmatpush1.bf16.msra.mxu0 0
        %2080 = vmatprep.mubr.bf16.mxu0 0
        %2081 = vmatmul.mubr.bf16.gmra.mrb[0].mxu0 %v2046
        %v2082 = vpop.f32.mrb[0].mxu0
        %v2083 = vadd.f32 0.0, %v2082
        %v2084 = vpop.f32.mrb[0].mxu0
        %v2085 = vpop.f32.mrb[0].mxu0
        %v2086 = vadd.f32 0.0, %v2085
        %v2087 = vpop.f32.mrb[0].mxu0
        %2088 = vdwg.mxu0
        %v2090 = vsel %vm1640, %v1823, 0
        %2092 = vmatprep.subr.bf16.mxu0 0
        %2093 = vmatpush1.bf16.msra.mxu0 %v1214
        %2094 = vmatprep.subr.bf16.mxu0 0
        %2095 = vmatpush1.bf16.msra.mxu0 0
        %2096 = vmatprep.subr.bf16.mxu0 0
        %2097 = vmatpush1.bf16.msra.mxu0 0
        %2098 = vmatprep.subr.bf16.mxu0 0
        %2099 = vmatpush1.bf16.msra.mxu0 0
        %2100 = vmatprep.subr.bf16.mxu0 0
        %2101 = vmatpush1.bf16.msra.mxu0 0
        %2102 = vmatprep.subr.bf16.mxu0 0
        %2103 = vmatpush1.bf16.msra.mxu0 0
        %2104 = vmatprep.subr.bf16.mxu0 0
        %2105 = vmatpush1.bf16.msra.mxu0 0
        %2106 = vmatprep.subr.bf16.mxu0 0
        %2107 = vmatpush1.bf16.msra.mxu0 0
        %2108 = vmatprep.subr.bf16.mxu0 0
        %2109 = vmatpush1.bf16.msra.mxu0 0
        %2110 = vmatprep.subr.bf16.mxu0 0
        %2111 = vmatpush1.bf16.msra.mxu0 0
        %2112 = vmatprep.subr.bf16.mxu0 0
        %2113 = vmatpush1.bf16.msra.mxu0 0
        %2114 = vmatprep.subr.bf16.mxu0 0
        %2115 = vmatpush1.bf16.msra.mxu0 0
        %2116 = vmatprep.subr.bf16.mxu0 0
        %2117 = vmatpush1.bf16.msra.mxu0 0
        %2118 = vmatprep.subr.bf16.mxu0 0
        %2119 = vmatpush1.bf16.msra.mxu0 0
        %2120 = vmatprep.subr.bf16.mxu0 0
        %2121 = vmatpush1.bf16.msra.mxu0 0
        %2122 = vmatprep.subr.bf16.mxu0 0
        %2123 = vmatpush1.bf16.msra.mxu0 0
        %2124 = vmatprep.mubr.bf16.mxu0 0
        %2125 = vmatmul.mubr.bf16.gmra.mrb[0].mxu0 %v2090
        %v2126 = vpop.f32.mrb[0].mxu0
        %v2127 = vadd.f32 0.0, %v2126
        %v2128 = vpop.f32.mrb[0].mxu0
        %v2129 = vpop.f32.mrb[0].mxu0
        %v2130 = vadd.f32 0.0, %v2129
        %v2131 = vpop.f32.mrb[0].mxu0
        %2132 = vdwg.mxu0
        %v2134 = vsel %vm1640, %v1824, 0
        %2136 = vmatprep.subr.bf16.mxu0 0
        %2137 = vmatpush1.bf16.msra.mxu0 %v1215
        %2138 = vmatprep.subr.bf16.mxu0 0
        %2139 = vmatpush1.bf16.msra.mxu0 0
        %2140 = vmatprep.subr.bf16.mxu0 0
        %2141 = vmatpush1.bf16.msra.mxu0 0
        %2142 = vmatprep.subr.bf16.mxu0 0
        %2143 = vmatpush1.bf16.msra.mxu0 0
        %2144 = vmatprep.subr.bf16.mxu0 0
        %2145 = vmatpush1.bf16.msra.mxu0 0
        %2146 = vmatprep.subr.bf16.mxu0 0
        %2147 = vmatpush1.bf16.msra.mxu0 0
        %2148 = vmatprep.subr.bf16.mxu0 0
        %2149 = vmatpush1.bf16.msra.mxu0 0
        %2150 = vmatprep.subr.bf16.mxu0 0
        %2151 = vmatpush1.bf16.msra.mxu0 0
        %2152 = vmatprep.subr.bf16.mxu0 0
        %2153 = vmatpush1.bf16.msra.mxu0 0
        %2154 = vmatprep.subr.bf16.mxu0 0
        %2155 = vmatpush1.bf16.msra.mxu0 0
        %2156 = vmatprep.subr.bf16.mxu0 0
        %2157 = vmatpush1.bf16.msra.mxu0 0
        %2158 = vmatprep.subr.bf16.mxu0 0
        %2159 = vmatpush1.bf16.msra.mxu0 0
        %2160 = vmatprep.subr.bf16.mxu0 0
        %2161 = vmatpush1.bf16.msra.mxu0 0
        %2162 = vmatprep.subr.bf16.mxu0 0
        %2163 = vmatpush1.bf16.msra.mxu0 0
        %2164 = vmatprep.subr.bf16.mxu0 0
        %2165 = vmatpush1.bf16.msra.mxu0 0
        %2166 = vmatprep.subr.bf16.mxu0 0
        %2167 = vmatpush1.bf16.msra.mxu0 0
        %2168 = vmatprep.mubr.bf16.mxu0 0
        %2169 = vmatmul.mubr.bf16.gmra.mrb[0].mxu0 %v2134
        %v2170 = vpop.f32.mrb[0].mxu0
        %v2171 = vadd.f32 0.0, %v2170
        %v2172 = vpop.f32.mrb[0].mxu0
        %v2173 = vpop.f32.mrb[0].mxu0
        %v2174 = vadd.f32 0.0, %v2173
        %v2175 = vpop.f32.mrb[0].mxu0
        %2176 = vdwg.mxu0
        %v2177 = vpack.c.bf16 %v1866, %v1863
        %v2178 = vpack.c.bf16 %v1910, %v1907
        %v2179 = vpack.c.bf16 %v1954, %v1951
        %v2180 = vpack.c.bf16 %v1998, %v1995
        %v2181 = vpack.c.bf16 %v2042, %v2039
        %v2182 = vpack.c.bf16 %v2086, %v2083
        %v2183 = vpack.c.bf16 %v2130, %v2127
        %v2184 = vpack.c.bf16 %v2174, %v2171
        %v2185 = vld [vmem:[#allocation7 + $0xc] sm:$0xf]
        %v2186 = vld [vmem:[#allocation7 + $0x1c] sm:$0xf]
        %v2187 = vld [vmem:[#allocation7 + $0x2c] sm:$0xf]
        %v2188 = vld [vmem:[#allocation7 + $0x3c] sm:$0xf]
        %v2189 = vld [vmem:[#allocation7 + $0x4c] sm:$0xf]
        %v2190 = vld [vmem:[#allocation7 + $0x5c] sm:$0xf]
        %v2191 = vld [vmem:[#allocation7 + $0x6c] sm:$0xf]
        %v2192 = vld [vmem:[#allocation7 + $0x7c] sm:$0xf]
        %v2193 = vld [vmem:[#allocation7 + $0x8c] sm:$0xf]
        %v2194 = vld [vmem:[#allocation7 + $0x9c] sm:$0xf]
        %v2195 = vld [vmem:[#allocation7 + $0xac] sm:$0xf]
        %v2196 = vld [vmem:[#allocation7 + $0xbc] sm:$0xf]
        %v2197 = vld [vmem:[#allocation7 + $0xcc] sm:$0xf]
        %v2198 = vld [vmem:[#allocation7 + $0xdc] sm:$0xf]
        %v2199 = vld [vmem:[#allocation7 + $0xec] sm:$0xf]
        %v2200 = vld [vmem:[#allocation7 + $0xfc] sm:$0xf]
        %v2201 = vld [vmem:[#allocation8 + $0x5] sm:$0x1]
        %v2202 = vlaneseq
        %v2203 = vshrl.u32 %v2202, 7
        %v2204 = vsub.s32 0, %v2203
        %v2205 = vrot.slane %v2201, %v2204
        %v2222 = vunpack.c.l.b16 %v2185
        %v2223 = vunpack.c.l.b16 %v2186
        %v2224 = vunpack.c.l.b16 %v2187
        %v2225 = vunpack.c.l.b16 %v2188
        %v2226 = vunpack.c.l.b16 %v2189
        %v2227 = vunpack.c.l.b16 %v2190
        %v2228 = vunpack.c.l.b16 %v2191
        %v2229 = vunpack.c.l.b16 %v2192
        %v2230 = vunpack.c.l.b16 %v2193
        %v2231 = vunpack.c.l.b16 %v2194
        %v2232 = vunpack.c.l.b16 %v2195
        %v2233 = vunpack.c.l.b16 %v2196
        %v2234 = vunpack.c.l.b16 %v2197
        %v2235 = vunpack.c.l.b16 %v2198
        %v2236 = vunpack.c.l.b16 %v2199
        %v2237 = vunpack.c.l.b16 %v2200
        %v2238 = vpack.c.b16 %v2223, %v2222
        %v2239 = vpack.c.b16 %v2225, %v2224
        %v2240 = vpack.c.b16 %v2227, %v2226
        %v2241 = vpack.c.b16 %v2229, %v2228
        %v2242 = vpack.c.b16 %v2231, %v2230
        %v2243 = vpack.c.b16 %v2233, %v2232
        %v2244 = vpack.c.b16 %v2235, %v2234
        %v2245 = vpack.c.b16 %v2237, %v2236
        %2254 = vmatprep.subr.bf16.mxu0 0
        %2255 = vmatpush1.bf16.msra.mxu0 %v2238
        %2256 = vmatprep.subr.bf16.mxu0 0
        %2257 = vmatpush1.bf16.msra.mxu0 %v2239
        %2258 = vmatprep.subr.bf16.mxu0 0
        %2259 = vmatpush1.bf16.msra.mxu0 %v2240
        %2260 = vmatprep.subr.bf16.mxu0 0
        %2261 = vmatpush1.bf16.msra.mxu0 %v2241
        %2262 = vmatprep.subr.bf16.mxu0 0
        %2263 = vmatpush1.bf16.msra.mxu0 %v2242
        %2264 = vmatprep.subr.bf16.mxu0 0
        %2265 = vmatpush1.bf16.msra.mxu0 %v2243
        %2266 = vmatprep.subr.bf16.mxu0 0
        %2267 = vmatpush1.bf16.msra.mxu0 %v2244
        %2268 = vmatprep.subr.bf16.mxu0 0
        %2269 = vmatpush1.bf16.msra.mxu0 %v2245
        %2270 = vmatprep.subr.bf16.mxu0 0
        %2271 = vmatpush1.bf16.msra.mxu0 0
        %2272 = vmatprep.subr.bf16.mxu0 0
        %2273 = vmatpush1.bf16.msra.mxu0 0
        %2274 = vmatprep.subr.bf16.mxu0 0
        %2275 = vmatpush1.bf16.msra.mxu0 0
        %2276 = vmatprep.subr.bf16.mxu0 0
        %2277 = vmatpush1.bf16.msra.mxu0 0
        %2278 = vmatprep.subr.bf16.mxu0 0
        %2279 = vmatpush1.bf16.msra.mxu0 0
        %2280 = vmatprep.subr.bf16.mxu0 0
        %2281 = vmatpush1.bf16.msra.mxu0 0
        %2282 = vmatprep.subr.bf16.mxu0 0
        %2283 = vmatpush1.bf16.msra.mxu0 0
        %2284 = vmatprep.subr.bf16.mxu0 0
        %2285 = vmatpush1.bf16.msra.mxu0 0
        %2286 = vmatprep.mubr.bf16.mxu0 0
        %2287 = vmatmul.mubr.bf16.gmra.mrb[0].mxu0 %v2177
        %v2288 = vpop.f32.mrb[0].mxu0
        %v2289 = vadd.f32 %v2205, %v2288
        %v2290 = vpop.f32.mrb[0].mxu0
        %v2291 = vpop.f32.mrb[0].mxu0
        %v2292 = vadd.f32 %v2205, %v2291
        %v2293 = vpop.f32.mrb[0].mxu0
        %2294 = vmatprep.mubr.bf16.mxu0 0
        %2295 = vmatmul.mubr.bf16.gmra.mrb[0].mxu0 %v2178
        %v2296 = vpop.f32.mrb[0].mxu0
        %v2297 = vadd.f32 %v2205, %v2296
        %v2298 = vpop.f32.mrb[0].mxu0
        %v2299 = vpop.f32.mrb[0].mxu0
        %v2300 = vadd.f32 %v2205, %v2299
        %v2301 = vpop.f32.mrb[0].mxu0
        %2302 = vmatprep.mubr.bf16.mxu0 0
        %2303 = vmatmul.mubr.bf16.gmra.mrb[0].mxu0 %v2179
        %v2304 = vpop.f32.mrb[0].mxu0
        %v2305 = vadd.f32 %v2205, %v2304
        %v2306 = vpop.f32.mrb[0].mxu0
        %v2307 = vpop.f32.mrb[0].mxu0
        %v2308 = vadd.f32 %v2205, %v2307
        %v2309 = vpop.f32.mrb[0].mxu0
        %2310 = vmatprep.mubr.bf16.mxu0 0
        %2311 = vmatmul.mubr.bf16.gmra.mrb[0].mxu0 %v2180
        %v2312 = vpop.f32.mrb[0].mxu0
        %v2313 = vadd.f32 %v2205, %v2312
        %v2314 = vpop.f32.mrb[0].mxu0
        %v2315 = vpop.f32.mrb[0].mxu0
        %v2316 = vadd.f32 %v2205, %v2315
        %v2317 = vpop.f32.mrb[0].mxu0
        %2318 = vmatprep.mubr.bf16.mxu0 0
        %2319 = vmatmul.mubr.bf16.gmra.mrb[0].mxu0 %v2181
        %v2320 = vpop.f32.mrb[0].mxu0
        %v2321 = vadd.f32 %v2205, %v2320
        %v2322 = vpop.f32.mrb[0].mxu0
        %v2323 = vpop.f32.mrb[0].mxu0
        %v2324 = vadd.f32 %v2205, %v2323
        %v2325 = vpop.f32.mrb[0].mxu0
        %2326 = vmatprep.mubr.bf16.mxu0 0
        %2327 = vmatmul.mubr.bf16.gmra.mrb[0].mxu0 %v2182
        %v2328 = vpop.f32.mrb[0].mxu0
        %v2329 = vadd.f32 %v2205, %v2328
        %v2330 = vpop.f32.mrb[0].mxu0
        %v2331 = vpop.f32.mrb[0].mxu0
        %v2332 = vadd.f32 %v2205, %v2331
        %v2333 = vpop.f32.mrb[0].mxu0
        %2334 = vmatprep.mubr.bf16.mxu0 0
        %2335 = vmatmul.mubr.bf16.gmra.mrb[0].mxu0 %v2183
        %v2336 = vpop.f32.mrb[0].mxu0
        %v2337 = vadd.f32 %v2205, %v2336
        %v2338 = vpop.f32.mrb[0].mxu0
        %v2339 = vpop.f32.mrb[0].mxu0
        %v2340 = vadd.f32 %v2205, %v2339
        %v2341 = vpop.f32.mrb[0].mxu0
        %2342 = vmatprep.mubr.bf16.mxu0 0
        %2343 = vmatmul.mubr.bf16.gmra.mrb[0].mxu0 %v2184
        %v2344 = vpop.f32.mrb[0].mxu0
        %v2345 = vadd.f32 %v2205, %v2344
        %v2346 = vpop.f32.mrb[0].mxu0
        %v2347 = vpop.f32.mrb[0].mxu0
        %v2348 = vadd.f32 %v2205, %v2347
        %v2349 = vpop.f32.mrb[0].mxu0
        %2350 = vdwg.mxu0
        %v2351 = vadd.f32 %v735, %v2289
        %v2352 = vadd.f32 %v736, %v2292
        %v2353 = vadd.f32 %v737, %v2297
        %v2354 = vadd.f32 %v738, %v2300
        %v2355 = vadd.f32 %v739, %v2305
        %v2356 = vadd.f32 %v740, %v2308
        %v2357 = vadd.f32 %v741, %v2313
        %v2358 = vadd.f32 %v742, %v2316
        %v2359 = vadd.f32 %v743, %v2321
        %v2360 = vadd.f32 %v744, %v2324
        %v2361 = vadd.f32 %v745, %v2329
        %v2362 = vadd.f32 %v746, %v2332
        %v2363 = vadd.f32 %v747, %v2337
        %v2364 = vadd.f32 %v748, %v2340
        %v2365 = vadd.f32 %v749, %v2345
        %v2366 = vadd.f32 %v750, %v2348
        %v2367 = vld [vmem:[#allocation8 + $0x6] sm:$0x1]
        %v2368 = vld [vmem:[#allocation8 + $0x7] sm:$0x1]
        %2369 = vadd.xlane.f32.xlu0 %v2351
        %v2370 = vpop.xlane.xlu0 %2369
        %2371 = vadd.xlane.f32.xlu0 %v2352
        %v2372 = vpop.xlane.xlu0 %2371
        %2373 = vadd.xlane.f32.xlu0 %v2353
        %v2374 = vpop.xlane.xlu0 %2373
        %2375 = vadd.xlane.f32.xlu0 %v2354
        %v2376 = vpop.xlane.xlu0 %2375
        %2377 = vadd.xlane.f32.xlu0 %v2355
        %v2378 = vpop.xlane.xlu0 %2377
        %2379 = vadd.xlane.f32.xlu0 %v2356
        %v2380 = vpop.xlane.xlu0 %2379
        %2381 = vadd.xlane.f32.xlu0 %v2357
        %v2382 = vpop.xlane.xlu0 %2381
        %2383 = vadd.xlane.f32.xlu0 %v2358
        %v2384 = vpop.xlane.xlu0 %2383
        %2385 = vadd.xlane.f32.xlu0 %v2359
        %v2386 = vpop.xlane.xlu0 %2385
        %2387 = vadd.xlane.f32.xlu0 %v2360
        %v2388 = vpop.xlane.xlu0 %2387
        %2389 = vadd.xlane.f32.xlu0 %v2361
        %v2390 = vpop.xlane.xlu0 %2389
        %2391 = vadd.xlane.f32.xlu0 %v2362
        %v2392 = vpop.xlane.xlu0 %2391
        %2393 = vadd.xlane.f32.xlu0 %v2363
        %v2394 = vpop.xlane.xlu0 %2393
        %2395 = vadd.xlane.f32.xlu0 %v2364
        %v2396 = vpop.xlane.xlu0 %2395
        %2397 = vadd.xlane.f32.xlu0 %v2365
        %v2398 = vpop.xlane.xlu0 %2397
        %2399 = vadd.xlane.f32.xlu0 %v2366
        %v2400 = vpop.xlane.xlu0 %2399
        %v2401 = vmul.f32 %v2370, %v566
        %v2402 = vmul.f32 %v2372, %v566
        %v2403 = vmul.f32 %v2374, %v566
        %v2404 = vmul.f32 %v2376, %v566
        %v2405 = vmul.f32 %v2378, %v566
        %v2406 = vmul.f32 %v2380, %v566
        %v2407 = vmul.f32 %v2382, %v566
        %v2408 = vmul.f32 %v2384, %v566
        %v2409 = vmul.f32 %v2386, %v566
        %v2410 = vmul.f32 %v2388, %v566
        %v2411 = vmul.f32 %v2390, %v566
        %v2412 = vmul.f32 %v2392, %v566
        %v2413 = vmul.f32 %v2394, %v566
        %v2414 = vmul.f32 %v2396, %v566
        %v2415 = vmul.f32 %v2398, %v566
        %v2416 = vmul.f32 %v2400, %v566
        %v2417 = vsub.f32 %v2351, %v2401
        %v2418 = vsub.f32 %v2352, %v2402
        %v2419 = vsub.f32 %v2353, %v2403
        %v2420 = vsub.f32 %v2354, %v2404
        %v2421 = vsub.f32 %v2355, %v2405
        %v2422 = vsub.f32 %v2356, %v2406
        %v2423 = vsub.f32 %v2357, %v2407
        %v2424 = vsub.f32 %v2358, %v2408
        %v2425 = vsub.f32 %v2359, %v2409
        %v2426 = vsub.f32 %v2360, %v2410
        %v2427 = vsub.f32 %v2361, %v2411
        %v2428 = vsub.f32 %v2362, %v2412
        %v2429 = vsub.f32 %v2363, %v2413
        %v2430 = vsub.f32 %v2364, %v2414
        %v2431 = vsub.f32 %v2365, %v2415
        %v2432 = vsub.f32 %v2366, %v2416
        %v2433 = vmul.f32 %v2417, %v2417
        %v2434 = vmul.f32 %v2418, %v2418
        %v2435 = vmul.f32 %v2419, %v2419
        %v2436 = vmul.f32 %v2420, %v2420
        %v2437 = vmul.f32 %v2421, %v2421
        %v2438 = vmul.f32 %v2422, %v2422
        %v2439 = vmul.f32 %v2423, %v2423
        %v2440 = vmul.f32 %v2424, %v2424
        %v2441 = vmul.f32 %v2425, %v2425
        %v2442 = vmul.f32 %v2426, %v2426
        %v2443 = vmul.f32 %v2427, %v2427
        %v2444 = vmul.f32 %v2428, %v2428
        %v2445 = vmul.f32 %v2429, %v2429
        %v2446 = vmul.f32 %v2430, %v2430
        %v2447 = vmul.f32 %v2431, %v2431
        %v2448 = vmul.f32 %v2432, %v2432
        %2449 = vadd.xlane.f32.xlu0 %v2433
        %v2450 = vpop.xlane.xlu0 %2449
        %2451 = vadd.xlane.f32.xlu0 %v2434
        %v2452 = vpop.xlane.xlu0 %2451
        %2453 = vadd.xlane.f32.xlu0 %v2435
        %v2454 = vpop.xlane.xlu0 %2453
        %2455 = vadd.xlane.f32.xlu0 %v2436
        %v2456 = vpop.xlane.xlu0 %2455
        %2457 = vadd.xlane.f32.xlu0 %v2437
        %v2458 = vpop.xlane.xlu0 %2457
        %2459 = vadd.xlane.f32.xlu0 %v2438
        %v2460 = vpop.xlane.xlu0 %2459
        %2461 = vadd.xlane.f32.xlu0 %v2439
        %v2462 = vpop.xlane.xlu0 %2461
        %2463 = vadd.xlane.f32.xlu0 %v2440
        %v2464 = vpop.xlane.xlu0 %2463
        %2465 = vadd.xlane.f32.xlu0 %v2441
        %v2466 = vpop.xlane.xlu0 %2465
        %2467 = vadd.xlane.f32.xlu0 %v2442
        %v2468 = vpop.xlane.xlu0 %2467
        %2469 = vadd.xlane.f32.xlu0 %v2443
        %v2470 = vpop.xlane.xlu0 %2469
        %2471 = vadd.xlane.f32.xlu0 %v2444
        %v2472 = vpop.xlane.xlu0 %2471
        %2473 = vadd.xlane.f32.xlu0 %v2445
        %v2474 = vpop.xlane.xlu0 %2473
        %2475 = vadd.xlane.f32.xlu0 %v2446
        %v2476 = vpop.xlane.xlu0 %2475
        %2477 = vadd.xlane.f32.xlu0 %v2447
        %v2478 = vpop.xlane.xlu0 %2477
        %2479 = vadd.xlane.f32.xlu0 %v2448
        %v2480 = vpop.xlane.xlu0 %2479
        %v2481 = vmul.f32 %v2450, %v566
        %v2482 = vmul.f32 %v2452, %v566
        %v2483 = vmul.f32 %v2454, %v566
        %v2484 = vmul.f32 %v2456, %v566
        %v2485 = vmul.f32 %v2458, %v566
        %v2486 = vmul.f32 %v2460, %v566
        %v2487 = vmul.f32 %v2462, %v566
        %v2488 = vmul.f32 %v2464, %v566
        %v2489 = vmul.f32 %v2466, %v566
        %v2490 = vmul.f32 %v2468, %v566
        %v2491 = vmul.f32 %v2470, %v566
        %v2492 = vmul.f32 %v2472, %v566
        %v2493 = vmul.f32 %v2474, %v566
        %v2494 = vmul.f32 %v2476, %v566
        %v2495 = vmul.f32 %v2478, %v566
        %v2496 = vmul.f32 %v2480, %v566
        %v2497 = vadd.f32 %v2481, 1e-12
        %v2498 = vadd.f32 %v2482, 1e-12
        %v2499 = vadd.f32 %v2483, 1e-12
        %v2500 = vadd.f32 %v2484, 1e-12
        %v2501 = vadd.f32 %v2485, 1e-12
        %v2502 = vadd.f32 %v2486, 1e-12
        %v2503 = vadd.f32 %v2487, 1e-12
        %v2504 = vadd.f32 %v2488, 1e-12
        %v2505 = vadd.f32 %v2489, 1e-12
        %v2506 = vadd.f32 %v2490, 1e-12
        %v2507 = vadd.f32 %v2491, 1e-12
        %v2508 = vadd.f32 %v2492, 1e-12
        %v2509 = vadd.f32 %v2493, 1e-12
        %v2510 = vadd.f32 %v2494, 1e-12
        %v2511 = vadd.f32 %v2495, 1e-12
        %v2512 = vadd.f32 %v2496, 1e-12
        %v2513 = vrsqrt.pop %v2497
        %v2514 = vrsqrt.pop %v2498
        %v2515 = vrsqrt.pop %v2499
        %v2516 = vrsqrt.pop %v2500
        %v2517 = vrsqrt.pop %v2501
        %v2518 = vrsqrt.pop %v2502
        %v2519 = vrsqrt.pop %v2503
        %v2520 = vrsqrt.pop %v2504
        %v2521 = vrsqrt.pop %v2505
        %v2522 = vrsqrt.pop %v2506
        %v2523 = vrsqrt.pop %v2507
        %v2524 = vrsqrt.pop %v2508
        %v2525 = vrsqrt.pop %v2509
        %v2526 = vrsqrt.pop %v2510
        %v2527 = vrsqrt.pop %v2511
        %v2528 = vrsqrt.pop %v2512
        %v2529 = vmul.f32 %v2417, %v2513
        %v2530 = vmul.f32 %v2418, %v2514
        %v2531 = vmul.f32 %v2419, %v2515
        %v2532 = vmul.f32 %v2420, %v2516
        %v2533 = vmul.f32 %v2421, %v2517
        %v2534 = vmul.f32 %v2422, %v2518
        %v2535 = vmul.f32 %v2423, %v2519
        %v2536 = vmul.f32 %v2424, %v2520
        %v2537 = vmul.f32 %v2425, %v2521
        %v2538 = vmul.f32 %v2426, %v2522
        %v2539 = vmul.f32 %v2427, %v2523
        %v2540 = vmul.f32 %v2428, %v2524
        %v2541 = vmul.f32 %v2429, %v2525
        %v2542 = vmul.f32 %v2430, %v2526
        %v2543 = vmul.f32 %v2431, %v2527
        %v2544 = vmul.f32 %v2432, %v2528
        %v2545 = vlaneseq
        %v2546 = vshrl.u32 %v2545, 7
        %v2547 = vsub.s32 0, %v2546
        %v2548 = vrot.slane %v2367, %v2547
        %v2549 = vmul.f32 %v2529, %v2548
        %v2550 = vmul.f32 %v2530, %v2548
        %v2551 = vmul.f32 %v2531, %v2548
        %v2552 = vmul.f32 %v2532, %v2548
        %v2553 = vmul.f32 %v2533, %v2548
        %v2554 = vmul.f32 %v2534, %v2548
        %v2555 = vmul.f32 %v2535, %v2548
        %v2556 = vmul.f32 %v2536, %v2548
        %v2557 = vmul.f32 %v2537, %v2548
        %v2558 = vmul.f32 %v2538, %v2548
        %v2559 = vmul.f32 %v2539, %v2548
        %v2560 = vmul.f32 %v2540, %v2548
        %v2561 = vmul.f32 %v2541, %v2548
        %v2562 = vmul.f32 %v2542, %v2548
        %v2563 = vmul.f32 %v2543, %v2548
        %v2564 = vmul.f32 %v2544, %v2548
        %v2565 = vlaneseq
        %v2566 = vshrl.u32 %v2565, 7
        %v2567 = vsub.s32 0, %v2566
        %v2568 = vrot.slane %v2368, %v2567
        %v2569 = vadd.f32 %v2549, %v2568
        %v2570 = vadd.f32 %v2550, %v2568
        %v2571 = vadd.f32 %v2551, %v2568
        %v2572 = vadd.f32 %v2552, %v2568
        %v2573 = vadd.f32 %v2553, %v2568
        %v2574 = vadd.f32 %v2554, %v2568
        %v2575 = vadd.f32 %v2555, %v2568
        %v2576 = vadd.f32 %v2556, %v2568
        %v2577 = vadd.f32 %v2557, %v2568
        %v2578 = vadd.f32 %v2558, %v2568
        %v2579 = vadd.f32 %v2559, %v2568
        %v2580 = vadd.f32 %v2560, %v2568
        %v2581 = vadd.f32 %v2561, %v2568
        %v2582 = vadd.f32 %v2562, %v2568
        %v2583 = vadd.f32 %v2563, %v2568
        %v2584 = vadd.f32 %v2564, %v2568
        %v2585 = vpack.c.bf16 %v2570, %v2569
        %v2586 = vpack.c.bf16 %v2572, %v2571
        %v2587 = vpack.c.bf16 %v2574, %v2573
        %v2588 = vpack.c.bf16 %v2576, %v2575
        %v2589 = vpack.c.bf16 %v2578, %v2577
        %v2590 = vpack.c.bf16 %v2580, %v2579
        %v2591 = vpack.c.bf16 %v2582, %v2581
        %v2592 = vpack.c.bf16 %v2584, %v2583
        %v2593 = vld [vmem:[#allocation10] sm:$0xff]
        %v2594 = vld [vmem:[#allocation10 + $0x8] sm:$0xff]
        %v2595 = vld [vmem:[#allocation10 + $0x10] sm:$0xff]
        %v2596 = vld [vmem:[#allocation10 + $0x18] sm:$0xff]
        %v2597 = vld [vmem:[#allocation10 + $0x20] sm:$0xff]
        %v2598 = vld [vmem:[#allocation10 + $0x28] sm:$0xff]
        %v2599 = vld [vmem:[#allocation10 + $0x30] sm:$0xff]
        %v2600 = vld [vmem:[#allocation10 + $0x38] sm:$0xff]
        %v2601 = vld [vmem:[#allocation10 + $0x40] sm:$0xff]
        %v2602 = vld [vmem:[#allocation10 + $0x48] sm:$0xff]
        %v2603 = vld [vmem:[#allocation10 + $0x50] sm:$0xff]
        %v2604 = vld [vmem:[#allocation10 + $0x58] sm:$0xff]
        %v2605 = vld [vmem:[#allocation10 + $0x60] sm:$0xff]
        %v2606 = vld [vmem:[#allocation10 + $0x68] sm:$0xff]
        %v2607 = vld [vmem:[#allocation10 + $0x70] sm:$0xff]
        %v2608 = vld [vmem:[#allocation10 + $0x78] sm:$0xff]
        %v2609 = vld [vmem:[#allocation11] sm:$0x3]
        %v2611 = vlaneseq
        %v2612 = vshrl.u32 %v2611, 7
        %v2613 = vsub.s32 0, %v2612
        %v2614 = vrot.slane %v2609, %v2613
        %v2615 = vlaneseq
        %v2616 = vshrl.u32 %v2615, 7
        %v2617 = vsub.s32 1, %v2616
        %v2618 = vrot.slane %v2609, %v2617
        %v2637 = vunpack.c.l.b16 %v2593
        %v2638 = vunpack.c.h.b16 %v2593
        %v2639 = vunpack.c.l.b16 %v2594
        %v2640 = vunpack.c.h.b16 %v2594
        %v2641 = vunpack.c.l.b16 %v2595
        %v2642 = vunpack.c.h.b16 %v2595
        %v2643 = vunpack.c.l.b16 %v2596
        %v2644 = vunpack.c.h.b16 %v2596
        %v2645 = vunpack.c.l.b16 %v2597
        %v2646 = vunpack.c.h.b16 %v2597
        %v2647 = vunpack.c.l.b16 %v2598
        %v2648 = vunpack.c.h.b16 %v2598
        %v2649 = vunpack.c.l.b16 %v2599
        %v2650 = vunpack.c.h.b16 %v2599
        %v2651 = vunpack.c.l.b16 %v2600
        %v2652 = vunpack.c.h.b16 %v2600
        %v2653 = vunpack.c.l.b16 %v2601
        %v2654 = vunpack.c.h.b16 %v2601
        %v2655 = vunpack.c.l.b16 %v2602
        %v2656 = vunpack.c.h.b16 %v2602
        %v2657 = vunpack.c.l.b16 %v2603
        %v2658 = vunpack.c.h.b16 %v2603
        %v2659 = vunpack.c.l.b16 %v2604
        %v2660 = vunpack.c.h.b16 %v2604
        %v2661 = vunpack.c.l.b16 %v2605
        %v2662 = vunpack.c.h.b16 %v2605
        %v2663 = vunpack.c.l.b16 %v2606
        %v2664 = vunpack.c.h.b16 %v2606
        %v2665 = vunpack.c.l.b16 %v2607
        %v2666 = vunpack.c.h.b16 %v2607
        %v2667 = vunpack.c.l.b16 %v2608
        %v2668 = vunpack.c.h.b16 %v2608
        %v2669 = vpack.c.b16 %v2639, %v2637
        %v2670 = vpack.c.b16 %v2640, %v2638
        %v2671 = vpack.c.b16 %v2643, %v2641
        %v2672 = vpack.c.b16 %v2644, %v2642
        %v2673 = vpack.c.b16 %v2647, %v2645
        %v2674 = vpack.c.b16 %v2648, %v2646
        %v2675 = vpack.c.b16 %v2651, %v2649
        %v2676 = vpack.c.b16 %v2652, %v2650
        %v2677 = vpack.c.b16 %v2655, %v2653
        %v2678 = vpack.c.b16 %v2656, %v2654
        %v2679 = vpack.c.b16 %v2659, %v2657
        %v2680 = vpack.c.b16 %v2660, %v2658
        %v2681 = vpack.c.b16 %v2663, %v2661
        %v2682 = vpack.c.b16 %v2664, %v2662
        %v2683 = vpack.c.b16 %v2667, %v2665
        %v2684 = vpack.c.b16 %v2668, %v2666
        %2701 = vmatprep.subr.bf16.mxu0 %v2670
        %2702 = vmatpush1.bf16.msra.mxu0 %v2669
        %2703 = vmatprep.subr.bf16.mxu0 %v2672
        %2704 = vmatpush1.bf16.msra.mxu0 %v2671
        %2705 = vmatprep.subr.bf16.mxu0 %v2674
        %2706 = vmatpush1.bf16.msra.mxu0 %v2673
        %2707 = vmatprep.subr.bf16.mxu0 %v2676
        %2708 = vmatpush1.bf16.msra.mxu0 %v2675
        %2709 = vmatprep.subr.bf16.mxu0 %v2678
        %2710 = vmatpush1.bf16.msra.mxu0 %v2677
        %2711 = vmatprep.subr.bf16.mxu0 %v2680
        %2712 = vmatpush1.bf16.msra.mxu0 %v2679
        %2713 = vmatprep.subr.bf16.mxu0 %v2682
        %2714 = vmatpush1.bf16.msra.mxu0 %v2681
        %2715 = vmatprep.subr.bf16.mxu0 %v2684
        %2716 = vmatpush1.bf16.msra.mxu0 %v2683
        %2717 = vmatprep.subr.bf16.mxu0 0
        %2718 = vmatpush1.bf16.msra.mxu0 0
        %2719 = vmatprep.subr.bf16.mxu0 0
        %2720 = vmatpush1.bf16.msra.mxu0 0
        %2721 = vmatprep.subr.bf16.mxu0 0
        %2722 = vmatpush1.bf16.msra.mxu0 0
        %2723 = vmatprep.subr.bf16.mxu0 0
        %2724 = vmatpush1.bf16.msra.mxu0 0
        %2725 = vmatprep.subr.bf16.mxu0 0
        %2726 = vmatpush1.bf16.msra.mxu0 0
        %2727 = vmatprep.subr.bf16.mxu0 0
        %2728 = vmatpush1.bf16.msra.mxu0 0
        %2729 = vmatprep.subr.bf16.mxu0 0
        %2730 = vmatpush1.bf16.msra.mxu0 0
        %2731 = vmatprep.subr.bf16.mxu0 0
        %2732 = vmatpush1.bf16.msra.mxu0 0
        %2733 = vmatprep.mubr.bf16.mxu0 0
        %2734 = vmatmul.mubr.bf16.gmra.mrb[0].mxu0 %v2585
        %v2735 = vpop.f32.mrb[0].mxu0
        %v2736 = vadd.f32 %v2614, %v2735
        %v2737 = vpop.f32.mrb[0].mxu0
        %v2738 = vadd.f32 %v2618, %v2737
        %v2739 = vpop.f32.mrb[0].mxu0
        %v2740 = vadd.f32 %v2614, %v2739
        %v2741 = vpop.f32.mrb[0].mxu0
        %v2742 = vadd.f32 %v2618, %v2741
        %2743 = vmatprep.mubr.bf16.mxu0 0
        %2744 = vmatmul.mubr.bf16.gmra.mrb[0].mxu0 %v2586
        %v2745 = vpop.f32.mrb[0].mxu0
        %v2746 = vadd.f32 %v2614, %v2745
        %v2747 = vpop.f32.mrb[0].mxu0
        %v2748 = vadd.f32 %v2618, %v2747
        %v2749 = vpop.f32.mrb[0].mxu0
        %v2750 = vadd.f32 %v2614, %v2749
        %v2751 = vpop.f32.mrb[0].mxu0
        %v2752 = vadd.f32 %v2618, %v2751
        %2753 = vmatprep.mubr.bf16.mxu0 0
        %2754 = vmatmul.mubr.bf16.gmra.mrb[0].mxu0 %v2587
        %v2755 = vpop.f32.mrb[0].mxu0
        %v2756 = vadd.f32 %v2614, %v2755
        %v2757 = vpop.f32.mrb[0].mxu0
        %v2758 = vadd.f32 %v2618, %v2757
        %v2759 = vpop.f32.mrb[0].mxu0
        %v2760 = vadd.f32 %v2614, %v2759
        %v2761 = vpop.f32.mrb[0].mxu0
        %v2762 = vadd.f32 %v2618, %v2761
        %2763 = vmatprep.mubr.bf16.mxu0 0
        %2764 = vmatmul.mubr.bf16.gmra.mrb[0].mxu0 %v2588
        %v2765 = vpop.f32.mrb[0].mxu0
        %v2766 = vadd.f32 %v2614, %v2765
        %v2767 = vpop.f32.mrb[0].mxu0
        %v2768 = vadd.f32 %v2618, %v2767
        %v2769 = vpop.f32.mrb[0].mxu0
        %v2770 = vadd.f32 %v2614, %v2769
        %v2771 = vpop.f32.mrb[0].mxu0
        %v2772 = vadd.f32 %v2618, %v2771
        %2773 = vmatprep.mubr.bf16.mxu0 0
        %2774 = vmatmul.mubr.bf16.gmra.mrb[0].mxu0 %v2589
        %v2775 = vpop.f32.mrb[0].mxu0
        %v2776 = vadd.f32 %v2614, %v2775
        %v2777 = vpop.f32.mrb[0].mxu0
        %v2778 = vadd.f32 %v2618, %v2777
        %v2779 = vpop.f32.mrb[0].mxu0
        %v2780 = vadd.f32 %v2614, %v2779
        %v2781 = vpop.f32.mrb[0].mxu0
        %v2782 = vadd.f32 %v2618, %v2781
        %2783 = vmatprep.mubr.bf16.mxu0 0
        %2784 = vmatmul.mubr.bf16.gmra.mrb[0].mxu0 %v2590
        %v2785 = vpop.f32.mrb[0].mxu0
        %v2786 = vadd.f32 %v2614, %v2785
        %v2787 = vpop.f32.mrb[0].mxu0
        %v2788 = vadd.f32 %v2618, %v2787
        %v2789 = vpop.f32.mrb[0].mxu0
        %v2790 = vadd.f32 %v2614, %v2789
        %v2791 = vpop.f32.mrb[0].mxu0
        %v2792 = vadd.f32 %v2618, %v2791
        %2793 = vmatprep.mubr.bf16.mxu0 0
        %2794 = vmatmul.mubr.bf16.gmra.mrb[0].mxu0 %v2591
        %v2795 = vpop.f32.mrb[0].mxu0
        %v2796 = vadd.f32 %v2614, %v2795
        %v2797 = vpop.f32.mrb[0].mxu0
        %v2798 = vadd.f32 %v2618, %v2797
        %v2799 = vpop.f32.mrb[0].mxu0
        %v2800 = vadd.f32 %v2614, %v2799
        %v2801 = vpop.f32.mrb[0].mxu0
        %v2802 = vadd.f32 %v2618, %v2801
        %2803 = vmatprep.mubr.bf16.mxu0 0
        %2804 = vmatmul.mubr.bf16.gmra.mrb[0].mxu0 %v2592
        %v2805 = vpop.f32.mrb[0].mxu0
        %v2806 = vadd.f32 %v2614, %v2805
        %v2807 = vpop.f32.mrb[0].mxu0
        %v2808 = vadd.f32 %v2618, %v2807
        %v2809 = vpop.f32.mrb[0].mxu0
        %v2810 = vadd.f32 %v2614, %v2809
        %v2811 = vpop.f32.mrb[0].mxu0
        %v2812 = vadd.f32 %v2618, %v2811
        %2813 = vdwg.mxu0
        %v2814 = vmul.f32 %v2736, %v2736
        %v2815 = vmul.f32 %v2738, %v2738
        %v2816 = vmul.f32 %v2740, %v2740
        %v2817 = vmul.f32 %v2742, %v2742
        %v2818 = vmul.f32 %v2746, %v2746
        %v2819 = vmul.f32 %v2748, %v2748
        %v2820 = vmul.f32 %v2750, %v2750
        %v2821 = vmul.f32 %v2752, %v2752
        %v2822 = vmul.f32 %v2756, %v2756
        %v2823 = vmul.f32 %v2758, %v2758
        %v2824 = vmul.f32 %v2760, %v2760
        %v2825 = vmul.f32 %v2762, %v2762
        %v2826 = vmul.f32 %v2766, %v2766
        %v2827 = vmul.f32 %v2768, %v2768
        %v2828 = vmul.f32 %v2770, %v2770
        %v2829 = vmul.f32 %v2772, %v2772
        %v2830 = vmul.f32 %v2776, %v2776
        %v2831 = vmul.f32 %v2778, %v2778
        %v2832 = vmul.f32 %v2780, %v2780
        %v2833 = vmul.f32 %v2782, %v2782
        %v2834 = vmul.f32 %v2786, %v2786
        %v2835 = vmul.f32 %v2788, %v2788
        %v2836 = vmul.f32 %v2790, %v2790
        %v2837 = vmul.f32 %v2792, %v2792
        %v2838 = vmul.f32 %v2796, %v2796
        %v2839 = vmul.f32 %v2798, %v2798
        %v2840 = vmul.f32 %v2800, %v2800
        %v2841 = vmul.f32 %v2802, %v2802
        %v2842 = vmul.f32 %v2806, %v2806
        %v2843 = vmul.f32 %v2808, %v2808
        %v2844 = vmul.f32 %v2810, %v2810
        %v2845 = vmul.f32 %v2812, %v2812
        %v2846 = vmul.f32 %v2736, %v2814
        %v2847 = vmul.f32 %v2738, %v2815
        %v2848 = vmul.f32 %v2740, %v2816
        %v2849 = vmul.f32 %v2742, %v2817
        %v2850 = vmul.f32 %v2746, %v2818
        %v2851 = vmul.f32 %v2748, %v2819
        %v2852 = vmul.f32 %v2750, %v2820
        %v2853 = vmul.f32 %v2752, %v2821
        %v2854 = vmul.f32 %v2756, %v2822
        %v2855 = vmul.f32 %v2758, %v2823
        %v2856 = vmul.f32 %v2760, %v2824
        %v2857 = vmul.f32 %v2762, %v2825
        %v2858 = vmul.f32 %v2766, %v2826
        %v2859 = vmul.f32 %v2768, %v2827
        %v2860 = vmul.f32 %v2770, %v2828
        %v2861 = vmul.f32 %v2772, %v2829
        %v2862 = vmul.f32 %v2776, %v2830
        %v2863 = vmul.f32 %v2778, %v2831
        %v2864 = vmul.f32 %v2780, %v2832
        %v2865 = vmul.f32 %v2782, %v2833
        %v2866 = vmul.f32 %v2786, %v2834
        %v2867 = vmul.f32 %v2788, %v2835
        %v2868 = vmul.f32 %v2790, %v2836
        %v2869 = vmul.f32 %v2792, %v2837
        %v2870 = vmul.f32 %v2796, %v2838
        %v2871 = vmul.f32 %v2798, %v2839
        %v2872 = vmul.f32 %v2800, %v2840
        %v2873 = vmul.f32 %v2802, %v2841
        %v2874 = vmul.f32 %v2806, %v2842
        %v2875 = vmul.f32 %v2808, %v2843
        %v2876 = vmul.f32 %v2810, %v2844
        %v2877 = vmul.f32 %v2812, %v2845
        %v2878 = vmul.f32 %v2846, 0.044715
        %v2879 = vmul.f32 %v2847, 0.044715
        %v2880 = vmul.f32 %v2848, 0.044715
        %v2881 = vmul.f32 %v2849, 0.044715
        %v2882 = vmul.f32 %v2850, 0.044715
        %v2883 = vmul.f32 %v2851, 0.044715
        %v2884 = vmul.f32 %v2852, 0.044715
        %v2885 = vmul.f32 %v2853, 0.044715
        %v2886 = vmul.f32 %v2854, 0.044715
        %v2887 = vmul.f32 %v2855, 0.044715
        %v2888 = vmul.f32 %v2856, 0.044715
        %v2889 = vmul.f32 %v2857, 0.044715
        %v2890 = vmul.f32 %v2858, 0.044715
        %v2891 = vmul.f32 %v2859, 0.044715
        %v2892 = vmul.f32 %v2860, 0.044715
        %v2893 = vmul.f32 %v2861, 0.044715
        %v2894 = vmul.f32 %v2862, 0.044715
        %v2895 = vmul.f32 %v2863, 0.044715
        %v2896 = vmul.f32 %v2864, 0.044715
        %v2897 = vmul.f32 %v2865, 0.044715
        %v2898 = vmul.f32 %v2866, 0.044715
        %v2899 = vmul.f32 %v2867, 0.044715
        %v2900 = vmul.f32 %v2868, 0.044715
        %v2901 = vmul.f32 %v2869, 0.044715
        %v2902 = vmul.f32 %v2870, 0.044715
        %v2903 = vmul.f32 %v2871, 0.044715
        %v2904 = vmul.f32 %v2872, 0.044715
        %v2905 = vmul.f32 %v2873, 0.044715
        %v2906 = vmul.f32 %v2874, 0.044715
        %v2907 = vmul.f32 %v2875, 0.044715
        %v2908 = vmul.f32 %v2876, 0.044715
        %v2909 = vmul.f32 %v2877, 0.044715
        %v2910 = vadd.f32 %v2736, %v2878
        %v2911 = vadd.f32 %v2738, %v2879
        %v2912 = vadd.f32 %v2740, %v2880
        %v2913 = vadd.f32 %v2742, %v2881
        %v2914 = vadd.f32 %v2746, %v2882
        %v2915 = vadd.f32 %v2748, %v2883
        %v2916 = vadd.f32 %v2750, %v2884
        %v2917 = vadd.f32 %v2752, %v2885
        %v2918 = vadd.f32 %v2756, %v2886
        %v2919 = vadd.f32 %v2758, %v2887
        %v2920 = vadd.f32 %v2760, %v2888
        %v2921 = vadd.f32 %v2762, %v2889
        %v2922 = vadd.f32 %v2766, %v2890
        %v2923 = vadd.f32 %v2768, %v2891
        %v2924 = vadd.f32 %v2770, %v2892
        %v2925 = vadd.f32 %v2772, %v2893
        %v2926 = vadd.f32 %v2776, %v2894
        %v2927 = vadd.f32 %v2778, %v2895
        %v2928 = vadd.f32 %v2780, %v2896
        %v2929 = vadd.f32 %v2782, %v2897
        %v2930 = vadd.f32 %v2786, %v2898
        %v2931 = vadd.f32 %v2788, %v2899
        %v2932 = vadd.f32 %v2790, %v2900
        %v2933 = vadd.f32 %v2792, %v2901
        %v2934 = vadd.f32 %v2796, %v2902
        %v2935 = vadd.f32 %v2798, %v2903
        %v2936 = vadd.f32 %v2800, %v2904
        %v2937 = vadd.f32 %v2802, %v2905
        %v2938 = vadd.f32 %v2806, %v2906
        %v2939 = vadd.f32 %v2808, %v2907
        %v2940 = vadd.f32 %v2810, %v2908
        %v2941 = vadd.f32 %v2812, %v2909
        %v2942 = vmul.f32 %v2910, 0.7978846
        %v2943 = vmul.f32 %v2911, 0.7978846
        %v2944 = vmul.f32 %v2912, 0.7978846
        %v2945 = vmul.f32 %v2913, 0.7978846
        %v2946 = vmul.f32 %v2914, 0.7978846
        %v2947 = vmul.f32 %v2915, 0.7978846
        %v2948 = vmul.f32 %v2916, 0.7978846
        %v2949 = vmul.f32 %v2917, 0.7978846
        %v2950 = vmul.f32 %v2918, 0.7978846
        %v2951 = vmul.f32 %v2919, 0.7978846
        %v2952 = vmul.f32 %v2920, 0.7978846
        %v2953 = vmul.f32 %v2921, 0.7978846
        %v2954 = vmul.f32 %v2922, 0.7978846
        %v2955 = vmul.f32 %v2923, 0.7978846
        %v2956 = vmul.f32 %v2924, 0.7978846
        %v2957 = vmul.f32 %v2925, 0.7978846
        %v2958 = vmul.f32 %v2926, 0.7978846
        %v2959 = vmul.f32 %v2927, 0.7978846
        %v2960 = vmul.f32 %v2928, 0.7978846
        %v2961 = vmul.f32 %v2929, 0.7978846
        %v2962 = vmul.f32 %v2930, 0.7978846
        %v2963 = vmul.f32 %v2931, 0.7978846
        %v2964 = vmul.f32 %v2932, 0.7978846
        %v2965 = vmul.f32 %v2933, 0.7978846
        %v2966 = vmul.f32 %v2934, 0.7978846
        %v2967 = vmul.f32 %v2935, 0.7978846
        %v2968 = vmul.f32 %v2936, 0.7978846
        %v2969 = vmul.f32 %v2937, 0.7978846
        %v2970 = vmul.f32 %v2938, 0.7978846
        %v2971 = vmul.f32 %v2939, 0.7978846
        %v2972 = vmul.f32 %v2940, 0.7978846
        %v2973 = vmul.f32 %v2941, 0.7978846
        %v2974 = vtanh.pop %v2942
        %v2975 = vtanh.pop %v2943
        %v2976 = vtanh.pop %v2944
        %v2977 = vtanh.pop %v2945
        %v2978 = vtanh.pop %v2946
        %v2979 = vtanh.pop %v2947
        %v2980 = vtanh.pop %v2948
        %v2981 = vtanh.pop %v2949
        %v2982 = vtanh.pop %v2950
        %v2983 = vtanh.pop %v2951
        %v2984 = vtanh.pop %v2952
        %v2985 = vtanh.pop %v2953
        %v2986 = vtanh.pop %v2954
        %v2987 = vtanh.pop %v2955
        %v2988 = vtanh.pop %v2956
        %v2989 = vtanh.pop %v2957
        %v2990 = vtanh.pop %v2958
        %v2991 = vtanh.pop %v2959
        %v2992 = vtanh.pop %v2960
        %v2993 = vtanh.pop %v2961
        %v2994 = vtanh.pop %v2962
        %v2995 = vtanh.pop %v2963
        %v2996 = vtanh.pop %v2964
        %v2997 = vtanh.pop %v2965
        %v2998 = vtanh.pop %v2966
        %v2999 = vtanh.pop %v2967
        %v3000 = vtanh.pop %v2968
        %v3001 = vtanh.pop %v2969
        %v3002 = vtanh.pop %v2970
        %v3003 = vtanh.pop %v2971
        %v3004 = vtanh.pop %v2972
        %v3005 = vtanh.pop %v2973
        %v3006 = vadd.f32 %v2974, 1.0
        %v3007 = vadd.f32 %v2975, 1.0
        %v3008 = vadd.f32 %v2976, 1.0
        %v3009 = vadd.f32 %v2977, 1.0
        %v3010 = vadd.f32 %v2978, 1.0
        %v3011 = vadd.f32 %v2979, 1.0
        %v3012 = vadd.f32 %v2980, 1.0
        %v3013 = vadd.f32 %v2981, 1.0
        %v3014 = vadd.f32 %v2982, 1.0
        %v3015 = vadd.f32 %v2983, 1.0
        %v3016 = vadd.f32 %v2984, 1.0
        %v3017 = vadd.f32 %v2985, 1.0
        %v3018 = vadd.f32 %v2986, 1.0
        %v3019 = vadd.f32 %v2987, 1.0
        %v3020 = vadd.f32 %v2988, 1.0
        %v3021 = vadd.f32 %v2989, 1.0
        %v3022 = vadd.f32 %v2990, 1.0
        %v3023 = vadd.f32 %v2991, 1.0
        %v3024 = vadd.f32 %v2992, 1.0
        %v3025 = vadd.f32 %v2993, 1.0
        %v3026 = vadd.f32 %v2994, 1.0
        %v3027 = vadd.f32 %v2995, 1.0
        %v3028 = vadd.f32 %v2996, 1.0
        %v3029 = vadd.f32 %v2997, 1.0
        %v3030 = vadd.f32 %v2998, 1.0
        %v3031 = vadd.f32 %v2999, 1.0
        %v3032 = vadd.f32 %v3000, 1.0
        %v3033 = vadd.f32 %v3001, 1.0
        %v3034 = vadd.f32 %v3002, 1.0
        %v3035 = vadd.f32 %v3003, 1.0
        %v3036 = vadd.f32 %v3004, 1.0
        %v3037 = vadd.f32 %v3005, 1.0
        %v3038 = vmul.f32 %v3006, 0.5
        %v3039 = vmul.f32 %v3007, 0.5
        %v3040 = vmul.f32 %v3008, 0.5
        %v3041 = vmul.f32 %v3009, 0.5
        %v3042 = vmul.f32 %v3010, 0.5
        %v3043 = vmul.f32 %v3011, 0.5
        %v3044 = vmul.f32 %v3012, 0.5
        %v3045 = vmul.f32 %v3013, 0.5
        %v3046 = vmul.f32 %v3014, 0.5
        %v3047 = vmul.f32 %v3015, 0.5
        %v3048 = vmul.f32 %v3016, 0.5
        %v3049 = vmul.f32 %v3017, 0.5
        %v3050 = vmul.f32 %v3018, 0.5
        %v3051 = vmul.f32 %v3019, 0.5
        %v3052 = vmul.f32 %v3020, 0.5
        %v3053 = vmul.f32 %v3021, 0.5
        %v3054 = vmul.f32 %v3022, 0.5
        %v3055 = vmul.f32 %v3023, 0.5
        %v3056 = vmul.f32 %v3024, 0.5
        %v3057 = vmul.f32 %v3025, 0.5
        %v3058 = vmul.f32 %v3026, 0.5
        %v3059 = vmul.f32 %v3027, 0.5
        %v3060 = vmul.f32 %v3028, 0.5
        %v3061 = vmul.f32 %v3029, 0.5
        %v3062 = vmul.f32 %v3030, 0.5
        %v3063 = vmul.f32 %v3031, 0.5
        %v3064 = vmul.f32 %v3032, 0.5
        %v3065 = vmul.f32 %v3033, 0.5
        %v3066 = vmul.f32 %v3034, 0.5
        %v3067 = vmul.f32 %v3035, 0.5
        %v3068 = vmul.f32 %v3036, 0.5
        %v3069 = vmul.f32 %v3037, 0.5
        %v3070 = vmul.f32 %v2736, %v3038
        %v3071 = vmul.f32 %v2738, %v3039
        %v3072 = vmul.f32 %v2740, %v3040
        %v3073 = vmul.f32 %v2742, %v3041
        %v3074 = vmul.f32 %v2746, %v3042
        %v3075 = vmul.f32 %v2748, %v3043
        %v3076 = vmul.f32 %v2750, %v3044
        %v3077 = vmul.f32 %v2752, %v3045
        %v3078 = vmul.f32 %v2756, %v3046
        %v3079 = vmul.f32 %v2758, %v3047
        %v3080 = vmul.f32 %v2760, %v3048
        %v3081 = vmul.f32 %v2762, %v3049
        %v3082 = vmul.f32 %v2766, %v3050
        %v3083 = vmul.f32 %v2768, %v3051
        %v3084 = vmul.f32 %v2770, %v3052
        %v3085 = vmul.f32 %v2772, %v3053
        %v3086 = vmul.f32 %v2776, %v3054
        %v3087 = vmul.f32 %v2778, %v3055
        %v3088 = vmul.f32 %v2780, %v3056
        %v3089 = vmul.f32 %v2782, %v3057
        %v3090 = vmul.f32 %v2786, %v3058
        %v3091 = vmul.f32 %v2788, %v3059
        %v3092 = vmul.f32 %v2790, %v3060
        %v3093 = vmul.f32 %v2792, %v3061
        %v3094 = vmul.f32 %v2796, %v3062
        %v3095 = vmul.f32 %v2798, %v3063
        %v3096 = vmul.f32 %v2800, %v3064
        %v3097 = vmul.f32 %v2802, %v3065
        %v3098 = vmul.f32 %v2806, %v3066
        %v3099 = vmul.f32 %v2808, %v3067
        %v3100 = vmul.f32 %v2810, %v3068
        %v3101 = vmul.f32 %v2812, %v3069
        %v3102 = vpack.c.bf16 %v3072, %v3070
        %v3103 = vpack.c.bf16 %v3073, %v3071
        %v3104 = vpack.c.bf16 %v3076, %v3074
        %v3105 = vpack.c.bf16 %v3077, %v3075
        %v3106 = vpack.c.bf16 %v3080, %v3078
        %v3107 = vpack.c.bf16 %v3081, %v3079
        %v3108 = vpack.c.bf16 %v3084, %v3082
        %v3109 = vpack.c.bf16 %v3085, %v3083
        %v3110 = vpack.c.bf16 %v3088, %v3086
        %v3111 = vpack.c.bf16 %v3089, %v3087
        %v3112 = vpack.c.bf16 %v3092, %v3090
        %v3113 = vpack.c.bf16 %v3093, %v3091
        %v3114 = vpack.c.bf16 %v3096, %v3094
        %v3115 = vpack.c.bf16 %v3097, %v3095
        %v3116 = vpack.c.bf16 %v3100, %v3098
        %v3117 = vpack.c.bf16 %v3101, %v3099
        %v3118 = vld [vmem:[#allocation13] sm:$0xf]
        %v3119 = vld [vmem:[#allocation13 + $0x4] sm:$0xf]
        %v3120 = vld [vmem:[#allocation13 + $0x8] sm:$0xf]
        %v3121 = vld [vmem:[#allocation13 + $0xc] sm:$0xf]
        %v3122 = vld [vmem:[#allocation13 + $0x10] sm:$0xf]
        %v3123 = vld [vmem:[#allocation13 + $0x14] sm:$0xf]
        %v3124 = vld [vmem:[#allocation13 + $0x18] sm:$0xf]
        %v3125 = vld [vmem:[#allocation13 + $0x1c] sm:$0xf]
        %v3126 = vld [vmem:[#allocation13 + $0x20] sm:$0xf]
        %v3127 = vld [vmem:[#allocation13 + $0x24] sm:$0xf]
        %v3128 = vld [vmem:[#allocation13 + $0x28] sm:$0xf]
        %v3129 = vld [vmem:[#allocation13 + $0x2c] sm:$0xf]
        %v3130 = vld [vmem:[#allocation13 + $0x30] sm:$0xf]
        %v3131 = vld [vmem:[#allocation13 + $0x34] sm:$0xf]
        %v3132 = vld [vmem:[#allocation13 + $0x38] sm:$0xf]
        %v3133 = vld [vmem:[#allocation13 + $0x3c] sm:$0xf]
        %v3134 = vld [vmem:[#allocation13 + $0x40] sm:$0xf]
        %v3135 = vld [vmem:[#allocation13 + $0x44] sm:$0xf]
        %v3136 = vld [vmem:[#allocation13 + $0x48] sm:$0xf]
        %v3137 = vld [vmem:[#allocation13 + $0x4c] sm:$0xf]
        %v3138 = vld [vmem:[#allocation13 + $0x50] sm:$0xf]
        %v3139 = vld [vmem:[#allocation13 + $0x54] sm:$0xf]
        %v3140 = vld [vmem:[#allocation13 + $0x58] sm:$0xf]
        %v3141 = vld [vmem:[#allocation13 + $0x5c] sm:$0xf]
        %v3142 = vld [vmem:[#allocation13 + $0x60] sm:$0xf]
        %v3143 = vld [vmem:[#allocation13 + $0x64] sm:$0xf]
        %v3144 = vld [vmem:[#allocation13 + $0x68] sm:$0xf]
        %v3145 = vld [vmem:[#allocation13 + $0x6c] sm:$0xf]
        %v3146 = vld [vmem:[#allocation13 + $0x70] sm:$0xf]
        %v3147 = vld [vmem:[#allocation13 + $0x74] sm:$0xf]
        %v3148 = vld [vmem:[#allocation13 + $0x78] sm:$0xf]
        %v3149 = vld [vmem:[#allocation13 + $0x7c] sm:$0xf]
        %v3150 = vld [vmem:[#allocation8 + $0x8] sm:$0x1]
        %v3151 = vlaneseq
        %v3152 = vshrl.u32 %v3151, 7
        %v3153 = vsub.s32 0, %v3152
        %v3154 = vrot.slane %v3150, %v3153
        %v3187 = vunpack.c.l.b16 %v3118
        %v3188 = vunpack.c.l.b16 %v3119
        %v3189 = vunpack.c.l.b16 %v3120
        %v3190 = vunpack.c.l.b16 %v3121
        %v3191 = vunpack.c.l.b16 %v3122
        %v3192 = vunpack.c.l.b16 %v3123
        %v3193 = vunpack.c.l.b16 %v3124
        %v3194 = vunpack.c.l.b16 %v3125
        %v3195 = vunpack.c.l.b16 %v3126
        %v3196 = vunpack.c.l.b16 %v3127
        %v3197 = vunpack.c.l.b16 %v3128
        %v3198 = vunpack.c.l.b16 %v3129
        %v3199 = vunpack.c.l.b16 %v3130
        %v3200 = vunpack.c.l.b16 %v3131
        %v3201 = vunpack.c.l.b16 %v3132
        %v3202 = vunpack.c.l.b16 %v3133
        %v3203 = vunpack.c.l.b16 %v3134
        %v3204 = vunpack.c.l.b16 %v3135
        %v3205 = vunpack.c.l.b16 %v3136
        %v3206 = vunpack.c.l.b16 %v3137
        %v3207 = vunpack.c.l.b16 %v3138
        %v3208 = vunpack.c.l.b16 %v3139
        %v3209 = vunpack.c.l.b16 %v3140
        %v3210 = vunpack.c.l.b16 %v3141
        %v3211 = vunpack.c.l.b16 %v3142
        %v3212 = vunpack.c.l.b16 %v3143
        %v3213 = vunpack.c.l.b16 %v3144
        %v3214 = vunpack.c.l.b16 %v3145
        %v3215 = vunpack.c.l.b16 %v3146
        %v3216 = vunpack.c.l.b16 %v3147
        %v3217 = vunpack.c.l.b16 %v3148
        %v3218 = vunpack.c.l.b16 %v3149
        %v3219 = vpack.c.b16 %v3188, %v3187
        %v3220 = vpack.c.b16 %v3190, %v3189
        %v3221 = vpack.c.b16 %v3192, %v3191
        %v3222 = vpack.c.b16 %v3194, %v3193
        %v3223 = vpack.c.b16 %v3196, %v3195
        %v3224 = vpack.c.b16 %v3198, %v3197
        %v3225 = vpack.c.b16 %v3200, %v3199
        %v3226 = vpack.c.b16 %v3202, %v3201
        %v3227 = vpack.c.b16 %v3204, %v3203
        %v3228 = vpack.c.b16 %v3206, %v3205
        %v3229 = vpack.c.b16 %v3208, %v3207
        %v3230 = vpack.c.b16 %v3210, %v3209
        %v3231 = vpack.c.b16 %v3212, %v3211
        %v3232 = vpack.c.b16 %v3214, %v3213
        %v3233 = vpack.c.b16 %v3216, %v3215
        %v3234 = vpack.c.b16 %v3218, %v3217
        %3251 = vmatprep.subr.bf16.mxu0 0
        %3252 = vmatpush1.bf16.msra.mxu0 %v3219
        %3253 = vmatprep.subr.bf16.mxu0 0
        %3254 = vmatpush1.bf16.msra.mxu0 %v3220
        %3255 = vmatprep.subr.bf16.mxu0 0
        %3256 = vmatpush1.bf16.msra.mxu0 %v3221
        %3257 = vmatprep.subr.bf16.mxu0 0
        %3258 = vmatpush1.bf16.msra.mxu0 %v3222
        %3259 = vmatprep.subr.bf16.mxu0 0
        %3260 = vmatpush1.bf16.msra.mxu0 %v3223
        %3261 = vmatprep.subr.bf16.mxu0 0
        %3262 = vmatpush1.bf16.msra.mxu0 %v3224
        %3263 = vmatprep.subr.bf16.mxu0 0
        %3264 = vmatpush1.bf16.msra.mxu0 %v3225
        %3265 = vmatprep.subr.bf16.mxu0 0
        %3266 = vmatpush1.bf16.msra.mxu0 %v3226
        %3267 = vmatprep.subr.bf16.mxu0 0
        %3268 = vmatpush1.bf16.msra.mxu0 %v3227
        %3269 = vmatprep.subr.bf16.mxu0 0
        %3270 = vmatpush1.bf16.msra.mxu0 %v3228
        %3271 = vmatprep.subr.bf16.mxu0 0
        %3272 = vmatpush1.bf16.msra.mxu0 %v3229
        %3273 = vmatprep.subr.bf16.mxu0 0
        %3274 = vmatpush1.bf16.msra.mxu0 %v3230
        %3275 = vmatprep.subr.bf16.mxu0 0
        %3276 = vmatpush1.bf16.msra.mxu0 %v3231
        %3277 = vmatprep.subr.bf16.mxu0 0
        %3278 = vmatpush1.bf16.msra.mxu0 %v3232
        %3279 = vmatprep.subr.bf16.mxu0 0
        %3280 = vmatpush1.bf16.msra.mxu0 %v3233
        %3281 = vmatprep.subr.bf16.mxu0 0
        %3282 = vmatpush1.bf16.msra.mxu0 %v3234
        %3283 = vmatprep.mubr.bf16.mxu0 %v3103
        %3284 = vmatmul.mubr.bf16.gmra.mrb[0].mxu0 %v3102
        %v3285 = vpop.f32.mrb[0].mxu0
        %v3286 = vadd.f32 %v3154, %v3285
        %v3287 = vpop.f32.mrb[0].mxu0
        %v3288 = vpop.f32.mrb[0].mxu0
        %v3289 = vadd.f32 %v3154, %v3288
        %v3290 = vpop.f32.mrb[0].mxu0
        %3291 = vmatprep.mubr.bf16.mxu0 %v3105
        %3292 = vmatmul.mubr.bf16.gmra.mrb[0].mxu0 %v3104
        %v3293 = vpop.f32.mrb[0].mxu0
        %v3294 = vadd.f32 %v3154, %v3293
        %v3295 = vpop.f32.mrb[0].mxu0
        %v3296 = vpop.f32.mrb[0].mxu0
        %v3297 = vadd.f32 %v3154, %v3296
        %v3298 = vpop.f32.mrb[0].mxu0
        %3299 = vmatprep.mubr.bf16.mxu0 %v3107
        %3300 = vmatmul.mubr.bf16.gmra.mrb[0].mxu0 %v3106
        %v3301 = vpop.f32.mrb[0].mxu0
        %v3302 = vadd.f32 %v3154, %v3301
        %v3303 = vpop.f32.mrb[0].mxu0
        %v3304 = vpop.f32.mrb[0].mxu0
        %v3305 = vadd.f32 %v3154, %v3304
        %v3306 = vpop.f32.mrb[0].mxu0
        %3307 = vmatprep.mubr.bf16.mxu0 %v3109
        %3308 = vmatmul.mubr.bf16.gmra.mrb[0].mxu0 %v3108
        %v3309 = vpop.f32.mrb[0].mxu0
        %v3310 = vadd.f32 %v3154, %v3309
        %v3311 = vpop.f32.mrb[0].mxu0
        %v3312 = vpop.f32.mrb[0].mxu0
        %v3313 = vadd.f32 %v3154, %v3312
        %v3314 = vpop.f32.mrb[0].mxu0
        %3315 = vmatprep.mubr.bf16.mxu0 %v3111
        %3316 = vmatmul.mubr.bf16.gmra.mrb[0].mxu0 %v3110
        %v3317 = vpop.f32.mrb[0].mxu0
        %v3318 = vadd.f32 %v3154, %v3317
        %v3319 = vpop.f32.mrb[0].mxu0
        %v3320 = vpop.f32.mrb[0].mxu0
        %v3321 = vadd.f32 %v3154, %v3320
        %v3322 = vpop.f32.mrb[0].mxu0
        %3323 = vmatprep.mubr.bf16.mxu0 %v3113
        %3324 = vmatmul.mubr.bf16.gmra.mrb[0].mxu0 %v3112
        %v3325 = vpop.f32.mrb[0].mxu0
        %v3326 = vadd.f32 %v3154, %v3325
        %v3327 = vpop.f32.mrb[0].mxu0
        %v3328 = vpop.f32.mrb[0].mxu0
        %v3329 = vadd.f32 %v3154, %v3328
        %v3330 = vpop.f32.mrb[0].mxu0
        %3331 = vmatprep.mubr.bf16.mxu0 %v3115
        %3332 = vmatmul.mubr.bf16.gmra.mrb[0].mxu0 %v3114
        %v3333 = vpop.f32.mrb[0].mxu0
        %v3334 = vadd.f32 %v3154, %v3333
        %v3335 = vpop.f32.mrb[0].mxu0
        %v3336 = vpop.f32.mrb[0].mxu0
        %v3337 = vadd.f32 %v3154, %v3336
        %v3338 = vpop.f32.mrb[0].mxu0
        %3339 = vmatprep.mubr.bf16.mxu0 %v3117
        %3340 = vmatmul.mubr.bf16.gmra.mrb[0].mxu0 %v3116
        %v3341 = vpop.f32.mrb[0].mxu0
        %v3342 = vadd.f32 %v3154, %v3341
        %v3343 = vpop.f32.mrb[0].mxu0
        %v3344 = vpop.f32.mrb[0].mxu0
        %v3345 = vadd.f32 %v3154, %v3344
        %v3346 = vpop.f32.mrb[0].mxu0
        %3347 = vdwg.mxu0
        %v3348 = vadd.f32 %v2569, %v3286
        %v3349 = vadd.f32 %v2570, %v3289
        %v3350 = vadd.f32 %v2571, %v3294
        %v3351 = vadd.f32 %v2572, %v3297
        %v3352 = vadd.f32 %v2573, %v3302
        %v3353 = vadd.f32 %v2574, %v3305
        %v3354 = vadd.f32 %v2575, %v3310
        %v3355 = vadd.f32 %v2576, %v3313
        %v3356 = vadd.f32 %v2577, %v3318
        %v3357 = vadd.f32 %v2578, %v3321
        %v3358 = vadd.f32 %v2579, %v3326
        %v3359 = vadd.f32 %v2580, %v3329
        %v3360 = vadd.f32 %v2581, %v3334
        %v3361 = vadd.f32 %v2582, %v3337
        %v3362 = vadd.f32 %v2583, %v3342
        %v3363 = vadd.f32 %v2584, %v3345
        %v3364 = vld [vmem:[#allocation8 + $0x9] sm:$0x1]
        %v3365 = vld [vmem:[#allocation8 + $0xa] sm:$0x1]
        %3366 = vadd.xlane.f32.xlu0 %v3348
        %v3367 = vpop.xlane.xlu0 %3366
        %3368 = vadd.xlane.f32.xlu0 %v3349
        %v3369 = vpop.xlane.xlu0 %3368
        %3370 = vadd.xlane.f32.xlu0 %v3350
        %v3371 = vpop.xlane.xlu0 %3370
        %3372 = vadd.xlane.f32.xlu0 %v3351
        %v3373 = vpop.xlane.xlu0 %3372
        %3374 = vadd.xlane.f32.xlu0 %v3352
        %v3375 = vpop.xlane.xlu0 %3374
        %3376 = vadd.xlane.f32.xlu0 %v3353
        %v3377 = vpop.xlane.xlu0 %3376
        %3378 = vadd.xlane.f32.xlu0 %v3354
        %v3379 = vpop.xlane.xlu0 %3378
        %3380 = vadd.xlane.f32.xlu0 %v3355
        %v3381 = vpop.xlane.xlu0 %3380
        %3382 = vadd.xlane.f32.xlu0 %v3356
        %v3383 = vpop.xlane.xlu0 %3382
        %3384 = vadd.xlane.f32.xlu0 %v3357
        %v3385 = vpop.xlane.xlu0 %3384
        %3386 = vadd.xlane.f32.xlu0 %v3358
        %v3387 = vpop.xlane.xlu0 %3386
        %3388 = vadd.xlane.f32.xlu0 %v3359
        %v3389 = vpop.xlane.xlu0 %3388
        %3390 = vadd.xlane.f32.xlu0 %v3360
        %v3391 = vpop.xlane.xlu0 %3390
        %3392 = vadd.xlane.f32.xlu0 %v3361
        %v3393 = vpop.xlane.xlu0 %3392
        %3394 = vadd.xlane.f32.xlu0 %v3362
        %v3395 = vpop.xlane.xlu0 %3394
        %3396 = vadd.xlane.f32.xlu0 %v3363
        %v3397 = vpop.xlane.xlu0 %3396
        %v3398 = vmul.f32 %v3367, %v566
        %v3399 = vmul.f32 %v3369, %v566
        %v3400 = vmul.f32 %v3371, %v566
        %v3401 = vmul.f32 %v3373, %v566
        %v3402 = vmul.f32 %v3375, %v566
        %v3403 = vmul.f32 %v3377, %v566
        %v3404 = vmul.f32 %v3379, %v566
        %v3405 = vmul.f32 %v3381, %v566
        %v3406 = vmul.f32 %v3383, %v566
        %v3407 = vmul.f32 %v3385, %v566
        %v3408 = vmul.f32 %v3387, %v566
        %v3409 = vmul.f32 %v3389, %v566
        %v3410 = vmul.f32 %v3391, %v566
        %v3411 = vmul.f32 %v3393, %v566
        %v3412 = vmul.f32 %v3395, %v566
        %v3413 = vmul.f32 %v3397, %v566
        %v3414 = vsub.f32 %v3348, %v3398
        %v3415 = vsub.f32 %v3349, %v3399
        %v3416 = vsub.f32 %v3350, %v3400
        %v3417 = vsub.f32 %v3351, %v3401
        %v3418 = vsub.f32 %v3352, %v3402
        %v3419 = vsub.f32 %v3353, %v3403
        %v3420 = vsub.f32 %v3354, %v3404
        %v3421 = vsub.f32 %v3355, %v3405
        %v3422 = vsub.f32 %v3356, %v3406
        %v3423 = vsub.f32 %v3357, %v3407
        %v3424 = vsub.f32 %v3358, %v3408
        %v3425 = vsub.f32 %v3359, %v3409
        %v3426 = vsub.f32 %v3360, %v3410
        %v3427 = vsub.f32 %v3361, %v3411
        %v3428 = vsub.f32 %v3362, %v3412
        %v3429 = vsub.f32 %v3363, %v3413
        %v3430 = vmul.f32 %v3414, %v3414
        %v3431 = vmul.f32 %v3415, %v3415
        %v3432 = vmul.f32 %v3416, %v3416
        %v3433 = vmul.f32 %v3417, %v3417
        %v3434 = vmul.f32 %v3418, %v3418
        %v3435 = vmul.f32 %v3419, %v3419
        %v3436 = vmul.f32 %v3420, %v3420
        %v3437 = vmul.f32 %v3421, %v3421
        %v3438 = vmul.f32 %v3422, %v3422
        %v3439 = vmul.f32 %v3423, %v3423
        %v3440 = vmul.f32 %v3424, %v3424
        %v3441 = vmul.f32 %v3425, %v3425
        %v3442 = vmul.f32 %v3426, %v3426
        %v3443 = vmul.f32 %v3427, %v3427
        %v3444 = vmul.f32 %v3428, %v3428
        %v3445 = vmul.f32 %v3429, %v3429
        %3446 = vadd.xlane.f32.xlu0 %v3430
        %v3447 = vpop.xlane.xlu0 %3446
        %3448 = vadd.xlane.f32.xlu0 %v3431
        %v3449 = vpop.xlane.xlu0 %3448
        %3450 = vadd.xlane.f32.xlu0 %v3432
        %v3451 = vpop.xlane.xlu0 %3450
        %3452 = vadd.xlane.f32.xlu0 %v3433
        %v3453 = vpop.xlane.xlu0 %3452
        %3454 = vadd.xlane.f32.xlu0 %v3434
        %v3455 = vpop.xlane.xlu0 %3454
        %3456 = vadd.xlane.f32.xlu0 %v3435
        %v3457 = vpop.xlane.xlu0 %3456
        %3458 = vadd.xlane.f32.xlu0 %v3436
        %v3459 = vpop.xlane.xlu0 %3458
        %3460 = vadd.xlane.f32.xlu0 %v3437
        %v3461 = vpop.xlane.xlu0 %3460
        %3462 = vadd.xlane.f32.xlu0 %v3438
        %v3463 = vpop.xlane.xlu0 %3462
        %3464 = vadd.xlane.f32.xlu0 %v3439
        %v3465 = vpop.xlane.xlu0 %3464
        %3466 = vadd.xlane.f32.xlu0 %v3440
        %v3467 = vpop.xlane.xlu0 %3466
        %3468 = vadd.xlane.f32.xlu0 %v3441
        %v3469 = vpop.xlane.xlu0 %3468
        %3470 = vadd.xlane.f32.xlu0 %v3442
        %v3471 = vpop.xlane.xlu0 %3470
        %3472 = vadd.xlane.f32.xlu0 %v3443
        %v3473 = vpop.xlane.xlu0 %3472
        %3474 = vadd.xlane.f32.xlu0 %v3444
        %v3475 = vpop.xlane.xlu0 %3474
        %3476 = vadd.xlane.f32.xlu0 %v3445
        %v3477 = vpop.xlane.xlu0 %3476
        %v3478 = vmul.f32 %v3447, %v566
        %v3479 = vmul.f32 %v3449, %v566
        %v3480 = vmul.f32 %v3451, %v566
        %v3481 = vmul.f32 %v3453, %v566
        %v3482 = vmul.f32 %v3455, %v566
        %v3483 = vmul.f32 %v3457, %v566
        %v3484 = vmul.f32 %v3459, %v566
        %v3485 = vmul.f32 %v3461, %v566
        %v3486 = vmul.f32 %v3463, %v566
        %v3487 = vmul.f32 %v3465, %v566
        %v3488 = vmul.f32 %v3467, %v566
        %v3489 = vmul.f32 %v3469, %v566
        %v3490 = vmul.f32 %v3471, %v566
        %v3491 = vmul.f32 %v3473, %v566
        %v3492 = vmul.f32 %v3475, %v566
        %v3493 = vmul.f32 %v3477, %v566
        %v3494 = vadd.f32 %v3478, 1e-12
        %v3495 = vadd.f32 %v3479, 1e-12
        %v3496 = vadd.f32 %v3480, 1e-12
        %v3497 = vadd.f32 %v3481, 1e-12
        %v3498 = vadd.f32 %v3482, 1e-12
        %v3499 = vadd.f32 %v3483, 1e-12
        %v3500 = vadd.f32 %v3484, 1e-12
        %v3501 = vadd.f32 %v3485, 1e-12
        %v3502 = vadd.f32 %v3486, 1e-12
        %v3503 = vadd.f32 %v3487, 1e-12
        %v3504 = vadd.f32 %v3488, 1e-12
        %v3505 = vadd.f32 %v3489, 1e-12
        %v3506 = vadd.f32 %v3490, 1e-12
        %v3507 = vadd.f32 %v3491, 1e-12
        %v3508 = vadd.f32 %v3492, 1e-12
        %v3509 = vadd.f32 %v3493, 1e-12
        %v3510 = vrsqrt.pop %v3494
        %v3511 = vrsqrt.pop %v3495
        %v3512 = vrsqrt.pop %v3496
        %v3513 = vrsqrt.pop %v3497
        %v3514 = vrsqrt.pop %v3498
        %v3515 = vrsqrt.pop %v3499
        %v3516 = vrsqrt.pop %v3500
        %v3517 = vrsqrt.pop %v3501
        %v3518 = vrsqrt.pop %v3502
        %v3519 = vrsqrt.pop %v3503
        %v3520 = vrsqrt.pop %v3504
        %v3521 = vrsqrt.pop %v3505
        %v3522 = vrsqrt.pop %v3506
        %v3523 = vrsqrt.pop %v3507
        %v3524 = vrsqrt.pop %v3508
        %v3525 = vrsqrt.pop %v3509
        %v3526 = vmul.f32 %v3414, %v3510
        %v3527 = vmul.f32 %v3415, %v3511
        %v3528 = vmul.f32 %v3416, %v3512
        %v3529 = vmul.f32 %v3417, %v3513
        %v3530 = vmul.f32 %v3418, %v3514
        %v3531 = vmul.f32 %v3419, %v3515
        %v3532 = vmul.f32 %v3420, %v3516
        %v3533 = vmul.f32 %v3421, %v3517
        %v3534 = vmul.f32 %v3422, %v3518
        %v3535 = vmul.f32 %v3423, %v3519
        %v3536 = vmul.f32 %v3424, %v3520
        %v3537 = vmul.f32 %v3425, %v3521
        %v3538 = vmul.f32 %v3426, %v3522
        %v3539 = vmul.f32 %v3427, %v3523
        %v3540 = vmul.f32 %v3428, %v3524
        %v3541 = vmul.f32 %v3429, %v3525
        %v3542 = vlaneseq
        %v3543 = vshrl.u32 %v3542, 7
        %v3544 = vsub.s32 0, %v3543
        %v3545 = vrot.slane %v3364, %v3544
        %v3546 = vmul.f32 %v3526, %v3545
        %v3547 = vmul.f32 %v3527, %v3545
        %v3548 = vmul.f32 %v3528, %v3545
        %v3549 = vmul.f32 %v3529, %v3545
        %v3550 = vmul.f32 %v3530, %v3545
        %v3551 = vmul.f32 %v3531, %v3545
        %v3552 = vmul.f32 %v3532, %v3545
        %v3553 = vmul.f32 %v3533, %v3545
        %v3554 = vmul.f32 %v3534, %v3545
        %v3555 = vmul.f32 %v3535, %v3545
        %v3556 = vmul.f32 %v3536, %v3545
        %v3557 = vmul.f32 %v3537, %v3545
        %v3558 = vmul.f32 %v3538, %v3545
        %v3559 = vmul.f32 %v3539, %v3545
        %v3560 = vmul.f32 %v3540, %v3545
        %v3561 = vmul.f32 %v3541, %v3545
        %v3562 = vlaneseq
        %v3563 = vshrl.u32 %v3562, 7
        %v3564 = vsub.s32 0, %v3563
        %v3565 = vrot.slane %v3365, %v3564
        %v3566 = vadd.f32 %v3546, %v3565
        %v3567 = vadd.f32 %v3547, %v3565
        %v3568 = vadd.f32 %v3548, %v3565
        %v3569 = vadd.f32 %v3549, %v3565
        %v3570 = vadd.f32 %v3550, %v3565
        %v3571 = vadd.f32 %v3551, %v3565
        %v3572 = vadd.f32 %v3552, %v3565
        %v3573 = vadd.f32 %v3553, %v3565
        %v3574 = vadd.f32 %v3554, %v3565
        %v3575 = vadd.f32 %v3555, %v3565
        %v3576 = vadd.f32 %v3556, %v3565
        %v3577 = vadd.f32 %v3557, %v3565
        %v3578 = vadd.f32 %v3558, %v3565
        %v3579 = vadd.f32 %v3559, %v3565
        %v3580 = vadd.f32 %v3560, %v3565
        %v3581 = vadd.f32 %v3561, %v3565
        %v3582 = vpack.c.bf16 %v3567, %v3566
        %v3583 = vpack.c.bf16 %v3569, %v3568
        %v3584 = vpack.c.bf16 %v3571, %v3570
        %v3585 = vpack.c.bf16 %v3573, %v3572
        %v3586 = vpack.c.bf16 %v3575, %v3574
        %v3587 = vpack.c.bf16 %v3577, %v3576
        %v3588 = vpack.c.bf16 %v3579, %v3578
        %v3589 = vpack.c.bf16 %v3581, %v3580
        %v3590 = vpack.c.bf16 %v492, %v492
        %v3591 = vpack.c.bf16 %v493, %v493
        %v3592 = vpack.c.bf16 %v494, %v494
        %v3593 = vpack.c.bf16 %v495, %v495
        %v3594 = vpack.c.bf16 %v496, %v496
        %v3595 = vpack.c.bf16 %v497, %v497
        %v3596 = vpack.c.bf16 %v498, %v498
        %v3597 = vpack.c.bf16 %v499, %v499
        %v3599 = vsel %vm1640, %v3590, 0
        %3601 = vmatprep.subr.bf16.mxu0 0
        %3602 = vmatpush1.bf16.msra.mxu0 %v3582
        %3603 = vmatprep.subr.bf16.mxu0 0
        %3604 = vmatpush1.bf16.msra.mxu0 0
        %3605 = vmatprep.subr.bf16.mxu0 0
        %3606 = vmatpush1.bf16.msra.mxu0 0
        %3607 = vmatprep.subr.bf16.mxu0 0
        %3608 = vmatpush1.bf16.msra.mxu0 0
        %3609 = vmatprep.subr.bf16.mxu0 0
        %3610 = vmatpush1.bf16.msra.mxu0 0
        %3611 = vmatprep.subr.bf16.mxu0 0
        %3612 = vmatpush1.bf16.msra.mxu0 0
        %3613 = vmatprep.subr.bf16.mxu0 0
        %3614 = vmatpush1.bf16.msra.mxu0 0
        %3615 = vmatprep.subr.bf16.mxu0 0
        %3616 = vmatpush1.bf16.msra.mxu0 0
        %3617 = vmatprep.subr.bf16.mxu0 0
        %3618 = vmatpush1.bf16.msra.mxu0 0
        %3619 = vmatprep.subr.bf16.mxu0 0
        %3620 = vmatpush1.bf16.msra.mxu0 0
        %3621 = vmatprep.subr.bf16.mxu0 0
        %3622 = vmatpush1.bf16.msra.mxu0 0
        %3623 = vmatprep.subr.bf16.mxu0 0
        %3624 = vmatpush1.bf16.msra.mxu0 0
        %3625 = vmatprep.subr.bf16.mxu0 0
        %3626 = vmatpush1.bf16.msra.mxu0 0
        %3627 = vmatprep.subr.bf16.mxu0 0
        %3628 = vmatpush1.bf16.msra.mxu0 0
        %3629 = vmatprep.subr.bf16.mxu0 0
        %3630 = vmatpush1.bf16.msra.mxu0 0
        %3631 = vmatprep.subr.bf16.mxu0 0
        %3632 = vmatpush1.bf16.msra.mxu0 0
        %3633 = vmatprep.mubr.bf16.mxu0 0
        %3634 = vmatmul.mubr.bf16.gmra.mrb[0].mxu0 %v3599
        %v3635 = vpop.f32.mrb[0].mxu0
        %v3636 = vadd.f32 0.0, %v3635
        %v3637 = vpop.f32.mrb[0].mxu0
        %v3638 = vpop.f32.mrb[0].mxu0
        %v3639 = vpop.f32.mrb[0].mxu0
        %3640 = vdwg.mxu0
        %v3642 = vsel %vm1640, %v3591, 0
        %3644 = vmatprep.subr.bf16.mxu0 0
        %3645 = vmatpush1.bf16.msra.mxu0 %v3583
        %3646 = vmatprep.subr.bf16.mxu0 0
        %3647 = vmatpush1.bf16.msra.mxu0 0
        %3648 = vmatprep.subr.bf16.mxu0 0
        %3649 = vmatpush1.bf16.msra.mxu0 0
        %3650 = vmatprep.subr.bf16.mxu0 0
        %3651 = vmatpush1.bf16.msra.mxu0 0
        %3652 = vmatprep.subr.bf16.mxu0 0
        %3653 = vmatpush1.bf16.msra.mxu0 0
        %3654 = vmatprep.subr.bf16.mxu0 0
        %3655 = vmatpush1.bf16.msra.mxu0 0
        %3656 = vmatprep.subr.bf16.mxu0 0
        %3657 = vmatpush1.bf16.msra.mxu0 0
        %3658 = vmatprep.subr.bf16.mxu0 0
        %3659 = vmatpush1.bf16.msra.mxu0 0
        %3660 = vmatprep.subr.bf16.mxu0 0
        %3661 = vmatpush1.bf16.msra.mxu0 0
        %3662 = vmatprep.subr.bf16.mxu0 0
        %3663 = vmatpush1.bf16.msra.mxu0 0
        %3664 = vmatprep.subr.bf16.mxu0 0
        %3665 = vmatpush1.bf16.msra.mxu0 0
        %3666 = vmatprep.subr.bf16.mxu0 0
        %3667 = vmatpush1.bf16.msra.mxu0 0
        %3668 = vmatprep.subr.bf16.mxu0 0
        %3669 = vmatpush1.bf16.msra.mxu0 0
        %3670 = vmatprep.subr.bf16.mxu0 0
        %3671 = vmatpush1.bf16.msra.mxu0 0
        %3672 = vmatprep.subr.bf16.mxu0 0
        %3673 = vmatpush1.bf16.msra.mxu0 0
        %3674 = vmatprep.subr.bf16.mxu0 0
        %3675 = vmatpush1.bf16.msra.mxu0 0
        %3676 = vmatprep.mubr.bf16.mxu0 0
        %3677 = vmatmul.mubr.bf16.gmra.mrb[0].mxu0 %v3642
        %v3678 = vpop.f32.mrb[0].mxu0
        %v3679 = vadd.f32 0.0, %v3678
        %v3680 = vpop.f32.mrb[0].mxu0
        %v3681 = vpop.f32.mrb[0].mxu0
        %v3682 = vpop.f32.mrb[0].mxu0
        %3683 = vdwg.mxu0
        %v3685 = vsel %vm1640, %v3592, 0
        %3687 = vmatprep.subr.bf16.mxu0 0
        %3688 = vmatpush1.bf16.msra.mxu0 %v3584
        %3689 = vmatprep.subr.bf16.mxu0 0
        %3690 = vmatpush1.bf16.msra.mxu0 0
        %3691 = vmatprep.subr.bf16.mxu0 0
        %3692 = vmatpush1.bf16.msra.mxu0 0
        %3693 = vmatprep.subr.bf16.mxu0 0
        %3694 = vmatpush1.bf16.msra.mxu0 0
        %3695 = vmatprep.subr.bf16.mxu0 0
        %3696 = vmatpush1.bf16.msra.mxu0 0
        %3697 = vmatprep.subr.bf16.mxu0 0
        %3698 = vmatpush1.bf16.msra.mxu0 0
        %3699 = vmatprep.subr.bf16.mxu0 0
        %3700 = vmatpush1.bf16.msra.mxu0 0
        %3701 = vmatprep.subr.bf16.mxu0 0
        %3702 = vmatpush1.bf16.msra.mxu0 0
        %3703 = vmatprep.subr.bf16.mxu0 0
        %3704 = vmatpush1.bf16.msra.mxu0 0
        %3705 = vmatprep.subr.bf16.mxu0 0
        %3706 = vmatpush1.bf16.msra.mxu0 0
        %3707 = vmatprep.subr.bf16.mxu0 0
        %3708 = vmatpush1.bf16.msra.mxu0 0
        %3709 = vmatprep.subr.bf16.mxu0 0
        %3710 = vmatpush1.bf16.msra.mxu0 0
        %3711 = vmatprep.subr.bf16.mxu0 0
        %3712 = vmatpush1.bf16.msra.mxu0 0
        %3713 = vmatprep.subr.bf16.mxu0 0
        %3714 = vmatpush1.bf16.msra.mxu0 0
        %3715 = vmatprep.subr.bf16.mxu0 0
        %3716 = vmatpush1.bf16.msra.mxu0 0
        %3717 = vmatprep.subr.bf16.mxu0 0
        %3718 = vmatpush1.bf16.msra.mxu0 0
        %3719 = vmatprep.mubr.bf16.mxu0 0
        %3720 = vmatmul.mubr.bf16.gmra.mrb[0].mxu0 %v3685
        %v3721 = vpop.f32.mrb[0].mxu0
        %v3722 = vadd.f32 0.0, %v3721
        %v3723 = vpop.f32.mrb[0].mxu0
        %v3724 = vpop.f32.mrb[0].mxu0
        %v3725 = vpop.f32.mrb[0].mxu0
        %3726 = vdwg.mxu0
        %v3728 = vsel %vm1640, %v3593, 0
        %3730 = vmatprep.subr.bf16.mxu0 0
        %3731 = vmatpush1.bf16.msra.mxu0 %v3585
        %3732 = vmatprep.subr.bf16.mxu0 0
        %3733 = vmatpush1.bf16.msra.mxu0 0
        %3734 = vmatprep.subr.bf16.mxu0 0
        %3735 = vmatpush1.bf16.msra.mxu0 0
        %3736 = vmatprep.subr.bf16.mxu0 0
        %3737 = vmatpush1.bf16.msra.mxu0 0
        %3738 = vmatprep.subr.bf16.mxu0 0
        %3739 = vmatpush1.bf16.msra.mxu0 0
        %3740 = vmatprep.subr.bf16.mxu0 0
        %3741 = vmatpush1.bf16.msra.mxu0 0
        %3742 = vmatprep.subr.bf16.mxu0 0
        %3743 = vmatpush1.bf16.msra.mxu0 0
        %3744 = vmatprep.subr.bf16.mxu0 0
        %3745 = vmatpush1.bf16.msra.mxu0 0
        %3746 = vmatprep.subr.bf16.mxu0 0
        %3747 = vmatpush1.bf16.msra.mxu0 0
        %3748 = vmatprep.subr.bf16.mxu0 0
        %3749 = vmatpush1.bf16.msra.mxu0 0
        %3750 = vmatprep.subr.bf16.mxu0 0
        %3751 = vmatpush1.bf16.msra.mxu0 0
        %3752 = vmatprep.subr.bf16.mxu0 0
        %3753 = vmatpush1.bf16.msra.mxu0 0
        %3754 = vmatprep.subr.bf16.mxu0 0
        %3755 = vmatpush1.bf16.msra.mxu0 0
        %3756 = vmatprep.subr.bf16.mxu0 0
        %3757 = vmatpush1.bf16.msra.mxu0 0
        %3758 = vmatprep.subr.bf16.mxu0 0
        %3759 = vmatpush1.bf16.msra.mxu0 0
        %3760 = vmatprep.subr.bf16.mxu0 0
        %3761 = vmatpush1.bf16.msra.mxu0 0
        %3762 = vmatprep.mubr.bf16.mxu0 0
        %3763 = vmatmul.mubr.bf16.gmra.mrb[0].mxu0 %v3728
        %v3764 = vpop.f32.mrb[0].mxu0
        %v3765 = vadd.f32 0.0, %v3764
        %v3766 = vpop.f32.mrb[0].mxu0
        %v3767 = vpop.f32.mrb[0].mxu0
        %v3768 = vpop.f32.mrb[0].mxu0
        %3769 = vdwg.mxu0
        %v3771 = vsel %vm1640, %v3594, 0
        %3773 = vmatprep.subr.bf16.mxu0 0
        %3774 = vmatpush1.bf16.msra.mxu0 %v3586
        %3775 = vmatprep.subr.bf16.mxu0 0
        %3776 = vmatpush1.bf16.msra.mxu0 0
        %3777 = vmatprep.subr.bf16.mxu0 0
        %3778 = vmatpush1.bf16.msra.mxu0 0
        %3779 = vmatprep.subr.bf16.mxu0 0
        %3780 = vmatpush1.bf16.msra.mxu0 0
        %3781 = vmatprep.subr.bf16.mxu0 0
        %3782 = vmatpush1.bf16.msra.mxu0 0
        %3783 = vmatprep.subr.bf16.mxu0 0
        %3784 = vmatpush1.bf16.msra.mxu0 0
        %3785 = vmatprep.subr.bf16.mxu0 0
        %3786 = vmatpush1.bf16.msra.mxu0 0
        %3787 = vmatprep.subr.bf16.mxu0 0
        %3788 = vmatpush1.bf16.msra.mxu0 0
        %3789 = vmatprep.subr.bf16.mxu0 0
        %3790 = vmatpush1.bf16.msra.mxu0 0
        %3791 = vmatprep.subr.bf16.mxu0 0
        %3792 = vmatpush1.bf16.msra.mxu0 0
        %3793 = vmatprep.subr.bf16.mxu0 0
        %3794 = vmatpush1.bf16.msra.mxu0 0
        %3795 = vmatprep.subr.bf16.mxu0 0
        %3796 = vmatpush1.bf16.msra.mxu0 0
        %3797 = vmatprep.subr.bf16.mxu0 0
        %3798 = vmatpush1.bf16.msra.mxu0 0
        %3799 = vmatprep.subr.bf16.mxu0 0
        %3800 = vmatpush1.bf16.msra.mxu0 0
        %3801 = vmatprep.subr.bf16.mxu0 0
        %3802 = vmatpush1.bf16.msra.mxu0 0
        %3803 = vmatprep.subr.bf16.mxu0 0
        %3804 = vmatpush1.bf16.msra.mxu0 0
        %3805 = vmatprep.mubr.bf16.mxu0 0
        %3806 = vmatmul.mubr.bf16.gmra.mrb[0].mxu0 %v3771
        %v3807 = vpop.f32.mrb[0].mxu0
        %v3808 = vadd.f32 0.0, %v3807
        %v3809 = vpop.f32.mrb[0].mxu0
        %v3810 = vpop.f32.mrb[0].mxu0
        %v3811 = vpop.f32.mrb[0].mxu0
        %3812 = vdwg.mxu0
        %v3814 = vsel %vm1640, %v3595, 0
        %3816 = vmatprep.subr.bf16.mxu0 0
        %3817 = vmatpush1.bf16.msra.mxu0 %v3587
        %3818 = vmatprep.subr.bf16.mxu0 0
        %3819 = vmatpush1.bf16.msra.mxu0 0
        %3820 = vmatprep.subr.bf16.mxu0 0
        %3821 = vmatpush1.bf16.msra.mxu0 0
        %3822 = vmatprep.subr.bf16.mxu0 0
        %3823 = vmatpush1.bf16.msra.mxu0 0
        %3824 = vmatprep.subr.bf16.mxu0 0
        %3825 = vmatpush1.bf16.msra.mxu0 0
        %3826 = vmatprep.subr.bf16.mxu0 0
        %3827 = vmatpush1.bf16.msra.mxu0 0
        %3828 = vmatprep.subr.bf16.mxu0 0
        %3829 = vmatpush1.bf16.msra.mxu0 0
        %3830 = vmatprep.subr.bf16.mxu0 0
        %3831 = vmatpush1.bf16.msra.mxu0 0
        %3832 = vmatprep.subr.bf16.mxu0 0
        %3833 = vmatpush1.bf16.msra.mxu0 0
        %3834 = vmatprep.subr.bf16.mxu0 0
        %3835 = vmatpush1.bf16.msra.mxu0 0
        %3836 = vmatprep.subr.bf16.mxu0 0
        %3837 = vmatpush1.bf16.msra.mxu0 0
        %3838 = vmatprep.subr.bf16.mxu0 0
        %3839 = vmatpush1.bf16.msra.mxu0 0
        %3840 = vmatprep.subr.bf16.mxu0 0
        %3841 = vmatpush1.bf16.msra.mxu0 0
        %3842 = vmatprep.subr.bf16.mxu0 0
        %3843 = vmatpush1.bf16.msra.mxu0 0
        %3844 = vmatprep.subr.bf16.mxu0 0
        %3845 = vmatpush1.bf16.msra.mxu0 0
        %3846 = vmatprep.subr.bf16.mxu0 0
        %3847 = vmatpush1.bf16.msra.mxu0 0
        %3848 = vmatprep.mubr.bf16.mxu0 0
        %3849 = vmatmul.mubr.bf16.gmra.mrb[0].mxu0 %v3814
        %v3850 = vpop.f32.mrb[0].mxu0
        %v3851 = vadd.f32 0.0, %v3850
        %v3852 = vpop.f32.mrb[0].mxu0
        %v3853 = vpop.f32.mrb[0].mxu0
        %v3854 = vpop.f32.mrb[0].mxu0
        %3855 = vdwg.mxu0
        %v3857 = vsel %vm1640, %v3596, 0
        %3859 = vmatprep.subr.bf16.mxu0 0
        %3860 = vmatpush1.bf16.msra.mxu0 %v3588
        %3861 = vmatprep.subr.bf16.mxu0 0
        %3862 = vmatpush1.bf16.msra.mxu0 0
        %3863 = vmatprep.subr.bf16.mxu0 0
        %3864 = vmatpush1.bf16.msra.mxu0 0
        %3865 = vmatprep.subr.bf16.mxu0 0
        %3866 = vmatpush1.bf16.msra.mxu0 0
        %3867 = vmatprep.subr.bf16.mxu0 0
        %3868 = vmatpush1.bf16.msra.mxu0 0
        %3869 = vmatprep.subr.bf16.mxu0 0
        %3870 = vmatpush1.bf16.msra.mxu0 0
        %3871 = vmatprep.subr.bf16.mxu0 0
        %3872 = vmatpush1.bf16.msra.mxu0 0
        %3873 = vmatprep.subr.bf16.mxu0 0
        %3874 = vmatpush1.bf16.msra.mxu0 0
        %3875 = vmatprep.subr.bf16.mxu0 0
        %3876 = vmatpush1.bf16.msra.mxu0 0
        %3877 = vmatprep.subr.bf16.mxu0 0
        %3878 = vmatpush1.bf16.msra.mxu0 0
        %3879 = vmatprep.subr.bf16.mxu0 0
        %3880 = vmatpush1.bf16.msra.mxu0 0
        %3881 = vmatprep.subr.bf16.mxu0 0
        %3882 = vmatpush1.bf16.msra.mxu0 0
        %3883 = vmatprep.subr.bf16.mxu0 0
        %3884 = vmatpush1.bf16.msra.mxu0 0
        %3885 = vmatprep.subr.bf16.mxu0 0
        %3886 = vmatpush1.bf16.msra.mxu0 0
        %3887 = vmatprep.subr.bf16.mxu0 0
        %3888 = vmatpush1.bf16.msra.mxu0 0
        %3889 = vmatprep.subr.bf16.mxu0 0
        %3890 = vmatpush1.bf16.msra.mxu0 0
        %3891 = vmatprep.mubr.bf16.mxu0 0
        %3892 = vmatmul.mubr.bf16.gmra.mrb[0].mxu0 %v3857
        %v3893 = vpop.f32.mrb[0].mxu0
        %v3894 = vadd.f32 0.0, %v3893
        %v3895 = vpop.f32.mrb[0].mxu0
        %v3896 = vpop.f32.mrb[0].mxu0
        %v3897 = vpop.f32.mrb[0].mxu0
        %3898 = vdwg.mxu0
        %v3900 = vsel %vm1640, %v3597, 0
        %3902 = vmatprep.subr.bf16.mxu0 0
        %3903 = vmatpush1.bf16.msra.mxu0 %v3589
        %3904 = vmatprep.subr.bf16.mxu0 0
        %3905 = vmatpush1.bf16.msra.mxu0 0
        %3906 = vmatprep.subr.bf16.mxu0 0
        %3907 = vmatpush1.bf16.msra.mxu0 0
        %3908 = vmatprep.subr.bf16.mxu0 0
        %3909 = vmatpush1.bf16.msra.mxu0 0
        %3910 = vmatprep.subr.bf16.mxu0 0
        %3911 = vmatpush1.bf16.msra.mxu0 0
        %3912 = vmatprep.subr.bf16.mxu0 0
        %3913 = vmatpush1.bf16.msra.mxu0 0
        %3914 = vmatprep.subr.bf16.mxu0 0
        %3915 = vmatpush1.bf16.msra.mxu0 0
        %3916 = vmatprep.subr.bf16.mxu0 0
        %3917 = vmatpush1.bf16.msra.mxu0 0
        %3918 = vmatprep.subr.bf16.mxu0 0
        %3919 = vmatpush1.bf16.msra.mxu0 0
        %3920 = vmatprep.subr.bf16.mxu0 0
        %3921 = vmatpush1.bf16.msra.mxu0 0
        %3922 = vmatprep.subr.bf16.mxu0 0
        %3923 = vmatpush1.bf16.msra.mxu0 0
        %3924 = vmatprep.subr.bf16.mxu0 0
        %3925 = vmatpush1.bf16.msra.mxu0 0
        %3926 = vmatprep.subr.bf16.mxu0 0
        %3927 = vmatpush1.bf16.msra.mxu0 0
        %3928 = vmatprep.subr.bf16.mxu0 0
        %3929 = vmatpush1.bf16.msra.mxu0 0
        %3930 = vmatprep.subr.bf16.mxu0 0
        %3931 = vmatpush1.bf16.msra.mxu0 0
        %3932 = vmatprep.subr.bf16.mxu0 0
        %3933 = vmatpush1.bf16.msra.mxu0 0
        %3934 = vmatprep.mubr.bf16.mxu0 0
        %3935 = vmatmul.mubr.bf16.gmra.mrb[0].mxu0 %v3900
        %v3936 = vpop.f32.mrb[0].mxu0
        %v3937 = vadd.f32 0.0, %v3936
        %v3938 = vpop.f32.mrb[0].mxu0
        %v3939 = vpop.f32.mrb[0].mxu0
        %v3940 = vpop.f32.mrb[0].mxu0
        %3941 = vdwg.mxu0
        %vm3942 = vcmask 122880
        %v3943 = vsel %vm3942, %v492, 0.0
        %3944 = vadd.xlane.f32.xlu0 %v3943
        %v3945 = vpop.xlane.xlu0 %3944
        %v3946 = vsel %vm3942, %v493, 0.0
        %3947 = vadd.xlane.f32.xlu0 %v3946
        %v3948 = vpop.xlane.xlu0 %3947
        %v3949 = vsel %vm3942, %v494, 0.0
        %3950 = vadd.xlane.f32.xlu0 %v3949
        %v3951 = vpop.xlane.xlu0 %3950
        %v3952 = vsel %vm3942, %v495, 0.0
        %3953 = vadd.xlane.f32.xlu0 %v3952
        %v3954 = vpop.xlane.xlu0 %3953
        %v3955 = vsel %vm3942, %v496, 0.0
        %3956 = vadd.xlane.f32.xlu0 %v3955
        %v3957 = vpop.xlane.xlu0 %3956
        %v3958 = vsel %vm3942, %v497, 0.0
        %3959 = vadd.xlane.f32.xlu0 %v3958
        %v3960 = vpop.xlane.xlu0 %3959
        %v3961 = vsel %vm3942, %v498, 0.0
        %3962 = vadd.xlane.f32.xlu0 %v3961
        %v3963 = vpop.xlane.xlu0 %3962
        %v3964 = vsel %vm3942, %v499, 0.0
        %3965 = vadd.xlane.f32.xlu0 %v3964
        %v3966 = vpop.xlane.xlu0 %3965
        %v3967 = vmax.f32 %v3945, 1.0
        %v3968 = vmax.f32 %v3948, 1.0
        %v3969 = vmax.f32 %v3951, 1.0
        %v3970 = vmax.f32 %v3954, 1.0
        %v3971 = vmax.f32 %v3957, 1.0
        %v3972 = vmax.f32 %v3960, 1.0
        %v3973 = vmax.f32 %v3963, 1.0
        %v3974 = vmax.f32 %v3966, 1.0
        %v3975 = vrcp.pop %v3967
        %v3976 = vrcp.pop %v3968
        %v3977 = vrcp.pop %v3969
        %v3978 = vrcp.pop %v3970
        %v3979 = vrcp.pop %v3971
        %v3980 = vrcp.pop %v3972
        %v3981 = vrcp.pop %v3973
        %v3982 = vrcp.pop %v3974
        %v3983 = vmul.f32 %v3636, %v3975
        %v3984 = vmul.f32 %v3679, %v3976
        %v3985 = vmul.f32 %v3722, %v3977
        %v3986 = vmul.f32 %v3765, %v3978
        %v3987 = vmul.f32 %v3808, %v3979
        %v3988 = vmul.f32 %v3851, %v3980
        %v3989 = vmul.f32 %v3894, %v3981
        %v3990 = vmul.f32 %v3937, %v3982
        %v3991 = vpack.c.bf16 %v3983, %v3983
        %v3992 = vpack.c.bf16 %v3984, %v3984
        %v3993 = vpack.c.bf16 %v3985, %v3985
        %v3994 = vpack.c.bf16 %v3986, %v3986
        %v3995 = vpack.c.bf16 %v3987, %v3987
        %v3996 = vpack.c.bf16 %v3988, %v3988
        %v3997 = vpack.c.bf16 %v3989, %v3989
        %v3998 = vpack.c.bf16 %v3990, %v3990
        %v3999 = vld [vmem:[#allocation14] sm:$0xf]
        %v4000 = vld [vmem:[#allocation14 + $0x4] sm:$0xf]
        %v4001 = vld [vmem:[#allocation14 + $0x8] sm:$0xf]
        %v4002 = vld [vmem:[#allocation14 + $0xc] sm:$0xf]
        %v4003 = vld [vmem:[#allocation14 + $0x10] sm:$0xf]
        %v4004 = vld [vmem:[#allocation14 + $0x14] sm:$0xf]
        %v4005 = vld [vmem:[#allocation14 + $0x18] sm:$0xf]
        %v4006 = vld [vmem:[#allocation14 + $0x1c] sm:$0xf]
        %v4007 = vld [vmem:[#allocation14 + $0x20] sm:$0xf]
        %v4008 = vld [vmem:[#allocation14 + $0x24] sm:$0xf]
        %v4009 = vld [vmem:[#allocation14 + $0x28] sm:$0xf]
        %v4010 = vld [vmem:[#allocation14 + $0x2c] sm:$0xf]
        %v4011 = vld [vmem:[#allocation14 + $0x30] sm:$0xf]
        %v4012 = vld [vmem:[#allocation14 + $0x34] sm:$0xf]
        %v4013 = vld [vmem:[#allocation14 + $0x38] sm:$0xf]
        %v4014 = vld [vmem:[#allocation14 + $0x3c] sm:$0xf]
        %v4015 = vld [vmem:[#allocation16] sm:$0x1]
        %v4017 = vlaneseq
        %v4018 = vshrl.u32 %v4017, 7
        %v4019 = vsub.s32 0, %v4018
        %v4020 = vrot.slane %v4015, %v4019
        %v4030 = vunpack.c.l.b16 %v3991
        %v4031 = vunpack.c.l.b16 %v3992
        %v4032 = vunpack.c.l.b16 %v3993
        %v4033 = vunpack.c.l.b16 %v3994
        %v4034 = vunpack.c.l.b16 %v3995
        %v4035 = vunpack.c.l.b16 %v3996
        %v4036 = vunpack.c.l.b16 %v3997
        %v4037 = vunpack.c.l.b16 %v3998
        %v4038 = vrot.slane %v4031, 7
        %vm4039 = vcmask 1041409
        %v4040 = vsel %vm4039, %v4038, %v4030
        %v4041 = vrot.slane %v4032, 6
        %vm4042 = vcmask 1042434
        %v4043 = vsel %vm4042, %v4041, %v4040
        %v4044 = vrot.slane %v4033, 5
        %vm4045 = vcmask 1043459
        %v4046 = vsel %vm4045, %v4044, %v4043
        %v4047 = vrot.slane %v4034, 4
        %vm4048 = vcmask 1044484
        %v4049 = vsel %vm4048, %v4047, %v4046
        %v4050 = vrot.slane %v4035, 3
        %vm4051 = vcmask 1045509
        %v4052 = vsel %vm4051, %v4050, %v4049
        %v4053 = vrot.slane %v4036, 2
        %vm4054 = vcmask 1046534
        %v4055 = vsel %vm4054, %v4053, %v4052
        %v4056 = vrot.slane %v4037, 1
        %vm4057 = vcmask 1047559
        %v4058 = vsel %vm4057, %v4056, %v4055
        %v4059 = vpack.c.b16 %v4058, %v4058
        %v4077 = vunpack.c.l.b16 %v3999
        %v4078 = vunpack.c.l.b16 %v4000
        %v4079 = vunpack.c.l.b16 %v4001
        %v4080 = vunpack.c.l.b16 %v4002
        %v4081 = vunpack.c.l.b16 %v4003
        %v4082 = vunpack.c.l.b16 %v4004
        %v4083 = vunpack.c.l.b16 %v4005
        %v4084 = vunpack.c.l.b16 %v4006
        %v4085 = vunpack.c.l.b16 %v4007
        %v4086 = vunpack.c.l.b16 %v4008
        %v4087 = vunpack.c.l.b16 %v4009
        %v4088 = vunpack.c.l.b16 %v4010
        %v4089 = vunpack.c.l.b16 %v4011
        %v4090 = vunpack.c.l.b16 %v4012
        %v4091 = vunpack.c.l.b16 %v4013
        %v4092 = vunpack.c.l.b16 %v4014
        %v4093 = vpack.c.b16 %v4078, %v4077
        %v4094 = vpack.c.b16 %v4080, %v4079
        %v4095 = vpack.c.b16 %v4082, %v4081
        %v4096 = vpack.c.b16 %v4084, %v4083
        %v4097 = vpack.c.b16 %v4086, %v4085
        %v4098 = vpack.c.b16 %v4088, %v4087
        %v4099 = vpack.c.b16 %v4090, %v4089
        %v4100 = vpack.c.b16 %v4092, %v4091
        %4109 = vmatprep.subr.bf16.mxu0 0
        %4110 = vmatpush1.bf16.msra.mxu0 %v4093
        %4111 = vmatprep.subr.bf16.mxu0 0
        %4112 = vmatpush1.bf16.msra.mxu0 %v4094
        %4113 = vmatprep.subr.bf16.mxu0 0
        %4114 = vmatpush1.bf16.msra.mxu0 %v4095
        %4115 = vmatprep.subr.bf16.mxu0 0
        %4116 = vmatpush1.bf16.msra.mxu0 %v4096
        %4117 = vmatprep.subr.bf16.mxu0 0
        %4118 = vmatpush1.bf16.msra.mxu0 %v4097
        %4119 = vmatprep.subr.bf16.mxu0 0
        %4120 = vmatpush1.bf16.msra.mxu0 %v4098
        %4121 = vmatprep.subr.bf16.mxu0 0
        %4122 = vmatpush1.bf16.msra.mxu0 %v4099
        %4123 = vmatprep.subr.bf16.mxu0 0
        %4124 = vmatpush1.bf16.msra.mxu0 %v4100
        %4125 = vmatprep.subr.bf16.mxu0 0
        %4126 = vmatpush1.bf16.msra.mxu0 0
        %4127 = vmatprep.subr.bf16.mxu0 0
        %4128 = vmatpush1.bf16.msra.mxu0 0
        %4129 = vmatprep.subr.bf16.mxu0 0
        %4130 = vmatpush1.bf16.msra.mxu0 0
        %4131 = vmatprep.subr.bf16.mxu0 0
        %4132 = vmatpush1.bf16.msra.mxu0 0
        %4133 = vmatprep.subr.bf16.mxu0 0
        %4134 = vmatpush1.bf16.msra.mxu0 0
        %4135 = vmatprep.subr.bf16.mxu0 0
        %4136 = vmatpush1.bf16.msra.mxu0 0
        %4137 = vmatprep.subr.bf16.mxu0 0
        %4138 = vmatpush1.bf16.msra.mxu0 0
        %4139 = vmatprep.subr.bf16.mxu0 0
        %4140 = vmatpush1.bf16.msra.mxu0 0
        %4141 = vmatprep.mubr.bf16.mxu0 0
        %4142 = vmatmul.mubr.bf16.gmra.mrb[0].mxu0 %v4059
        %v4143 = vpop.f32.mrb[0].mxu0
        %v4144 = vadd.f32 %v4020, %v4143
        %v4145 = vpop.f32.mrb[0].mxu0
        %v4146 = vpop.f32.mrb[0].mxu0
        %v4147 = vpop.f32.mrb[0].mxu0
        %4148 = vdwg.mxu0
        %4149 = vst [vmem:[%s488] sm:$0xff] %v4144
        %s4150 = sand.u32 %s239, 1
        %s4151 = scalar_lea.sflag [#allocation4], %s4150
        %s4152 = sand.u32 %s239, 1
        %s4153 = smul.addr %s4152, 8
        %s4154 = scalar_lea.vmem [#allocation17], %s4153
        // Predicated region
        $region93: #{sequence_classification_forward.1} parent=55 // pred_check
          %p4155 = pneg %p249
        $region94: #{sequence_classification_forward.1} parent=55 // pred_check_branch
          %4157 = sbr.rel (%p4155) target = $region96
        $region95: #{sequence_classification_forward.1} parent=55 // pred_region
          %s4159 = ssub.s32 128, 128
          %4160 = vsyncadd %s4151, %s4159
          %s4161 = smul.addr %s32, 128
          %s4162 = scalar_lea.hbm %s9, %s4161
          %s4164 = sshll.u32 %s4154, 4
          %s4165 = int_to_ptr.vmem [resolvable:$true] %s4164
          %4167 = dma.vmem_to_hbm [thread:$0]  %s4165, 128, %s4162, %s4151
        $region96: #{sequence_classification_forward.1} parent=55 // pred_fallthru
          _
      $region56: #{sequence_classification_forward.1} parent=5 // pred_fallthru
        _
      %p4168 = scmp.le.s32.totalorder 2, %s27
      // Predicated region
      $region97: #{sequence_classification_forward.1} parent=5 // pred_check
        %p4169 = pneg %p4168
      $region98: #{sequence_classification_forward.1} parent=5 // pred_check_branch
        %4171 = sbr.rel (%p4169) target = $region100
      $region99: #{sequence_classification_forward.1} parent=5 // pred_region
        %s4172 = ssub.s32 %s27, 2
        // Predicated region
        $region101: #{sequence_classification_forward.1} parent=99 // pred_check
          %p4173 = pneg %p255
        $region102: #{sequence_classification_forward.1} parent=99 // pred_check_branch
          %4175 = sbr.rel (%p4173) target = $region104
        $region103: #{sequence_classification_forward.1} parent=99 // pred_region
          %s4176 = sand.u32 %s240, 1
          %s4177 = scalar_lea.sflag [#allocation4], %s4176
          %s4178 = sand.u32 %s240, 1
          %s4179 = smul.addr %s4178, 8
          %s4180 = scalar_lea.vmem [#allocation17], %s4179
          %4181 = dma.done %s4177, 128
        $region104: #{sequence_classification_forward.1} parent=99 // pred_fallthru
          _
      $region100: #{sequence_classification_forward.1} parent=5 // pred_fallthru
        _
    $region6: #{sequence_classification_forward.1} parent=1 // loop_footer
      %s31 = sadd.s32 1, %s27
    $region7: #{sequence_classification_forward.1} parent=1 // loop_footer_branch
      %26 = sbr.rel target = $region3
    $region8: #{sequence_classification_forward.1} parent=1 // loop_exit
      _
    %4182 = vsyncpa [#allocation3], 1
    %s4183 = scalar_lea.sflag [#allocation3], 1
    %4184 = vsyncpa %s4183, 1
    %4185 = vsyncpa [#allocation6], 1
    %s4186 = scalar_lea.sflag [#allocation6], 1
    %4187 = vsyncpa %s4186, 1
    %4188 = vsyncpa [#allocation9], 1
    %4189 = vsyncpa [#allocation12], 1
    %4190 = vsyncpa [#allocation15], 1
    %4191 = vsyncpa [#allocation4], 1
    %s4192 = scalar_lea.sflag [#allocation4], 1
    %4193 = vsyncpa %s4192, 1

</llo_original>
